<compile_context>
chip_gen: v7x
topology: tpu7x:2x2x1
jax: 0.10.0
libtpu: 0.0.40
codegen_flags: <defaults>
</compile_context>

<pallas_src>
import functools

import jax
import jax.numpy as jnp
from jax import lax
from jax.experimental import pallas as pl
from jax.experimental.pallas import tpu as pltpu


# ----------------------------------------------------------------------------
# helpers
# ----------------------------------------------------------------------------
def _round_up(v, m):
    return ((v + m - 1) // m) * m


_VMEM_LIMIT = 40 * 1024 * 1024   # v7x-safe (64 MiB physical); plenty for v5e/v6e
_STATS_LANES = 128


def _pick_tile(padded, candidates):
    for c in candidates:
        if padded % c == 0:
            return c
    return padded


def _kn_layout(K, N):
    """Lane-dense padded extents + tile sizes for a (K, N) weight matrix."""
    Kp = _round_up(K, 128)
    tk = _pick_tile(Kp, (512, 256, 384, 128))     # prefer 256-multiples (MXU width)
    Np = _round_up(N, 128)
    tn = _pick_tile(Np, (512, 256, 384, 128))
    return Kp, Np, tk, tn


def _pick_tm(M):
    """Row-tile size (16-aligned for bf16 operands) and padded row count."""
    Mb = _round_up(M, 16)
    if Mb <= 512:
        return Mb, Mb
    for c in (512, 384, 256, 128):
        if Mb % c == 0:
            return c, Mb
    best = min((512, 384, 256, 128), key=lambda c: _round_up(Mb, c))
    return best, _round_up(Mb, best)


# ----------------------------------------------------------------------------
# Pallas kernel 1: tiled matmul + bias + optional pre/post ReLU + fused skip add.
# bf16 operands on the MXU, f32 accumulation in the resident output block
# (or a scratch when the output is bf16), f32 epilogue.
# ----------------------------------------------------------------------------
def _mm_bias_kernel(*refs, pre_relu, post_relu, has_res, use_acc):
    if use_acc:
        if has_res:
            x_ref, w_ref, b_ref, r_ref, o_ref, acc_ref = refs
        else:
            x_ref, w_ref, b_ref, o_ref, acc_ref = refs
            r_ref = None
    else:
        if has_res:
            x_ref, w_ref, b_ref, r_ref, o_ref = refs
        else:
            x_ref, w_ref, b_ref, o_ref = refs
            r_ref = None
        acc_ref = o_ref                       # f32 output block doubles as accumulator
    k = pl.program_id(2)

    @pl.when(k == 0)
    def _():
        acc_ref[...] = jnp.zeros_like(acc_ref)

    x = x_ref[...]
    if pre_relu:
        x = jnp.maximum(x, 0)                 # ReLU commutes with im2col / padding
    acc_ref[...] += jnp.dot(x, w_ref[...], preferred_element_type=jnp.float32)

    @pl.when(k == pl.num_programs(2) - 1)
    def _():
        out = acc_ref[...] + b_ref[...]
        if has_res:
            out = out + r_ref[...]            # fused residual skip-add (f32)
        if post_relu:
            out = jnp.maximum(out, 0.0)
        o_ref[...] = out.astype(o_ref.dtype)


def pallas_matmul_bias(x, prep, *, pre_relu=False, post_relu=False,
                       residual=None, out_dtype=jnp.float32):
    M, K = x.shape
    assert K == prep["K"], (K, prep["K"])
    wp, bp = prep["w"], prep["b"]             # pre-padded bf16 weight, f32 bias
    Kp, Np = wp.shape
    tk, tn = prep["tk"], prep["tn"]
    N = prep["N"]
    tm, Mp = _pick_tm(M)

    xp = x.astype(jnp.bfloat16)
    if (Mp, Kp) != (M, K):
        xp = jnp.pad(xp, ((0, Mp - M), (0, Kp - K)))

    has_res = residual is not None
    use_acc = (jnp.dtype(out_dtype) != jnp.dtype(jnp.float32))
    inputs = [xp, wp, bp]
    in_specs = [
        pl.BlockSpec((tm, tk), lambda i, j, k: (i, k)),
        pl.BlockSpec((tk, tn), lambda i, j, k: (k, j)),
        pl.BlockSpec((1, tn), lambda i, j, k: (0, j)),
    ]
    if has_res:
        rp = residual.astype(jnp.float32)
        if rp.shape != (Mp, Np):
            rp = jnp.pad(rp, ((0, Mp - rp.shape[0]), (0, Np - rp.shape[1])))
        inputs.append(rp)
        in_specs.append(pl.BlockSpec((tm, tn), lambda i, j, k: (i, j)))

    grid = (Mp // tm, Np // tn, Kp // tk)
    scratch = (pltpu.VMEM((tm, tn), jnp.float32),) if use_acc else ()
    cost = pl.CostEstimate(
        flops=2 * Mp * Np * Kp,
        transcendentals=0,
        bytes_accessed=(Mp * Kp + Kp * Np) * 2
        + Mp * Np * jnp.dtype(out_dtype).itemsize)

    out = pl.pallas_call(
        functools.partial(_mm_bias_kernel, pre_relu=pre_relu,
                          post_relu=post_relu, has_res=has_res, use_acc=use_acc),
        out_shape=jax.ShapeDtypeStruct((Mp, Np), out_dtype),
        grid_spec=pltpu.PrefetchScalarGridSpec(
            num_scalar_prefetch=0,
            grid=grid,
            in_specs=in_specs,
            out_specs=pl.BlockSpec((tm, tn), lambda i, j, k: (i, j)),
            scratch_shapes=scratch),
        compiler_params=pltpu.CompilerParams(
            dimension_semantics=("parallel", "parallel", "arbitrary"),
            vmem_limit_bytes=_VMEM_LIMIT),
        cost_estimate=cost,
    )(*inputs)
    if (Mp, Np) != (M, N):
        out = out[:M, :N]
    return out


# ----------------------------------------------------------------------------
# Weight prep (done once, outside the jitted forward): bf16, lane-dense padded.
# ----------------------------------------------------------------------------
def prep_linear(w_mat, b, K, N):
    Kp, Np, tk, tn = _kn_layout(K, N)
    wp = jnp.pad(jnp.asarray(w_mat, jnp.float32),
                 ((0, Kp - K), (0, Np - N))).astype(jnp.bfloat16)
    bp = jnp.pad(jnp.asarray(b, jnp.float32).reshape(1, N),
                 ((0, 0), (0, Np - N)))
    return {"w": wp, "b": bp, "K": K, "N": N, "tk": tk, "tn": tn}


def prep_conv(w_oihw, b):
    O, I, kh, kw = w_oihw.shape
    wmat = jnp.transpose(w_oihw, (2, 3, 1, 0)).reshape(kh * kw * I, O)
    p = prep_linear(wmat, b, kh * kw * I, O)
    p.update(kh=kh, kw=kw)
    return p


def prep_deconv(w_iohw, b, *, stride, pad):
    """ConvTranspose2d -> either a single fused sub-pixel matmul, or a
    zero-dilated standard conv (fallback)."""
    I, O, kh, kw = w_iohw.shape
    s = stride
    # equivalent standard-conv kernel: spatial flip + in/out channel swap
    w_conv = jnp.transpose(jnp.flip(w_iohw, axis=(2, 3)), (1, 0, 2, 3))  # (O,I,kh,kw)
    pph, ppw = kh - 1 - pad, kw - 1 - pad

    def phase_infos(pp, k):
        infos = []
        for ph in range(s):
            t0 = (pp - ph) % s
            cnt = len(range(t0, k, s))
            q = (pp - ph) // s
            infos.append((t0, cnt, q))
        return infos

    fused_ok = (s > 1 and kh == s + 2 * pad and kw == s + 2 * pad)
    if fused_ok:
        ih = phase_infos(pph, kh)
        iw = phase_infos(ppw, kw)
        lo_h = min(-q for _, _, q in ih)
        hi_h = max(c - 1 - q for _, c, q in ih)
        lo_w = min(-q for _, _, q in iw)
        hi_w = max(c - 1 - q for _, c, q in iw)
        fused_ok = (lo_h <= 0 <= hi_h and lo_w <= 0 <= hi_w
                    and all(c >= 1 for _, c, _ in ih + iw))
    if fused_ok:
        Kh, Kw = hi_h - lo_h + 1, hi_w - lo_w + 1
        wf = jnp.zeros((Kh, Kw, I, s * s * O), jnp.float32)
        for ph, (t0h, cnth, qh) in enumerate(ih):
            for pw, (t0w, cntw, qw) in enumerate(iw):
                col0 = (ph * s + pw) * O
                for jh in range(cnth):
                    uh = jh - qh - lo_h
                    for jw in range(cntw):
                        uw = jw - qw - lo_w
                        tap = jnp.transpose(
                            w_conv[:, :, t0h + jh * s, t0w + jw * s])    # (I, O)
                        wf = wf.at[uh, uw, :, col0:col0 + O].set(tap)
        p = prep_linear(wf.reshape(Kh * Kw * I, s * s * O),
                        jnp.tile(jnp.asarray(b, jnp.float32), s * s),
                        Kh * Kw * I, s * s * O)
        p.update(mode="fused", s=s, O=O, Kh=Kh, Kw=Kw,
                 pad_h=(-lo_h, hi_h), pad_w=(-lo_w, hi_w))
        return p

    # TODO(synk): general conv-transpose shapes fall back to zero-dilation.
    wmat = jnp.transpose(w_conv, (2, 3, 1, 0)).reshape(kh * kw * I, O)
    p = prep_linear(wmat, b, kh * kw * I, O)
    p.update(mode="dilate", s=s, O=O, kh=kh, kw=kw, conv_pad=kh - 1 - pad)
    return p


# ----------------------------------------------------------------------------
# Conv2d / ConvTranspose2d as im2col (XLA glue, bf16) + Pallas matmul.
# ----------------------------------------------------------------------------
def conv2d_nhwc(x, prep, *, stride, pad, pre_relu=False, post_relu=False,
                residual=None, out_dtype=jnp.float32):
    N, H, W, C = x.shape
    kh, kw = prep["kh"], prep["kw"]
    xb = x.astype(jnp.bfloat16)                      # cast BEFORE im2col
    Ho = (H + 2 * pad - kh) // stride + 1
    Wo = (W + 2 * pad - kw) // stride + 1
    if kh == 1 and kw == 1 and stride == 1:
        pmat = xb.reshape(N * Ho * Wo, C)
    else:
        xp = jnp.pad(xb, ((0, 0), (pad, pad), (pad, pad), (0, 0))) if pad else xb
        patches = [
            xp[:, i:i + stride * Ho:stride, j:j + stride * Wo:stride, :]
            for i in range(kh) for j in range(kw)
        ]
        pmat = jnp.concatenate(patches, axis=-1).reshape(N * Ho * Wo, kh * kw * C)
    res_flat = None
    if residual is not None:
        res_flat = residual.reshape(N * Ho * Wo, -1)
    out = pallas_matmul_bias(pmat, prep, pre_relu=pre_relu, post_relu=post_relu,
                             residual=res_flat, out_dtype=out_dtype)
    return out.reshape(N, Ho, Wo, prep["N"])


def conv_transpose2d_nhwc(x, prep, *, pre_relu=False, post_relu=False,
                          out_dtype=jnp.float32):
    N, H, W, C = x.shape
    if prep["mode"] == "fused":
        # All stride^2 output phases computed by ONE matmul over a shared
        # haloed im2col, followed by a single depth-to-space reshape.
        s, O = prep["s"], prep["O"]
        Kh, Kw = prep["Kh"], prep["Kw"]
        xb = x.astype(jnp.bfloat16)
        xp = jnp.pad(xb, ((0, 0), prep["pad_h"], prep["pad_w"], (0, 0)))
        patches = [xp[:, i:i + H, j:j + W, :]
                   for i in range(Kh) for j in range(Kw)]
        pmat = jnp.concatenate(patches, axis=-1).reshape(N * H * W, Kh * Kw * C)
        out = pallas_matmul_bias(pmat, prep, pre_relu=pre_relu,
                                 post_relu=post_relu, out_dtype=out_dtype)
        out = out.reshape(N, H, W, s, s, O)
        out = jnp.transpose(out, (0, 1, 3, 2, 4, 5)).reshape(N, s * H, s * W, O)
        return out

    # general fallback: zero-dilate input and run a regular conv.
    s = prep["s"]
    xd = jnp.zeros((N, H * s - (s - 1), W * s - (s - 1), C), jnp.bfloat16)
    xd = xd.at[:, ::s, ::s, :].set(x.astype(jnp.bfloat16))
    return conv2d_nhwc(xd, prep, stride=1, pad=prep["conv_pad"],
                       pre_relu=pre_relu, post_relu=post_relu,
                       out_dtype=out_dtype)


# ----------------------------------------------------------------------------
# Pallas kernel 2: DictLearn bottleneck (matching-pursuit sparse coding).
# Row tiles fully parallel over the grid; per-tile counts / SSE emitted as
# small lane-dense outputs and reduced outside (tiny), so v7x's two
# TensorCores can split the grid.
# ----------------------------------------------------------------------------
def _dictlearn_kernel(z_ref, dict_ref, sp_ref, codes_ref, counts_ref, sse_ref,
                      *, sparsity_level, m_valid):
    i = pl.program_id(0)
    tm = z_ref.shape[0]
    Ep = dict_ref.shape[0]

    residual = z_ref[...]                          # (tm, Dp) f32
    codes_ref[...] = jnp.zeros_like(codes_ref)
    counts_row = jnp.zeros((1, Ep), jnp.float32)
    col_iota = lax.broadcasted_iota(jnp.int32, (tm, Ep), 1)
    row = i * tm + lax.broadcasted_iota(jnp.int32, (tm, 1), 0)
    valid = (row < m_valid).astype(jnp.float32)    # mask pure-padding rows

    for _ in range(sparsity_level):                # static unroll (small)
        corr = lax.dot_general(residual, dict_ref[...],
                               (((1,), (1,)), ((), ())),
                               preferred_element_type=jnp.float32)   # (tm, Ep)
        best = jnp.argmax(jnp.abs(corr), axis=1)
        onehot = (col_iota == best[:, None]).astype(jnp.float32)
        coef = jnp.sum(corr * onehot, axis=1, keepdims=True)
        codes_ref[...] += onehot * coef
        counts_row = counts_row + jnp.sum(onehot * valid, axis=0, keepdims=True)
        residual = residual - coef * jnp.dot(onehot, dict_ref[...],
                                             preferred_element_type=jnp.float32)

    # sparsified = codes @ atoms == z - residual (MP update rule) -> no matmul.
    sp_ref[...] = z_ref[...] - residual
    # padded rows/cols contribute exactly 0 to the SSE.
    sse = jnp.sum(residual * residual, keepdims=True).reshape(1, 1)

    sub_c = lax.broadcasted_iota(jnp.int32, (8, Ep), 0)
    counts_ref[...] = jnp.where(sub_c == 0, counts_row, 0.0)
    sub_s = lax.broadcasted_iota(jnp.int32, (8, _STATS_LANES), 0)
    lane_s = lax.broadcasted_iota(jnp.int32, (8, _STATS_LANES), 1)
    sse_ref[...] = jnp.where((sub_s == 0) & (lane_s == 0), sse, 0.0)


def dict_learn(z_flat, dict_padded, num_embeddings, *, sparsity_level,
               commitment_cost, epsilon):
    M, D = z_flat.shape
    Ep, Dp = dict_padded.shape
    tm = min(128, _round_up(M, 8))                 # small tm: tame vreg pressure
    Mp = _round_up(M, tm)
    T = Mp // tm

    zp = z_flat.astype(jnp.float32)
    if (Mp, Dp) != (M, D):
        zp = jnp.pad(zp, ((0, Mp - M), (0, Dp - D)))

    kernel = functools.partial(_dictlearn_kernel,
                               sparsity_level=sparsity_level, m_valid=M)

    sp, codes, counts, sse = pl.pallas_call(
        kernel,
        out_shape=(
            jax.ShapeDtypeStruct((Mp, Dp), jnp.float32),           # sparsified
            jax.ShapeDtypeStruct((Mp, Ep), jnp.float32),           # codes
            jax.ShapeDtypeStruct((8 * T, Ep), jnp.float32),        # per-tile counts
            jax.ShapeDtypeStruct((8 * T, _STATS_LANES), jnp.float32),  # per-tile SSE
        ),
        grid_spec=pltpu.PrefetchScalarGridSpec(
            num_scalar_prefetch=0,
            grid=(T,),
            in_specs=[
                pl.BlockSpec((tm, Dp), lambda i: (i, 0)),
                pl.BlockSpec((Ep, Dp), lambda i: (0, 0)),
            ],
            out_specs=(
                pl.BlockSpec((tm, Dp), lambda i: (i, 0)),
                pl.BlockSpec((tm, Ep), lambda i: (i, 0)),
                pl.BlockSpec((8, Ep), lambda i: (i, 0)),
                pl.BlockSpec((8, _STATS_LANES), lambda i: (i, 0)),
            )),
        compiler_params=pltpu.CompilerParams(
            dimension_semantics=("parallel",),      # no cross-tile state
            vmem_limit_bytes=_VMEM_LIMIT),
    )(zp, dict_padded)

    E = num_embeddings
    sparsified = sp[:M, :D]
    encodings = codes[:M, :E]
    mse = jnp.sum(sse) / jnp.float32(M * D)
    # q_latent_loss + commitment_cost * e_latent_loss (identical value forward)
    loss = (1.0 + commitment_cost) * mse
    avg = jnp.sum(counts, axis=0)[:E] / jnp.float32(M * sparsity_level)
    perplexity = jnp.exp(-jnp.sum(avg * jnp.log(avg + epsilon)))
    return sparsified, encodings, loss, perplexity


# ----------------------------------------------------------------------------
# Parameter construction (deterministic, in-script) + one-time prep.
# ----------------------------------------------------------------------------
def init_params(key, in_channels, num_hiddens, num_residual_layers,
                num_residual_hiddens, num_embeddings, embedding_dim):
    keys = iter(jax.random.split(key, 64))

    def w(shape, scale=0.1):
        return (scale * jax.random.normal(next(keys), shape)).astype(jnp.float32)

    def zeros(n):
        return jnp.zeros((n,), jnp.float32)

    p = {}
    h2 = num_hiddens // 2
    # encoder
    p["enc_w1"], p["enc_b1"] = w((h2, in_channels, 4, 4)), zeros(h2)
    p["enc_w2"], p["enc_b2"] = w((num_hiddens, h2, 4, 4)), zeros(num_hiddens)
    p["enc_w3"], p["enc_b3"] = w((num_hiddens, num_hiddens, 3, 3)), zeros(num_hiddens)
    p["enc_res"] = [
        dict(w3=w((num_residual_hiddens, num_hiddens, 3, 3)),
             b3=zeros(num_residual_hiddens),
             w1=w((num_hiddens, num_residual_hiddens, 1, 1)),
             b1=zeros(num_hiddens))
        for _ in range(num_residual_layers)
    ]
    # pre-VQ 1x1 conv
    p["pre_w"], p["pre_b"] = w((embedding_dim, num_hiddens, 1, 1)), zeros(embedding_dim)
    # dictionary (unit-norm atoms)
    d = jax.random.normal(next(keys), (num_embeddings, embedding_dim))
    p["dict"] = (d / jnp.linalg.norm(d, axis=1, keepdims=True)).astype(jnp.float32)
    # decoder
    p["dec_w1"], p["dec_b1"] = w((num_hiddens, embedding_dim, 3, 3)), zeros(num_hiddens)
    p["dec_res"] = [
        dict(w3=w((num_residual_hiddens, num_hiddens, 3, 3)),
             b3=zeros(num_residual_hiddens),
             w1=w((num_hiddens, num_residual_hiddens, 1, 1)),
             b1=zeros(num_hiddens))
        for _ in range(num_residual_layers)
    ]
    p["dec_wt1"], p["dec_bt1"] = w((num_hiddens, h2, 4, 4)), zeros(h2)   # (in,out,kh,kw)
    p["dec_wt2"], p["dec_bt2"] = w((h2, in_channels, 4, 4)), zeros(in_channels)
    return p


def prepare_params(raw):
    """One-time bf16 / lane-dense prep of every weight (no per-forward pads)."""
    pp = {}
    pp["enc1"] = prep_conv(raw["enc_w1"], raw["enc_b1"])
    pp["enc2"] = prep_conv(raw["enc_w2"], raw["enc_b2"])
    pp["enc3"] = prep_conv(raw["enc_w3"], raw["enc_b3"])
    pp["enc_res"] = [dict(c3=prep_conv(l["w3"], l["b3"]),
                          c1=prep_conv(l["w1"], l["b1"]))
                     for l in raw["enc_res"]]
    pp["pre"] = prep_conv(raw["pre_w"], raw["pre_b"])
    E, D = raw["dict"].shape
    Ep, Dp = _round_up(E, 128), _round_up(D, 128)
    pp["dict"] = jnp.pad(raw["dict"].astype(jnp.float32),
                         ((0, Ep - E), (0, Dp - D)))
    pp["num_embeddings"] = E
    pp["dec1"] = prep_conv(raw["dec_w1"], raw["dec_b1"])
    pp["dec_res"] = [dict(c3=prep_conv(l["w3"], l["b3"]),
                          c1=prep_conv(l["w1"], l["b1"]))
                     for l in raw["dec_res"]]
    pp["dect1"] = prep_deconv(raw["dec_wt1"], raw["dec_bt1"], stride=2, pad=1)
    pp["dect2"] = prep_deconv(raw["dec_wt2"], raw["dec_bt2"], stride=2, pad=1)
    return pp


def residual_stack(h, layers):
    # PyTorch block: h + Conv1x1(ReLU(Conv3x3(ReLU(h)))).  The inner ReLU is the
    # 3x3 conv's f32 post_relu epilogue (applied once), the skip add is fused
    # into the 1x1-conv epilogue; the stack's trailing ReLU is folded into the
    # next conv's pre_relu by the caller.
    for lp in layers:
        t = conv2d_nhwc(h, lp["c3"], stride=1, pad=1, pre_relu=True,
                        post_relu=True, out_dtype=jnp.bfloat16)
        h = conv2d_nhwc(t, lp["c1"], stride=1, pad=0, residual=h)
    return h


# ----------------------------------------------------------------------------
# Full DLGAN forward.
# ----------------------------------------------------------------------------
def dlgan_forward(prepped, x_nchw, *, sparsity_level, commitment_cost,
                  epsilon=1e-10):
    x = jnp.transpose(x_nchw, (0, 2, 3, 1)).astype(jnp.float32)   # NCHW -> NHWC

    # ---- encoder ----
    h = conv2d_nhwc(x, prepped["enc1"], stride=2, pad=1, post_relu=True,
                    out_dtype=jnp.bfloat16)
    h = conv2d_nhwc(h, prepped["enc2"], stride=2, pad=1, post_relu=True,
                    out_dtype=jnp.bfloat16)
    h = conv2d_nhwc(h, prepped["enc3"], stride=1, pad=1)
    h = residual_stack(h, prepped["enc_res"])
    # stack's trailing ReLU folded into pre-VQ conv (pre_relu).
    z = conv2d_nhwc(h, prepped["pre"], stride=1, pad=0, pre_relu=True)

    # ---- DictLearn bottleneck ----
    N, Hz, Wz, D = z.shape
    z_flat = z.reshape(N * Hz * Wz, D)
    sparsified_flat, encodings, loss, perplexity = dict_learn(
        z_flat, prepped["dict"], prepped["num_embeddings"],
        sparsity_level=sparsity_level, commitment_cost=commitment_cost,
        epsilon=epsilon)
    sparsified = sparsified_flat.reshape(N, Hz, Wz, D)
    # straight-through estimator: forward value is the sparsified code.

    # ---- decoder ----
    d = conv2d_nhwc(sparsified, prepped["dec1"], stride=1, pad=1)
    d = residual_stack(d, prepped["dec_res"])
    d = conv_transpose2d_nhwc(d, prepped["dect1"], pre_relu=True,
                              post_relu=True, out_dtype=jnp.bfloat16)
    x_recon = conv_transpose2d_nhwc(d, prepped["dect2"])

    x_recon = jnp.transpose(x_recon.astype(jnp.float32), (0, 3, 1, 2))  # -> NCHW
    # TODO(synk): DictLearn's exact `latents` return is undocumented here; we
    # return the pre-bottleneck latents z in NCHW (PyTorch convention).
    latents = jnp.transpose(z, (0, 3, 1, 2))
    return loss, x_recon, latents, perplexity, encodings


if __name__ == "__main__":
    # small shapes consistent with the module
    batch, in_channels, spatial = 2, 3, 16
    num_hiddens, num_residual_layers, num_residual_hiddens = 32, 2, 16
    num_embeddings, embedding_dim = 32, 16
    commitment_cost, sparsity_level = 0.25, 3

    key = jax.random.PRNGKey(0)
    pkey, xkey = jax.random.split(key)
    raw_params = init_params(pkey, in_channels, num_hiddens,
                             num_residual_layers, num_residual_hiddens,
                             num_embeddings, embedding_dim)
    prepped = prepare_params(raw_params)        # one-time bf16 / padded prep
    x = jax.random.normal(xkey, (batch, in_channels, spatial, spatial),
                          jnp.float32)

    fwd = jax.jit(functools.partial(dlgan_forward, prepped,
                                    sparsity_level=sparsity_level,
                                    commitment_cost=commitment_cost))
    loss, x_recon, latents, perplexity, encodings = fwd(x)
    jax.block_until_ready((loss, x_recon, latents, perplexity, encodings))

    assert x_recon.shape == (batch, in_channels, spatial, spatial)
    assert latents.shape == (batch, embedding_dim, spatial // 4, spatial // 4)
    assert encodings.shape == (batch * (spatial // 4) ** 2, num_embeddings)
    print("KERNEL_OK")
</pallas_src>

<mosaic_0001>
module attributes {stable_mosaic.version = 11 : i64} {
  func.func @_mm_bias_kernel(%arg0: i32, %arg1: i32, %arg2: i32, %arg3: memref<128x128xbf16, #tpu.memory_space<vmem>>, %arg4: memref<128x128xbf16, #tpu.memory_space<vmem>>, %arg5: memref<1x128xf32, #tpu.memory_space<vmem>>, %arg6: memref<128x128xbf16, #tpu.memory_space<vmem>>, %arg7: memref<128x128xf32, #tpu.memory_space<vmem>>) attributes {dimension_semantics = [#tpu.dimension_semantics<parallel>, #tpu.dimension_semantics<parallel>, #tpu.dimension_semantics<arbitrary>], iteration_bounds = array<i64: 1, 1, 1>, scalar_prefetch = 0 : i64, scratch_operands = 1 : i64, tpu.core_type = #tpu.core_type<tc>, window_params = [{transform_indices = @transform_0, window_bounds = array<i64: 128, 128>}, {transform_indices = @transform_1, window_bounds = array<i64: 128, 128>}, {transform_indices = @transform_2, window_bounds = array<i64: 1, 128>}, {transform_indices = @transform_3, window_bounds = array<i64: 128, 128>}]} {
    %c0_i32 = arith.constant 0 : i32
    %0 = arith.cmpi eq, %arg2, %c0_i32 : i32
    %1 = arith.extui %0 : i1 to i32
    %c0_i32_0 = arith.constant 0 : i32
    %2 = arith.cmpi ne, %1, %c0_i32_0 : i32
    scf.if %2 {
      %cst_10 = arith.constant 0.000000e+00 : f32
      %12 = vector.broadcast %cst_10 : f32 to vector<128x128xf32>
      %c0_11 = arith.constant 0 : index
      %c0_12 = arith.constant 0 : index
      %13 = vector.load %arg7[%c0_11, %c0_12] : memref<128x128xf32, #tpu.memory_space<vmem>>, vector<128x128xf32>
      tpu.vector_store %arg7[%c0_11, %c0_12], %12 {strides = array<i32>} : memref<128x128xf32, #tpu.memory_space<vmem>>, vector<128x128xf32>,
    } else {
    }
    %c0 = arith.constant 0 : index
    %c0_1 = arith.constant 0 : index
    %3 = vector.load %arg3[%c0, %c0_1] : memref<128x128xbf16, #tpu.memory_space<vmem>>, vector<128x128xbf16>
    %c0_2 = arith.constant 0 : index
    %c0_3 = arith.constant 0 : index
    %4 = vector.load %arg7[%c0_2, %c0_3] : memref<128x128xf32, #tpu.memory_space<vmem>>, vector<128x128xf32>
    %c0_4 = arith.constant 0 : index
    %c0_5 = arith.constant 0 : index
    %5 = vector.load %arg4[%c0_4, %c0_5] : memref<128x128xbf16, #tpu.memory_space<vmem>>, vector<128x128xbf16>
    %cst = arith.constant dense<0.000000e+00> : vector<128x128xf32>
    %6 = tpu.matmul %3, %5, %cst {dimension_numbers = #tpu.dot_dimension_numbers<[1], [0], [0], [1], [0, 0, 1, 1], [], []>} : vector<128x128xbf16>, vector<128x128xbf16>, vector<128x128xf32> -> vector<128x128xf32>
    %7 = arith.addf %4, %6 : vector<128x128xf32>
    %c0_6 = arith.constant 0 : index
    %c0_7 = arith.constant 0 : index
    %8 = vector.load %arg7[%c0_6, %c0_7] : memref<128x128xf32, #tpu.memory_space<vmem>>, vector<128x128xf32>
    tpu.vector_store %arg7[%c0_6, %c0_7], %7 {strides = array<i32>} : memref<128x128xf32, #tpu.memory_space<vmem>>, vector<128x128xf32>,
    %c0_i32_8 = arith.constant 0 : i32
    %9 = arith.cmpi eq, %arg2, %c0_i32_8 : i32
    %10 = arith.extui %9 : i1 to i32
    %c0_i32_9 = arith.constant 0 : i32
    %11 = arith.cmpi ne, %10, %c0_i32_9 : i32
    scf.if %11 {
      %c0_10 = arith.constant 0 : index
      %c0_11 = arith.constant 0 : index
      %12 = vector.load %arg7[%c0_10, %c0_11] : memref<128x128xf32, #tpu.memory_space<vmem>>, vector<128x128xf32>
      %c0_12 = arith.constant 0 : index
      %c0_13 = arith.constant 0 : index
      %13 = vector.load %arg5[%c0_12, %c0_13] : memref<1x128xf32, #tpu.memory_space<vmem>>, vector<1x128xf32>
      %14 = vector.broadcast %13 : vector<1x128xf32> to vector<128x128xf32>
      %15 = arith.addf %12, %14 : vector<128x128xf32>
      %cst_14 = arith.constant 0.000000e+00 : f32
      %16 = vector.broadcast %cst_14 : f32 to vector<128x128xf32>
      %17 = arith.maximumf %15, %16 : vector<128x128xf32>
      %18 = arith.truncf %17 : vector<128x128xf32> to vector<128x128xbf16>
      %c0_15 = arith.constant 0 : index
      %c0_16 = arith.constant 0 : index
      %19 = vector.load %arg6[%c0_15, %c0_16] : memref<128x128xbf16, #tpu.memory_space<vmem>>, vector<128x128xbf16>
      tpu.vector_store %arg6[%c0_15, %c0_16], %18 {strides = array<i32>} : memref<128x128xbf16, #tpu.memory_space<vmem>>, vector<128x128xbf16>,
    } else {
    }
    return
  }
  func.func @transform_0(%arg0: i32, %arg1: i32, %arg2: i32) -> (i32, i32) {
    %c0_i32 = arith.constant 0 : i32
    return %arg0, %arg2 : i32, i32
  }
  func.func @transform_1(%arg0: i32, %arg1: i32, %arg2: i32) -> (i32, i32) {
    %c0_i32 = arith.constant 0 : i32
    return %arg2, %arg1 : i32, i32
  }
  func.func @transform_2(%arg0: i32, %arg1: i32, %arg2: i32) -> (i32, i32) {
    %c0_i32 = arith.constant 0 : i32
    %c0_i32_0 = arith.constant 0 : i32
    return %c0_i32, %arg1 : i32, i32
  }
  func.func @transform_3(%arg0: i32, %arg1: i32, %arg2: i32) -> (i32, i32) {
    %c0_i32 = arith.constant 0 : i32
    return %arg0, %arg1 : i32, i32
  }
}

module attributes {stable_mosaic.version = 11 : i64} {
  func.func @_mm_bias_kernel(%arg0: i32, %arg1: i32, %arg2: i32, %arg3: memref<32x256xbf16, #tpu.memory_space<vmem>>, %arg4: memref<256x128xbf16, #tpu.memory_space<vmem>>, %arg5: memref<1x128xf32, #tpu.memory_space<vmem>>, %arg6: memref<32x128xbf16, #tpu.memory_space<vmem>>, %arg7: memref<32x128xf32, #tpu.memory_space<vmem>>) attributes {dimension_semantics = [#tpu.dimension_semantics<parallel>, #tpu.dimension_semantics<parallel>, #tpu.dimension_semantics<arbitrary>], iteration_bounds = array<i64: 1, 1, 1>, scalar_prefetch = 0 : i64, scratch_operands = 1 : i64, tpu.core_type = #tpu.core_type<tc>, window_params = [{transform_indices = @transform_0, window_bounds = array<i64: 32, 256>}, {transform_indices = @transform_1, window_bounds = array<i64: 256, 128>}, {transform_indices = @transform_2, window_bounds = array<i64: 1, 128>}, {transform_indices = @transform_3, window_bounds = array<i64: 32, 128>}]} {
    %c0_i32 = arith.constant 0 : i32
    %0 = arith.cmpi eq, %arg2, %c0_i32 : i32
    %1 = arith.extui %0 : i1 to i32
    %c0_i32_0 = arith.constant 0 : i32
    %2 = arith.cmpi ne, %1, %c0_i32_0 : i32
    scf.if %2 {
      %cst_10 = arith.constant 0.000000e+00 : f32
      %12 = vector.broadcast %cst_10 : f32 to vector<32x128xf32>
      %c0_11 = arith.constant 0 : index
      %c0_12 = arith.constant 0 : index
      %13 = vector.load %arg7[%c0_11, %c0_12] : memref<32x128xf32, #tpu.memory_space<vmem>>, vector<32x128xf32>
      tpu.vector_store %arg7[%c0_11, %c0_12], %12 {strides = array<i32>} : memref<32x128xf32, #tpu.memory_space<vmem>>, vector<32x128xf32>,
    } else {
    }
    %c0 = arith.constant 0 : index
    %c0_1 = arith.constant 0 : index
    %3 = vector.load %arg3[%c0, %c0_1] : memref<32x256xbf16, #tpu.memory_space<vmem>>, vector<32x256xbf16>
    %c0_2 = arith.constant 0 : index
    %c0_3 = arith.constant 0 : index
    %4 = vector.load %arg7[%c0_2, %c0_3] : memref<32x128xf32, #tpu.memory_space<vmem>>, vector<32x128xf32>
    %c0_4 = arith.constant 0 : index
    %c0_5 = arith.constant 0 : index
    %5 = vector.load %arg4[%c0_4, %c0_5] : memref<256x128xbf16, #tpu.memory_space<vmem>>, vector<256x128xbf16>
    %cst = arith.constant dense<0.000000e+00> : vector<32x128xf32>
    %6 = tpu.matmul %3, %5, %cst {dimension_numbers = #tpu.dot_dimension_numbers<[1], [0], [0], [1], [0, 0, 1, 1], [], []>} : vector<32x256xbf16>, vector<256x128xbf16>, vector<32x128xf32> -> vector<32x128xf32>
    %7 = arith.addf %4, %6 : vector<32x128xf32>
    %c0_6 = arith.constant 0 : index
    %c0_7 = arith.constant 0 : index
    %8 = vector.load %arg7[%c0_6, %c0_7] : memref<32x128xf32, #tpu.memory_space<vmem>>, vector<32x128xf32>
    tpu.vector_store %arg7[%c0_6, %c0_7], %7 {strides = array<i32>} : memref<32x128xf32, #tpu.memory_space<vmem>>, vector<32x128xf32>,
    %c0_i32_8 = arith.constant 0 : i32
    %9 = arith.cmpi eq, %arg2, %c0_i32_8 : i32
    %10 = arith.extui %9 : i1 to i32
    %c0_i32_9 = arith.constant 0 : i32
    %11 = arith.cmpi ne, %10, %c0_i32_9 : i32
    scf.if %11 {
      %c0_10 = arith.constant 0 : index
      %c0_11 = arith.constant 0 : index
      %12 = vector.load %arg7[%c0_10, %c0_11] : memref<32x128xf32, #tpu.memory_space<vmem>>, vector<32x128xf32>
      %c0_12 = arith.constant 0 : index
      %c0_13 = arith.constant 0 : index
      %13 = vector.load %arg5[%c0_12, %c0_13] : memref<1x128xf32, #tpu.memory_space<vmem>>, vector<1x128xf32>
      %14 = vector.broadcast %13 : vector<1x128xf32> to vector<32x128xf32>
      %15 = arith.addf %12, %14 : vector<32x128xf32>
      %cst_14 = arith.constant 0.000000e+00 : f32
      %16 = vector.broadcast %cst_14 : f32 to vector<32x128xf32>
      %17 = arith.maximumf %15, %16 : vector<32x128xf32>
      %18 = arith.truncf %17 : vector<32x128xf32> to vector<32x128xbf16>
      %c0_15 = arith.constant 0 : index
      %c0_16 = arith.constant 0 : index
      %19 = vector.load %arg6[%c0_15, %c0_16] : memref<32x128xbf16, #tpu.memory_space<vmem>>, vector<32x128xbf16>
      tpu.vector_store %arg6[%c0_15, %c0_16], %18 {strides = array<i32>} : memref<32x128xbf16, #tpu.memory_space<vmem>>, vector<32x128xbf16>,
    } else {
    }
    return
  }
  func.func @transform_0(%arg0: i32, %arg1: i32, %arg2: i32) -> (i32, i32) {
    %c0_i32 = arith.constant 0 : i32
    return %arg0, %arg2 : i32, i32
  }
  func.func @transform_1(%arg0: i32, %arg1: i32, %arg2: i32) -> (i32, i32) {
    %c0_i32 = arith.constant 0 : i32
    return %arg2, %arg1 : i32, i32
  }
  func.func @transform_2(%arg0: i32, %arg1: i32, %arg2: i32) -> (i32, i32) {
    %c0_i32 = arith.constant 0 : i32
    %c0_i32_0 = arith.constant 0 : i32
    return %c0_i32, %arg1 : i32, i32
  }
  func.func @transform_3(%arg0: i32, %arg1: i32, %arg2: i32) -> (i32, i32) {
    %c0_i32 = arith.constant 0 : i32
    return %arg0, %arg1 : i32, i32
  }
}

module attributes {stable_mosaic.version = 11 : i64} {
  func.func @_mm_bias_kernel(%arg0: i32, %arg1: i32, %arg2: i32, %arg3: memref<32x384xbf16, #tpu.memory_space<vmem>>, %arg4: memref<384x128xbf16, #tpu.memory_space<vmem>>, %arg5: memref<1x128xf32, #tpu.memory_space<vmem>>, %arg6: memref<32x128xf32, #tpu.memory_space<vmem>>) attributes {dimension_semantics = [#tpu.dimension_semantics<parallel>, #tpu.dimension_semantics<parallel>, #tpu.dimension_semantics<arbitrary>], iteration_bounds = array<i64: 1, 1, 1>, scalar_prefetch = 0 : i64, scratch_operands = 0 : i64, tpu.core_type = #tpu.core_type<tc>, window_params = [{transform_indices = @transform_0, window_bounds = array<i64: 32, 384>}, {transform_indices = @transform_1, window_bounds = array<i64: 384, 128>}, {transform_indices = @transform_2, window_bounds = array<i64: 1, 128>}, {transform_indices = @transform_3, window_bounds = array<i64: 32, 128>}]} {
    %c0_i32 = arith.constant 0 : i32
    %0 = arith.cmpi eq, %arg2, %c0_i32 : i32
    %1 = arith.extui %0 : i1 to i32
    %c0_i32_0 = arith.constant 0 : i32
    %2 = arith.cmpi ne, %1, %c0_i32_0 : i32
    scf.if %2 {
      %cst_10 = arith.constant 0.000000e+00 : f32
      %12 = vector.broadcast %cst_10 : f32 to vector<32x128xf32>
      %c0_11 = arith.constant 0 : index
      %c0_12 = arith.constant 0 : index
      %13 = vector.load %arg6[%c0_11, %c0_12] : memref<32x128xf32, #tpu.memory_space<vmem>>, vector<32x128xf32>
      tpu.vector_store %arg6[%c0_11, %c0_12], %12 {strides = array<i32>} : memref<32x128xf32, #tpu.memory_space<vmem>>, vector<32x128xf32>,
    } else {
    }
    %c0 = arith.constant 0 : index
    %c0_1 = arith.constant 0 : index
    %3 = vector.load %arg3[%c0, %c0_1] : memref<32x384xbf16, #tpu.memory_space<vmem>>, vector<32x384xbf16>
    %c0_2 = arith.constant 0 : index
    %c0_3 = arith.constant 0 : index
    %4 = vector.load %arg6[%c0_2, %c0_3] : memref<32x128xf32, #tpu.memory_space<vmem>>, vector<32x128xf32>
    %c0_4 = arith.constant 0 : index
    %c0_5 = arith.constant 0 : index
    %5 = vector.load %arg4[%c0_4, %c0_5] : memref<384x128xbf16, #tpu.memory_space<vmem>>, vector<384x128xbf16>
    %cst = arith.constant dense<0.000000e+00> : vector<32x128xf32>
    %6 = tpu.matmul %3, %5, %cst {dimension_numbers = #tpu.dot_dimension_numbers<[1], [0], [0], [1], [0, 0, 1, 1], [], []>} : vector<32x384xbf16>, vector<384x128xbf16>, vector<32x128xf32> -> vector<32x128xf32>
    %7 = arith.addf %4, %6 : vector<32x128xf32>
    %c0_6 = arith.constant 0 : index
    %c0_7 = arith.constant 0 : index
    %8 = vector.load %arg6[%c0_6, %c0_7] : memref<32x128xf32, #tpu.memory_space<vmem>>, vector<32x128xf32>
    tpu.vector_store %arg6[%c0_6, %c0_7], %7 {strides = array<i32>} : memref<32x128xf32, #tpu.memory_space<vmem>>, vector<32x128xf32>,
    %c0_i32_8 = arith.constant 0 : i32
    %9 = arith.cmpi eq, %arg2, %c0_i32_8 : i32
    %10 = arith.extui %9 : i1 to i32
    %c0_i32_9 = arith.constant 0 : i32
    %11 = arith.cmpi ne, %10, %c0_i32_9 : i32
    scf.if %11 {
      %c0_10 = arith.constant 0 : index
      %c0_11 = arith.constant 0 : index
      %12 = vector.load %arg6[%c0_10, %c0_11] : memref<32x128xf32, #tpu.memory_space<vmem>>, vector<32x128xf32>
      %c0_12 = arith.constant 0 : index
      %c0_13 = arith.constant 0 : index
      %13 = vector.load %arg5[%c0_12, %c0_13] : memref<1x128xf32, #tpu.memory_space<vmem>>, vector<1x128xf32>
      %14 = vector.broadcast %13 : vector<1x128xf32> to vector<32x128xf32>
      %15 = arith.addf %12, %14 : vector<32x128xf32>
      %c0_14 = arith.constant 0 : index
      %c0_15 = arith.constant 0 : index
      %16 = vector.load %arg6[%c0_14, %c0_15] : memref<32x128xf32, #tpu.memory_space<vmem>>, vector<32x128xf32>
      tpu.vector_store %arg6[%c0_14, %c0_15], %15 {strides = array<i32>} : memref<32x128xf32, #tpu.memory_space<vmem>>, vector<32x128xf32>,
    } else {
    }
    return
  }
  func.func @transform_0(%arg0: i32, %arg1: i32, %arg2: i32) -> (i32, i32) {
    %c0_i32 = arith.constant 0 : i32
    return %arg0, %arg2 : i32, i32
  }
  func.func @transform_1(%arg0: i32, %arg1: i32, %arg2: i32) -> (i32, i32) {
    %c0_i32 = arith.constant 0 : i32
    return %arg2, %arg1 : i32, i32
  }
  func.func @transform_2(%arg0: i32, %arg1: i32, %arg2: i32) -> (i32, i32) {
    %c0_i32 = arith.constant 0 : i32
    %c0_i32_0 = arith.constant 0 : i32
    return %c0_i32, %arg1 : i32, i32
  }
  func.func @transform_3(%arg0: i32, %arg1: i32, %arg2: i32) -> (i32, i32) {
    %c0_i32 = arith.constant 0 : i32
    return %arg0, %arg1 : i32, i32
  }
}

module attributes {stable_mosaic.version = 11 : i64} {
  func.func @_mm_bias_kernel(%arg0: i32, %arg1: i32, %arg2: i32, %arg3: memref<32x384xbf16, #tpu.memory_space<vmem>>, %arg4: memref<384x128xbf16, #tpu.memory_space<vmem>>, %arg5: memref<1x128xf32, #tpu.memory_space<vmem>>, %arg6: memref<32x128xbf16, #tpu.memory_space<vmem>>, %arg7: memref<32x128xf32, #tpu.memory_space<vmem>>) attributes {dimension_semantics = [#tpu.dimension_semantics<parallel>, #tpu.dimension_semantics<parallel>, #tpu.dimension_semantics<arbitrary>], iteration_bounds = array<i64: 1, 1, 1>, scalar_prefetch = 0 : i64, scratch_operands = 1 : i64, tpu.core_type = #tpu.core_type<tc>, window_params = [{transform_indices = @transform_0, window_bounds = array<i64: 32, 384>}, {transform_indices = @transform_1, window_bounds = array<i64: 384, 128>}, {transform_indices = @transform_2, window_bounds = array<i64: 1, 128>}, {transform_indices = @transform_3, window_bounds = array<i64: 32, 128>}]} {
    %c0_i32 = arith.constant 0 : i32
    %0 = arith.cmpi eq, %arg2, %c0_i32 : i32
    %1 = arith.extui %0 : i1 to i32
    %c0_i32_0 = arith.constant 0 : i32
    %2 = arith.cmpi ne, %1, %c0_i32_0 : i32
    scf.if %2 {
      %cst_11 = arith.constant 0.000000e+00 : f32
      %14 = vector.broadcast %cst_11 : f32 to vector<32x128xf32>
      %c0_12 = arith.constant 0 : index
      %c0_13 = arith.constant 0 : index
      %15 = vector.load %arg7[%c0_12, %c0_13] : memref<32x128xf32, #tpu.memory_space<vmem>>, vector<32x128xf32>
      tpu.vector_store %arg7[%c0_12, %c0_13], %14 {strides = array<i32>} : memref<32x128xf32, #tpu.memory_space<vmem>>, vector<32x128xf32>,
    } else {
    }
    %c0 = arith.constant 0 : index
    %c0_1 = arith.constant 0 : index
    %3 = vector.load %arg3[%c0, %c0_1] : memref<32x384xbf16, #tpu.memory_space<vmem>>, vector<32x384xbf16>
    %cst = arith.constant 0.000000e+00 : bf16
    %4 = vector.broadcast %cst : bf16 to vector<32x384xbf16>
    %5 = arith.maximumf %3, %4 : vector<32x384xbf16>
    %c0_2 = arith.constant 0 : index
    %c0_3 = arith.constant 0 : index
    %6 = vector.load %arg7[%c0_2, %c0_3] : memref<32x128xf32, #tpu.memory_space<vmem>>, vector<32x128xf32>
    %c0_4 = arith.constant 0 : index
    %c0_5 = arith.constant 0 : index
    %7 = vector.load %arg4[%c0_4, %c0_5] : memref<384x128xbf16, #tpu.memory_space<vmem>>, vector<384x128xbf16>
    %cst_6 = arith.constant dense<0.000000e+00> : vector<32x128xf32>
    %8 = tpu.matmul %5, %7, %cst_6 {dimension_numbers = #tpu.dot_dimension_numbers<[1], [0], [0], [1], [0, 0, 1, 1], [], []>} : vector<32x384xbf16>, vector<384x128xbf16>, vector<32x128xf32> -> vector<32x128xf32>
    %9 = arith.addf %6, %8 : vector<32x128xf32>
    %c0_7 = arith.constant 0 : index
    %c0_8 = arith.constant 0 : index
    %10 = vector.load %arg7[%c0_7, %c0_8] : memref<32x128xf32, #tpu.memory_space<vmem>>, vector<32x128xf32>
    tpu.vector_store %arg7[%c0_7, %c0_8], %9 {strides = array<i32>} : memref<32x128xf32, #tpu.memory_space<vmem>>, vector<32x128xf32>,
    %c0_i32_9 = arith.constant 0 : i32
    %11 = arith.cmpi eq, %arg2, %c0_i32_9 : i32
    %12 = arith.extui %11 : i1 to i32
    %c0_i32_10 = arith.constant 0 : i32
    %13 = arith.cmpi ne, %12, %c0_i32_10 : i32
    scf.if %13 {
      %c0_11 = arith.constant 0 : index
      %c0_12 = arith.constant 0 : index
      %14 = vector.load %arg7[%c0_11, %c0_12] : memref<32x128xf32, #tpu.memory_space<vmem>>, vector<32x128xf32>
      %c0_13 = arith.constant 0 : index
      %c0_14 = arith.constant 0 : index
      %15 = vector.load %arg5[%c0_13, %c0_14] : memref<1x128xf32, #tpu.memory_space<vmem>>, vector<1x128xf32>
      %16 = vector.broadcast %15 : vector<1x128xf32> to vector<32x128xf32>
      %17 = arith.addf %14, %16 : vector<32x128xf32>
      %cst_15 = arith.constant 0.000000e+00 : f32
      %18 = vector.broadcast %cst_15 : f32 to vector<32x128xf32>
      %19 = arith.maximumf %17, %18 : vector<32x128xf32>
      %20 = arith.truncf %19 : vector<32x128xf32> to vector<32x128xbf16>
      %c0_16 = arith.constant 0 : index
      %c0_17 = arith.constant 0 : index
      %21 = vector.load %arg6[%c0_16, %c0_17] : memref<32x128xbf16, #tpu.memory_space<vmem>>, vector<32x128xbf16>
      tpu.vector_store %arg6[%c0_16, %c0_17], %20 {strides = array<i32>} : memref<32x128xbf16, #tpu.memory_space<vmem>>, vector<32x128xbf16>,
    } else {
    }
    return
  }
  func.func @transform_0(%arg0: i32, %arg1: i32, %arg2: i32) -> (i32, i32) {
    %c0_i32 = arith.constant 0 : i32
    return %arg0, %arg2 : i32, i32
  }
  func.func @transform_1(%arg0: i32, %arg1: i32, %arg2: i32) -> (i32, i32) {
    %c0_i32 = arith.constant 0 : i32
    return %arg2, %arg1 : i32, i32
  }
  func.func @transform_2(%arg0: i32, %arg1: i32, %arg2: i32) -> (i32, i32) {
    %c0_i32 = arith.constant 0 : i32
    %c0_i32_0 = arith.constant 0 : i32
    return %c0_i32, %arg1 : i32, i32
  }
  func.func @transform_3(%arg0: i32, %arg1: i32, %arg2: i32) -> (i32, i32) {
    %c0_i32 = arith.constant 0 : i32
    return %arg0, %arg1 : i32, i32
  }
}

module attributes {stable_mosaic.version = 11 : i64} {
  func.func @_mm_bias_kernel(%arg0: i32, %arg1: i32, %arg2: i32, %arg3: memref<32x128xbf16, #tpu.memory_space<vmem>>, %arg4: memref<128x128xbf16, #tpu.memory_space<vmem>>, %arg5: memref<1x128xf32, #tpu.memory_space<vmem>>, %arg6: memref<32x128xf32, #tpu.memory_space<vmem>>, %arg7: memref<32x128xf32, #tpu.memory_space<vmem>>) attributes {dimension_semantics = [#tpu.dimension_semantics<parallel>, #tpu.dimension_semantics<parallel>, #tpu.dimension_semantics<arbitrary>], iteration_bounds = array<i64: 1, 1, 1>, scalar_prefetch = 0 : i64, scratch_operands = 0 : i64, tpu.core_type = #tpu.core_type<tc>, window_params = [{transform_indices = @transform_0, window_bounds = array<i64: 32, 128>}, {transform_indices = @transform_1, window_bounds = array<i64: 128, 128>}, {transform_indices = @transform_2, window_bounds = array<i64: 1, 128>}, {transform_indices = @transform_3, window_bounds = array<i64: 32, 128>}, {transform_indices = @transform_4, window_bounds = array<i64: 32, 128>}]} {
    %c0_i32 = arith.constant 0 : i32
    %0 = arith.cmpi eq, %arg2, %c0_i32 : i32
    %1 = arith.extui %0 : i1 to i32
    %c0_i32_0 = arith.constant 0 : i32
    %2 = arith.cmpi ne, %1, %c0_i32_0 : i32
    scf.if %2 {
      %cst_10 = arith.constant 0.000000e+00 : f32
      %12 = vector.broadcast %cst_10 : f32 to vector<32x128xf32>
      %c0_11 = arith.constant 0 : index
      %c0_12 = arith.constant 0 : index
      %13 = vector.load %arg7[%c0_11, %c0_12] : memref<32x128xf32, #tpu.memory_space<vmem>>, vector<32x128xf32>
      tpu.vector_store %arg7[%c0_11, %c0_12], %12 {strides = array<i32>} : memref<32x128xf32, #tpu.memory_space<vmem>>, vector<32x128xf32>,
    } else {
    }
    %c0 = arith.constant 0 : index
    %c0_1 = arith.constant 0 : index
    %3 = vector.load %arg3[%c0, %c0_1] : memref<32x128xbf16, #tpu.memory_space<vmem>>, vector<32x128xbf16>
    %c0_2 = arith.constant 0 : index
    %c0_3 = arith.constant 0 : index
    %4 = vector.load %arg7[%c0_2, %c0_3] : memref<32x128xf32, #tpu.memory_space<vmem>>, vector<32x128xf32>
    %c0_4 = arith.constant 0 : index
    %c0_5 = arith.constant 0 : index
    %5 = vector.load %arg4[%c0_4, %c0_5] : memref<128x128xbf16, #tpu.memory_space<vmem>>, vector<128x128xbf16>
    %cst = arith.constant dense<0.000000e+00> : vector<32x128xf32>
    %6 = tpu.matmul %3, %5, %cst {dimension_numbers = #tpu.dot_dimension_numbers<[1], [0], [0], [1], [0, 0, 1, 1], [], []>} : vector<32x128xbf16>, vector<128x128xbf16>, vector<32x128xf32> -> vector<32x128xf32>
    %7 = arith.addf %4, %6 : vector<32x128xf32>
    %c0_6 = arith.constant 0 : index
    %c0_7 = arith.constant 0 : index
    %8 = vector.load %arg7[%c0_6, %c0_7] : memref<32x128xf32, #tpu.memory_space<vmem>>, vector<32x128xf32>
    tpu.vector_store %arg7[%c0_6, %c0_7], %7 {strides = array<i32>} : memref<32x128xf32, #tpu.memory_space<vmem>>, vector<32x128xf32>,
    %c0_i32_8 = arith.constant 0 : i32
    %9 = arith.cmpi eq, %arg2, %c0_i32_8 : i32
    %10 = arith.extui %9 : i1 to i32
    %c0_i32_9 = arith.constant 0 : i32
    %11 = arith.cmpi ne, %10, %c0_i32_9 : i32
    scf.if %11 {
      %c0_10 = arith.constant 0 : index
      %c0_11 = arith.constant 0 : index
      %12 = vector.load %arg7[%c0_10, %c0_11] : memref<32x128xf32, #tpu.memory_space<vmem>>, vector<32x128xf32>
      %c0_12 = arith.constant 0 : index
      %c0_13 = arith.constant 0 : index
      %13 = vector.load %arg5[%c0_12, %c0_13] : memref<1x128xf32, #tpu.memory_space<vmem>>, vector<1x128xf32>
      %14 = vector.broadcast %13 : vector<1x128xf32> to vector<32x128xf32>
      %15 = arith.addf %12, %14 : vector<32x128xf32>
      %c0_14 = arith.constant 0 : index
      %c0_15 = arith.constant 0 : index
      %16 = vector.load %arg6[%c0_14, %c0_15] : memref<32x128xf32, #tpu.memory_space<vmem>>, vector<32x128xf32>
      %17 = arith.addf %15, %16 : vector<32x128xf32>
      %c0_16 = arith.constant 0 : index
      %c0_17 = arith.constant 0 : index
      %18 = vector.load %arg7[%c0_16, %c0_17] : memref<32x128xf32, #tpu.memory_space<vmem>>, vector<32x128xf32>
      tpu.vector_store %arg7[%c0_16, %c0_17], %17 {strides = array<i32>} : memref<32x128xf32, #tpu.memory_space<vmem>>, vector<32x128xf32>,
    } else {
    }
    return
  }
  func.func @transform_0(%arg0: i32, %arg1: i32, %arg2: i32) -> (i32, i32) {
    %c0_i32 = arith.constant 0 : i32
    return %arg0, %arg2 : i32, i32
  }
  func.func @transform_1(%arg0: i32, %arg1: i32, %arg2: i32) -> (i32, i32) {
    %c0_i32 = arith.constant 0 : i32
    return %arg2, %arg1 : i32, i32
  }
  func.func @transform_2(%arg0: i32, %arg1: i32, %arg2: i32) -> (i32, i32) {
    %c0_i32 = arith.constant 0 : i32
    %c0_i32_0 = arith.constant 0 : i32
    return %c0_i32, %arg1 : i32, i32
  }
  func.func @transform_3(%arg0: i32, %arg1: i32, %arg2: i32) -> (i32, i32) {
    %c0_i32 = arith.constant 0 : i32
    return %arg0, %arg1 : i32, i32
  }
  func.func @transform_4(%arg0: i32, %arg1: i32, %arg2: i32) -> (i32, i32) {
    %c0_i32 = arith.constant 0 : i32
    return %arg0, %arg1 : i32, i32
  }
}

module attributes {stable_mosaic.version = 11 : i64} {
  func.func @_mm_bias_kernel(%arg0: i32, %arg1: i32, %arg2: i32, %arg3: memref<32x128xbf16, #tpu.memory_space<vmem>>, %arg4: memref<128x128xbf16, #tpu.memory_space<vmem>>, %arg5: memref<1x128xf32, #tpu.memory_space<vmem>>, %arg6: memref<32x128xf32, #tpu.memory_space<vmem>>) attributes {dimension_semantics = [#tpu.dimension_semantics<parallel>, #tpu.dimension_semantics<parallel>, #tpu.dimension_semantics<arbitrary>], iteration_bounds = array<i64: 1, 1, 1>, scalar_prefetch = 0 : i64, scratch_operands = 0 : i64, tpu.core_type = #tpu.core_type<tc>, window_params = [{transform_indices = @transform_0, window_bounds = array<i64: 32, 128>}, {transform_indices = @transform_1, window_bounds = array<i64: 128, 128>}, {transform_indices = @transform_2, window_bounds = array<i64: 1, 128>}, {transform_indices = @transform_3, window_bounds = array<i64: 32, 128>}]} {
    %c0_i32 = arith.constant 0 : i32
    %0 = arith.cmpi eq, %arg2, %c0_i32 : i32
    %1 = arith.extui %0 : i1 to i32
    %c0_i32_0 = arith.constant 0 : i32
    %2 = arith.cmpi ne, %1, %c0_i32_0 : i32
    scf.if %2 {
      %cst_11 = arith.constant 0.000000e+00 : f32
      %14 = vector.broadcast %cst_11 : f32 to vector<32x128xf32>
      %c0_12 = arith.constant 0 : index
      %c0_13 = arith.constant 0 : index
      %15 = vector.load %arg6[%c0_12, %c0_13] : memref<32x128xf32, #tpu.memory_space<vmem>>, vector<32x128xf32>
      tpu.vector_store %arg6[%c0_12, %c0_13], %14 {strides = array<i32>} : memref<32x128xf32, #tpu.memory_space<vmem>>, vector<32x128xf32>,
    } else {
    }
    %c0 = arith.constant 0 : index
    %c0_1 = arith.constant 0 : index
    %3 = vector.load %arg3[%c0, %c0_1] : memref<32x128xbf16, #tpu.memory_space<vmem>>, vector<32x128xbf16>
    %cst = arith.constant 0.000000e+00 : bf16
    %4 = vector.broadcast %cst : bf16 to vector<32x128xbf16>
    %5 = arith.maximumf %3, %4 : vector<32x128xbf16>
    %c0_2 = arith.constant 0 : index
    %c0_3 = arith.constant 0 : index
    %6 = vector.load %arg6[%c0_2, %c0_3] : memref<32x128xf32, #tpu.memory_space<vmem>>, vector<32x128xf32>
    %c0_4 = arith.constant 0 : index
    %c0_5 = arith.constant 0 : index
    %7 = vector.load %arg4[%c0_4, %c0_5] : memref<128x128xbf16, #tpu.memory_space<vmem>>, vector<128x128xbf16>
    %cst_6 = arith.constant dense<0.000000e+00> : vector<32x128xf32>
    %8 = tpu.matmul %5, %7, %cst_6 {dimension_numbers = #tpu.dot_dimension_numbers<[1], [0], [0], [1], [0, 0, 1, 1], [], []>} : vector<32x128xbf16>, vector<128x128xbf16>, vector<32x128xf32> -> vector<32x128xf32>
    %9 = arith.addf %6, %8 : vector<32x128xf32>
    %c0_7 = arith.constant 0 : index
    %c0_8 = arith.constant 0 : index
    %10 = vector.load %arg6[%c0_7, %c0_8] : memref<32x128xf32, #tpu.memory_space<vmem>>, vector<32x128xf32>
    tpu.vector_store %arg6[%c0_7, %c0_8], %9 {strides = array<i32>} : memref<32x128xf32, #tpu.memory_space<vmem>>, vector<32x128xf32>,
    %c0_i32_9 = arith.constant 0 : i32
    %11 = arith.cmpi eq, %arg2, %c0_i32_9 : i32
    %12 = arith.extui %11 : i1 to i32
    %c0_i32_10 = arith.constant 0 : i32
    %13 = arith.cmpi ne, %12, %c0_i32_10 : i32
    scf.if %13 {
      %c0_11 = arith.constant 0 : index
      %c0_12 = arith.constant 0 : index
      %14 = vector.load %arg6[%c0_11, %c0_12] : memref<32x128xf32, #tpu.memory_space<vmem>>, vector<32x128xf32>
      %c0_13 = arith.constant 0 : index
      %c0_14 = arith.constant 0 : index
      %15 = vector.load %arg5[%c0_13, %c0_14] : memref<1x128xf32, #tpu.memory_space<vmem>>, vector<1x128xf32>
      %16 = vector.broadcast %15 : vector<1x128xf32> to vector<32x128xf32>
      %17 = arith.addf %14, %16 : vector<32x128xf32>
      %c0_15 = arith.constant 0 : index
      %c0_16 = arith.constant 0 : index
      %18 = vector.load %arg6[%c0_15, %c0_16] : memref<32x128xf32, #tpu.memory_space<vmem>>, vector<32x128xf32>
      tpu.vector_store %arg6[%c0_15, %c0_16], %17 {strides = array<i32>} : memref<32x128xf32, #tpu.memory_space<vmem>>, vector<32x128xf32>,
    } else {
    }
    return
  }
  func.func @transform_0(%arg0: i32, %arg1: i32, %arg2: i32) -> (i32, i32) {
    %c0_i32 = arith.constant 0 : i32
    return %arg0, %arg2 : i32, i32
  }
  func.func @transform_1(%arg0: i32, %arg1: i32, %arg2: i32) -> (i32, i32) {
    %c0_i32 = arith.constant 0 : i32
    return %arg2, %arg1 : i32, i32
  }
  func.func @transform_2(%arg0: i32, %arg1: i32, %arg2: i32) -> (i32, i32) {
    %c0_i32 = arith.constant 0 : i32
    %c0_i32_0 = arith.constant 0 : i32
    return %c0_i32, %arg1 : i32, i32
  }
  func.func @transform_3(%arg0: i32, %arg1: i32, %arg2: i32) -> (i32, i32) {
    %c0_i32 = arith.constant 0 : i32
    return %arg0, %arg1 : i32, i32
  }
}

module attributes {stable_mosaic.version = 11 : i64} {
  func.func @_dictlearn_kernel(%arg0: i32, %arg1: memref<32x128xf32, #tpu.memory_space<vmem>>, %arg2: memref<128x128xf32, #tpu.memory_space<vmem>>, %arg3: memref<32x128xf32, #tpu.memory_space<vmem>>, %arg4: memref<32x128xf32, #tpu.memory_space<vmem>>, %arg5: memref<8x128xf32, #tpu.memory_space<vmem>>, %arg6: memref<8x128xf32, #tpu.memory_space<vmem>>) attributes {dimension_semantics = [#tpu.dimension_semantics<parallel>], iteration_bounds = array<i64: 1>, scalar_prefetch = 0 : i64, scratch_operands = 0 : i64, tpu.core_type = #tpu.core_type<tc>, window_params = [{transform_indices = @transform_0, window_bounds = array<i64: 32, 128>}, {pipeline_mode = #tpu.pipeline_mode<synchronous>, transform_indices = @transform_1, window_bounds = array<i64: 128, 128>}, {transform_indices = @transform_2, window_bounds = array<i64: 32, 128>}, {transform_indices = @transform_3, window_bounds = array<i64: 32, 128>}, {transform_indices = @transform_4, window_bounds = array<i64: 8, 128>}, {transform_indices = @transform_5, window_bounds = array<i64: 8, 128>}]} {
    %c0 = arith.constant 0 : index
    %c0_0 = arith.constant 0 : index
    %0 = vector.load %arg1[%c0, %c0_0] : memref<32x128xf32, #tpu.memory_space<vmem>>, vector<32x128xf32>
    %cst = arith.constant 0.000000e+00 : f32
    %1 = vector.broadcast %cst : f32 to vector<32x128xf32>
    %c0_1 = arith.constant 0 : index
    %c0_2 = arith.constant 0 : index
    %2 = vector.load %arg4[%c0_1, %c0_2] : memref<32x128xf32, #tpu.memory_space<vmem>>, vector<32x128xf32>
    tpu.vector_store %arg4[%c0_1, %c0_2], %1 {strides = array<i32>} : memref<32x128xf32, #tpu.memory_space<vmem>>, vector<32x128xf32>,
    %cst_3 = arith.constant 0.000000e+00 : f32
    %3 = vector.broadcast %cst_3 : f32 to vector<1x128xf32>
    %4 = tpu.iota {dimensions = array<i32: 1>} : vector<32x128xi32>
    %c32_i32 = arith.constant 32 : i32
    %5 = arith.muli %arg0, %c32_i32 : i32
    %6 = tpu.iota {dimensions = array<i32: 0>} : vector<32x1xi32>
    %7 = vector.broadcast %5 : i32 to vector<32x1xi32>
    %8 = arith.addi %7, %6 : vector<32x1xi32>
    %c32_i32_4 = arith.constant 32 : i32
    %9 = vector.broadcast %c32_i32_4 : i32 to vector<32x1xi32>
    %10 = arith.cmpi slt, %8, %9 : vector<32x1xi32>
    %11 = arith.extui %10 : vector<32x1xi1> to vector<32x1xi32>
    %12 = arith.sitofp %11 : vector<32x1xi32> to vector<32x1xf32>
    %c0_5 = arith.constant 0 : index
    %c0_6 = arith.constant 0 : index
    %13 = vector.load %arg2[%c0_5, %c0_6] : memref<128x128xf32, #tpu.memory_space<vmem>>, vector<128x128xf32>
    %cst_7 = arith.constant dense<0.000000e+00> : vector<32x128xf32>
    %14 = tpu.matmul %0, %13, %cst_7 {dimension_numbers = #tpu.dot_dimension_numbers<[1], [1], [0], [0], [0, 0, 1, 0], [], []>} : vector<32x128xf32>, vector<128x128xf32>, vector<32x128xf32> -> vector<32x128xf32>
    %15 = math.absf %14 : vector<32x128xf32>
    %16 = tpu.reduce_index %15 {axis = 1 : i32, kind = #tpu.reduction_kind<arg_max>} : vector<32x128xf32> -> vector<32xi32>
    %17 = vector.shape_cast %16 : vector<32xi32> to vector<32x1xi32>
    %18 = vector.broadcast %17 : vector<32x1xi32> to vector<32x128xi32>
    %19 = arith.cmpi eq, %4, %18 : vector<32x128xi32>
    %20 = arith.extui %19 : vector<32x128xi1> to vector<32x128xi32>
    %21 = arith.sitofp %20 : vector<32x128xi32> to vector<32x128xf32>
    %22 = arith.mulf %14, %21 : vector<32x128xf32>
    %cst_8 = arith.constant dense<0.000000e+00> : vector<32xf32>
    %23 = vector.multi_reduction <add>, %22, %cst_8 [1] : vector<32x128xf32> to vector<32xf32>
    %24 = vector.shape_cast %23 : vector<32xf32> to vector<32x1xf32>
    %c0_9 = arith.constant 0 : index
    %c0_10 = arith.constant 0 : index
    %25 = vector.load %arg4[%c0_9, %c0_10] : memref<32x128xf32, #tpu.memory_space<vmem>>, vector<32x128xf32>
    %26 = vector.broadcast %24 : vector<32x1xf32> to vector<32x128xf32>
    %27 = arith.mulf %21, %26 : vector<32x128xf32>
    %28 = arith.addf %25, %27 : vector<32x128xf32>
    %c0_11 = arith.constant 0 : index
    %c0_12 = arith.constant 0 : index
    %29 = vector.load %arg4[%c0_11, %c0_12] : memref<32x128xf32, #tpu.memory_space<vmem>>, vector<32x128xf32>
    tpu.vector_store %arg4[%c0_11, %c0_12], %28 {strides = array<i32>} : memref<32x128xf32, #tpu.memory_space<vmem>>, vector<32x128xf32>,
    %30 = vector.broadcast %12 : vector<32x1xf32> to vector<32x128xf32>
    %31 = arith.mulf %21, %30 : vector<32x128xf32>
    %cst_13 = arith.constant dense<0.000000e+00> : vector<128xf32>
    %32 = vector.multi_reduction <add>, %31, %cst_13 [0] : vector<32x128xf32> to vector<128xf32>
    %33 = vector.shape_cast %32 : vector<128xf32> to vector<1x128xf32>
    %34 = arith.addf %3, %33 : vector<1x128xf32>
    %c0_14 = arith.constant 0 : index
    %c0_15 = arith.constant 0 : index
    %35 = vector.load %arg2[%c0_14, %c0_15] : memref<128x128xf32, #tpu.memory_space<vmem>>, vector<128x128xf32>
    %cst_16 = arith.constant dense<0.000000e+00> : vector<32x128xf32>
    %36 = tpu.matmul %21, %35, %cst_16 {dimension_numbers = #tpu.dot_dimension_numbers<[1], [0], [0], [1], [0, 0, 1, 1], [], []>} : vector<32x128xf32>, vector<128x128xf32>, vector<32x128xf32> -> vector<32x128xf32>
    %37 = vector.broadcast %24 : vector<32x1xf32> to vector<32x128xf32>
    %38 = arith.mulf %37, %36 : vector<32x128xf32>
    %39 = arith.subf %0, %38 : vector<32x128xf32>
    %c0_17 = arith.constant 0 : index
    %c0_18 = arith.constant 0 : index
    %40 = vector.load %arg2[%c0_17, %c0_18] : memref<128x128xf32, #tpu.memory_space<vmem>>, vector<128x128xf32>
    %cst_19 = arith.constant dense<0.000000e+00> : vector<32x128xf32>
    %41 = tpu.matmul %39, %40, %cst_19 {dimension_numbers = #tpu.dot_dimension_numbers<[1], [1], [0], [0], [0, 0, 1, 0], [], []>} : vector<32x128xf32>, vector<128x128xf32>, vector<32x128xf32> -> vector<32x128xf32>
    %42 = math.absf %41 : vector<32x128xf32>
    %43 = tpu.reduce_index %42 {axis = 1 : i32, kind = #tpu.reduction_kind<arg_max>} : vector<32x128xf32> -> vector<32xi32>
    %44 = vector.shape_cast %43 : vector<32xi32> to vector<32x1xi32>
    %45 = vector.broadcast %44 : vector<32x1xi32> to vector<32x128xi32>
    %46 = arith.cmpi eq, %4, %45 : vector<32x128xi32>
    %47 = arith.extui %46 : vector<32x128xi1> to vector<32x128xi32>
    %48 = arith.sitofp %47 : vector<32x128xi32> to vector<32x128xf32>
    %49 = arith.mulf %41, %48 : vector<32x128xf32>
    %cst_20 = arith.constant dense<0.000000e+00> : vector<32xf32>
    %50 = vector.multi_reduction <add>, %49, %cst_20 [1] : vector<32x128xf32> to vector<32xf32>
    %51 = vector.shape_cast %50 : vector<32xf32> to vector<32x1xf32>
    %c0_21 = arith.constant 0 : index
    %c0_22 = arith.constant 0 : index
    %52 = vector.load %arg4[%c0_21, %c0_22] : memref<32x128xf32, #tpu.memory_space<vmem>>, vector<32x128xf32>
    %53 = vector.broadcast %51 : vector<32x1xf32> to vector<32x128xf32>
    %54 = arith.mulf %48, %53 : vector<32x128xf32>
    %55 = arith.addf %52, %54 : vector<32x128xf32>
    %c0_23 = arith.constant 0 : index
    %c0_24 = arith.constant 0 : index
    %56 = vector.load %arg4[%c0_23, %c0_24] : memref<32x128xf32, #tpu.memory_space<vmem>>, vector<32x128xf32>
    tpu.vector_store %arg4[%c0_23, %c0_24], %55 {strides = array<i32>} : memref<32x128xf32, #tpu.memory_space<vmem>>, vector<32x128xf32>,
    %57 = vector.broadcast %12 : vector<32x1xf32> to vector<32x128xf32>
    %58 = arith.mulf %48, %57 : vector<32x128xf32>
    %cst_25 = arith.constant dense<0.000000e+00> : vector<128xf32>
    %59 = vector.multi_reduction <add>, %58, %cst_25 [0] : vector<32x128xf32> to vector<128xf32>
    %60 = vector.shape_cast %59 : vector<128xf32> to vector<1x128xf32>
    %61 = arith.addf %34, %60 : vector<1x128xf32>
    %c0_26 = arith.constant 0 : index
    %c0_27 = arith.constant 0 : index
    %62 = vector.load %arg2[%c0_26, %c0_27] : memref<128x128xf32, #tpu.memory_space<vmem>>, vector<128x128xf32>
    %cst_28 = arith.constant dense<0.000000e+00> : vector<32x128xf32>
    %63 = tpu.matmul %48, %62, %cst_28 {dimension_numbers = #tpu.dot_dimension_numbers<[1], [0], [0], [1], [0, 0, 1, 1], [], []>} : vector<32x128xf32>, vector<128x128xf32>, vector<32x128xf32> -> vector<32x128xf32>
    %64 = vector.broadcast %51 : vector<32x1xf32> to vector<32x128xf32>
    %65 = arith.mulf %64, %63 : vector<32x128xf32>
    %66 = arith.subf %39, %65 : vector<32x128xf32>
    %c0_29 = arith.constant 0 : index
    %c0_30 = arith.constant 0 : index
    %67 = vector.load %arg2[%c0_29, %c0_30] : memref<128x128xf32, #tpu.memory_space<vmem>>, vector<128x128xf32>
    %cst_31 = arith.constant dense<0.000000e+00> : vector<32x128xf32>
    %68 = tpu.matmul %66, %67, %cst_31 {dimension_numbers = #tpu.dot_dimension_numbers<[1], [1], [0], [0], [0, 0, 1, 0], [], []>} : vector<32x128xf32>, vector<128x128xf32>, vector<32x128xf32> -> vector<32x128xf32>
    %69 = math.absf %68 : vector<32x128xf32>
    %70 = tpu.reduce_index %69 {axis = 1 : i32, kind = #tpu.reduction_kind<arg_max>} : vector<32x128xf32> -> vector<32xi32>
    %71 = vector.shape_cast %70 : vector<32xi32> to vector<32x1xi32>
    %72 = vector.broadcast %71 : vector<32x1xi32> to vector<32x128xi32>
    %73 = arith.cmpi eq, %4, %72 : vector<32x128xi32>
    %74 = arith.extui %73 : vector<32x128xi1> to vector<32x128xi32>
    %75 = arith.sitofp %74 : vector<32x128xi32> to vector<32x128xf32>
    %76 = arith.mulf %68, %75 : vector<32x128xf32>
    %cst_32 = arith.constant dense<0.000000e+00> : vector<32xf32>
    %77 = vector.multi_reduction <add>, %76, %cst_32 [1] : vector<32x128xf32> to vector<32xf32>
    %78 = vector.shape_cast %77 : vector<32xf32> to vector<32x1xf32>
    %c0_33 = arith.constant 0 : index
    %c0_34 = arith.constant 0 : index
    %79 = vector.load %arg4[%c0_33, %c0_34] : memref<32x128xf32, #tpu.memory_space<vmem>>, vector<32x128xf32>
    %80 = vector.broadcast %78 : vector<32x1xf32> to vector<32x128xf32>
    %81 = arith.mulf %75, %80 : vector<32x128xf32>
    %82 = arith.addf %79, %81 : vector<32x128xf32>
    %c0_35 = arith.constant 0 : index
    %c0_36 = arith.constant 0 : index
    %83 = vector.load %arg4[%c0_35, %c0_36] : memref<32x128xf32, #tpu.memory_space<vmem>>, vector<32x128xf32>
    tpu.vector_store %arg4[%c0_35, %c0_36], %82 {strides = array<i32>} : memref<32x128xf32, #tpu.memory_space<vmem>>, vector<32x128xf32>,
    %84 = vector.broadcast %12 : vector<32x1xf32> to vector<32x128xf32>
    %85 = arith.mulf %75, %84 : vector<32x128xf32>
    %cst_37 = arith.constant dense<0.000000e+00> : vector<128xf32>
    %86 = vector.multi_reduction <add>, %85, %cst_37 [0] : vector<32x128xf32> to vector<128xf32>
    %87 = vector.shape_cast %86 : vector<128xf32> to vector<1x128xf32>
    %88 = arith.addf %61, %87 : vector<1x128xf32>
    %c0_38 = arith.constant 0 : index
    %c0_39 = arith.constant 0 : index
    %89 = vector.load %arg2[%c0_38, %c0_39] : memref<128x128xf32, #tpu.memory_space<vmem>>, vector<128x128xf32>
    %cst_40 = arith.constant dense<0.000000e+00> : vector<32x128xf32>
    %90 = tpu.matmul %75, %89, %cst_40 {dimension_numbers = #tpu.dot_dimension_numbers<[1], [0], [0], [1], [0, 0, 1, 1], [], []>} : vector<32x128xf32>, vector<128x128xf32>, vector<32x128xf32> -> vector<32x128xf32>
    %91 = vector.broadcast %78 : vector<32x1xf32> to vector<32x128xf32>
    %92 = arith.mulf %91, %90 : vector<32x128xf32>
    %93 = arith.subf %66, %92 : vector<32x128xf32>
    %c0_41 = arith.constant 0 : index
    %c0_42 = arith.constant 0 : index
    %94 = vector.load %arg1[%c0_41, %c0_42] : memref<32x128xf32, #tpu.memory_space<vmem>>, vector<32x128xf32>
    %95 = arith.subf %94, %93 : vector<32x128xf32>
    %c0_43 = arith.constant 0 : index
    %c0_44 = arith.constant 0 : index
    %96 = vector.load %arg3[%c0_43, %c0_44] : memref<32x128xf32, #tpu.memory_space<vmem>>, vector<32x128xf32>
    tpu.vector_store %arg3[%c0_43, %c0_44], %95 {strides = array<i32>} : memref<32x128xf32, #tpu.memory_space<vmem>>, vector<32x128xf32>,
    %97 = arith.mulf %93, %93 : vector<32x128xf32>
    %98 = vector.shape_cast %97 : vector<32x128xf32> to vector<1x32x128xf32>
    %cst_45 = arith.constant dense<0.000000e+00> : vector<1xf32>
    %99 = vector.multi_reduction <add>, %98, %cst_45 [1, 2] : vector<1x32x128xf32> to vector<1xf32>
    %100 = vector.shape_cast %99 : vector<1xf32> to vector<1x1x1xf32>
    %101 = vector.extract %100[0, 0, 0] : f32 from vector<1x1x1xf32>
    %102 = vector.broadcast %101 : f32 to vector<1x1xf32>
    %103 = tpu.iota {dimensions = array<i32: 0>} : vector<8x128xi32>
    %c0_i32 = arith.constant 0 : i32
    %104 = vector.broadcast %c0_i32 : i32 to vector<8x128xi32>
    %105 = arith.cmpi eq, %103, %104 : vector<8x128xi32>
    %cst_46 = arith.constant 0.000000e+00 : f32
    %106 = vector.shape_cast %88 : vector<1x128xf32> to vector<1x128xf32>
    %107 = vector.broadcast %106 : vector<1x128xf32> to vector<8x128xf32>
    %108 = vector.broadcast %cst_46 : f32 to vector<8x128xf32>
    %109 = arith.select %105, %107, %108 : vector<8x128xi1>, vector<8x128xf32>
    %c0_47 = arith.constant 0 : index
    %c0_48 = arith.constant 0 : index
    %110 = vector.load %arg5[%c0_47, %c0_48] : memref<8x128xf32, #tpu.memory_space<vmem>>, vector<8x128xf32>
    tpu.vector_store %arg5[%c0_47, %c0_48], %109 {strides = array<i32>} : memref<8x128xf32, #tpu.memory_space<vmem>>, vector<8x128xf32>,
    %111 = tpu.iota {dimensions = array<i32: 0>} : vector<8x128xi32>
    %112 = tpu.iota {dimensions = array<i32: 1>} : vector<8x128xi32>
    %c0_i32_49 = arith.constant 0 : i32
    %113 = vector.broadcast %c0_i32_49 : i32 to vector<8x128xi32>
    %114 = arith.cmpi eq, %111, %113 : vector<8x128xi32>
    %c0_i32_50 = arith.constant 0 : i32
    %115 = vector.broadcast %c0_i32_50 : i32 to vector<8x128xi32>
    %116 = arith.cmpi eq, %112, %115 : vector<8x128xi32>
    %117 = arith.andi %114, %116 : vector<8x128xi1>
    %cst_51 = arith.constant 0.000000e+00 : f32
    %118 = vector.shape_cast %102 : vector<1x1xf32> to vector<1x1xf32>
    %119 = vector.broadcast %118 : vector<1x1xf32> to vector<8x128xf32>
    %120 = vector.broadcast %cst_51 : f32 to vector<8x128xf32>
    %121 = arith.select %117, %119, %120 : vector<8x128xi1>, vector<8x128xf32>
    %c0_52 = arith.constant 0 : index
    %c0_53 = arith.constant 0 : index
    %122 = vector.load %arg6[%c0_52, %c0_53] : memref<8x128xf32, #tpu.memory_space<vmem>>, vector<8x128xf32>
    tpu.vector_store %arg6[%c0_52, %c0_53], %121 {strides = array<i32>} : memref<8x128xf32, #tpu.memory_space<vmem>>, vector<8x128xf32>,
    return
  }
  func.func @transform_0(%arg0: i32) -> (i32, i32) {
    %c0_i32 = arith.constant 0 : i32
    %c0_i32_0 = arith.constant 0 : i32
    return %arg0, %c0_i32 : i32, i32
  }
  func.func @transform_1(%arg0: i32) -> (i32, i32) {
    %c0_i32 = arith.constant 0 : i32
    %c0_i32_0 = arith.constant 0 : i32
    %c0_i32_1 = arith.constant 0 : i32
    return %c0_i32, %c0_i32_0 : i32, i32
  }
  func.func @transform_2(%arg0: i32) -> (i32, i32) {
    %c0_i32 = arith.constant 0 : i32
    %c0_i32_0 = arith.constant 0 : i32
    return %arg0, %c0_i32 : i32, i32
  }
  func.func @transform_3(%arg0: i32) -> (i32, i32) {
    %c0_i32 = arith.constant 0 : i32
    %c0_i32_0 = arith.constant 0 : i32
    return %arg0, %c0_i32 : i32, i32
  }
  func.func @transform_4(%arg0: i32) -> (i32, i32) {
    %c0_i32 = arith.constant 0 : i32
    %c0_i32_0 = arith.constant 0 : i32
    return %arg0, %c0_i32 : i32, i32
  }
  func.func @transform_5(%arg0: i32) -> (i32, i32) {
    %c0_i32 = arith.constant 0 : i32
    %c0_i32_0 = arith.constant 0 : i32
    return %arg0, %c0_i32 : i32, i32
  }
}

module attributes {stable_mosaic.version = 11 : i64} {
  func.func @_mm_bias_kernel(%arg0: i32, %arg1: i32, %arg2: i32, %arg3: memref<32x256xbf16, #tpu.memory_space<vmem>>, %arg4: memref<256x128xbf16, #tpu.memory_space<vmem>>, %arg5: memref<1x128xf32, #tpu.memory_space<vmem>>, %arg6: memref<32x128xf32, #tpu.memory_space<vmem>>) attributes {dimension_semantics = [#tpu.dimension_semantics<parallel>, #tpu.dimension_semantics<parallel>, #tpu.dimension_semantics<arbitrary>], iteration_bounds = array<i64: 1, 1, 1>, scalar_prefetch = 0 : i64, scratch_operands = 0 : i64, tpu.core_type = #tpu.core_type<tc>, window_params = [{transform_indices = @transform_0, window_bounds = array<i64: 32, 256>}, {transform_indices = @transform_1, window_bounds = array<i64: 256, 128>}, {transform_indices = @transform_2, window_bounds = array<i64: 1, 128>}, {transform_indices = @transform_3, window_bounds = array<i64: 32, 128>}]} {
    %c0_i32 = arith.constant 0 : i32
    %0 = arith.cmpi eq, %arg2, %c0_i32 : i32
    %1 = arith.extui %0 : i1 to i32
    %c0_i32_0 = arith.constant 0 : i32
    %2 = arith.cmpi ne, %1, %c0_i32_0 : i32
    scf.if %2 {
      %cst_10 = arith.constant 0.000000e+00 : f32
      %12 = vector.broadcast %cst_10 : f32 to vector<32x128xf32>
      %c0_11 = arith.constant 0 : index
      %c0_12 = arith.constant 0 : index
      %13 = vector.load %arg6[%c0_11, %c0_12] : memref<32x128xf32, #tpu.memory_space<vmem>>, vector<32x128xf32>
      tpu.vector_store %arg6[%c0_11, %c0_12], %12 {strides = array<i32>} : memref<32x128xf32, #tpu.memory_space<vmem>>, vector<32x128xf32>,
    } else {
    }
    %c0 = arith.constant 0 : index
    %c0_1 = arith.constant 0 : index
    %3 = vector.load %arg3[%c0, %c0_1] : memref<32x256xbf16, #tpu.memory_space<vmem>>, vector<32x256xbf16>
    %c0_2 = arith.constant 0 : index
    %c0_3 = arith.constant 0 : index
    %4 = vector.load %arg6[%c0_2, %c0_3] : memref<32x128xf32, #tpu.memory_space<vmem>>, vector<32x128xf32>
    %c0_4 = arith.constant 0 : index
    %c0_5 = arith.constant 0 : index
    %5 = vector.load %arg4[%c0_4, %c0_5] : memref<256x128xbf16, #tpu.memory_space<vmem>>, vector<256x128xbf16>
    %cst = arith.constant dense<0.000000e+00> : vector<32x128xf32>
    %6 = tpu.matmul %3, %5, %cst {dimension_numbers = #tpu.dot_dimension_numbers<[1], [0], [0], [1], [0, 0, 1, 1], [], []>} : vector<32x256xbf16>, vector<256x128xbf16>, vector<32x128xf32> -> vector<32x128xf32>
    %7 = arith.addf %4, %6 : vector<32x128xf32>
    %c0_6 = arith.constant 0 : index
    %c0_7 = arith.constant 0 : index
    %8 = vector.load %arg6[%c0_6, %c0_7] : memref<32x128xf32, #tpu.memory_space<vmem>>, vector<32x128xf32>
    tpu.vector_store %arg6[%c0_6, %c0_7], %7 {strides = array<i32>} : memref<32x128xf32, #tpu.memory_space<vmem>>, vector<32x128xf32>,
    %c0_i32_8 = arith.constant 0 : i32
    %9 = arith.cmpi eq, %arg2, %c0_i32_8 : i32
    %10 = arith.extui %9 : i1 to i32
    %c0_i32_9 = arith.constant 0 : i32
    %11 = arith.cmpi ne, %10, %c0_i32_9 : i32
    scf.if %11 {
      %c0_10 = arith.constant 0 : index
      %c0_11 = arith.constant 0 : index
      %12 = vector.load %arg6[%c0_10, %c0_11] : memref<32x128xf32, #tpu.memory_space<vmem>>, vector<32x128xf32>
      %c0_12 = arith.constant 0 : index
      %c0_13 = arith.constant 0 : index
      %13 = vector.load %arg5[%c0_12, %c0_13] : memref<1x128xf32, #tpu.memory_space<vmem>>, vector<1x128xf32>
      %14 = vector.broadcast %13 : vector<1x128xf32> to vector<32x128xf32>
      %15 = arith.addf %12, %14 : vector<32x128xf32>
      %c0_14 = arith.constant 0 : index
      %c0_15 = arith.constant 0 : index
      %16 = vector.load %arg6[%c0_14, %c0_15] : memref<32x128xf32, #tpu.memory_space<vmem>>, vector<32x128xf32>
      tpu.vector_store %arg6[%c0_14, %c0_15], %15 {strides = array<i32>} : memref<32x128xf32, #tpu.memory_space<vmem>>, vector<32x128xf32>,
    } else {
    }
    return
  }
  func.func @transform_0(%arg0: i32, %arg1: i32, %arg2: i32) -> (i32, i32) {
    %c0_i32 = arith.constant 0 : i32
    return %arg0, %arg2 : i32, i32
  }
  func.func @transform_1(%arg0: i32, %arg1: i32, %arg2: i32) -> (i32, i32) {
    %c0_i32 = arith.constant 0 : i32
    return %arg2, %arg1 : i32, i32
  }
  func.func @transform_2(%arg0: i32, %arg1: i32, %arg2: i32) -> (i32, i32) {
    %c0_i32 = arith.constant 0 : i32
    %c0_i32_0 = arith.constant 0 : i32
    return %c0_i32, %arg1 : i32, i32
  }
  func.func @transform_3(%arg0: i32, %arg1: i32, %arg2: i32) -> (i32, i32) {
    %c0_i32 = arith.constant 0 : i32
    return %arg0, %arg1 : i32, i32
  }
}

module attributes {stable_mosaic.version = 11 : i64} {
  func.func @_mm_bias_kernel(%arg0: i32, %arg1: i32, %arg2: i32, %arg3: memref<128x256xbf16, #tpu.memory_space<vmem>>, %arg4: memref<256x128xbf16, #tpu.memory_space<vmem>>, %arg5: memref<1x128xf32, #tpu.memory_space<vmem>>, %arg6: memref<128x128xf32, #tpu.memory_space<vmem>>) attributes {dimension_semantics = [#tpu.dimension_semantics<parallel>, #tpu.dimension_semantics<parallel>, #tpu.dimension_semantics<arbitrary>], iteration_bounds = array<i64: 1, 1, 1>, scalar_prefetch = 0 : i64, scratch_operands = 0 : i64, tpu.core_type = #tpu.core_type<tc>, window_params = [{transform_indices = @transform_0, window_bounds = array<i64: 128, 256>}, {transform_indices = @transform_1, window_bounds = array<i64: 256, 128>}, {transform_indices = @transform_2, window_bounds = array<i64: 1, 128>}, {transform_indices = @transform_3, window_bounds = array<i64: 128, 128>}]} {
    %c0_i32 = arith.constant 0 : i32
    %0 = arith.cmpi eq, %arg2, %c0_i32 : i32
    %1 = arith.extui %0 : i1 to i32
    %c0_i32_0 = arith.constant 0 : i32
    %2 = arith.cmpi ne, %1, %c0_i32_0 : i32
    scf.if %2 {
      %cst_10 = arith.constant 0.000000e+00 : f32
      %12 = vector.broadcast %cst_10 : f32 to vector<128x128xf32>
      %c0_11 = arith.constant 0 : index
      %c0_12 = arith.constant 0 : index
      %13 = vector.load %arg6[%c0_11, %c0_12] : memref<128x128xf32, #tpu.memory_space<vmem>>, vector<128x128xf32>
      tpu.vector_store %arg6[%c0_11, %c0_12], %12 {strides = array<i32>} : memref<128x128xf32, #tpu.memory_space<vmem>>, vector<128x128xf32>,
    } else {
    }
    %c0 = arith.constant 0 : index
    %c0_1 = arith.constant 0 : index
    %3 = vector.load %arg3[%c0, %c0_1] : memref<128x256xbf16, #tpu.memory_space<vmem>>, vector<128x256xbf16>
    %c0_2 = arith.constant 0 : index
    %c0_3 = arith.constant 0 : index
    %4 = vector.load %arg6[%c0_2, %c0_3] : memref<128x128xf32, #tpu.memory_space<vmem>>, vector<128x128xf32>
    %c0_4 = arith.constant 0 : index
    %c0_5 = arith.constant 0 : index
    %5 = vector.load %arg4[%c0_4, %c0_5] : memref<256x128xbf16, #tpu.memory_space<vmem>>, vector<256x128xbf16>
    %cst = arith.constant dense<0.000000e+00> : vector<128x128xf32>
    %6 = tpu.matmul %3, %5, %cst {dimension_numbers = #tpu.dot_dimension_numbers<[1], [0], [0], [1], [0, 0, 1, 1], [], []>} : vector<128x256xbf16>, vector<256x128xbf16>, vector<128x128xf32> -> vector<128x128xf32>
    %7 = arith.addf %4, %6 : vector<128x128xf32>
    %c0_6 = arith.constant 0 : index
    %c0_7 = arith.constant 0 : index
    %8 = vector.load %arg6[%c0_6, %c0_7] : memref<128x128xf32, #tpu.memory_space<vmem>>, vector<128x128xf32>
    tpu.vector_store %arg6[%c0_6, %c0_7], %7 {strides = array<i32>} : memref<128x128xf32, #tpu.memory_space<vmem>>, vector<128x128xf32>,
    %c0_i32_8 = arith.constant 0 : i32
    %9 = arith.cmpi eq, %arg2, %c0_i32_8 : i32
    %10 = arith.extui %9 : i1 to i32
    %c0_i32_9 = arith.constant 0 : i32
    %11 = arith.cmpi ne, %10, %c0_i32_9 : i32
    scf.if %11 {
      %c0_10 = arith.constant 0 : index
      %c0_11 = arith.constant 0 : index
      %12 = vector.load %arg6[%c0_10, %c0_11] : memref<128x128xf32, #tpu.memory_space<vmem>>, vector<128x128xf32>
      %c0_12 = arith.constant 0 : index
      %c0_13 = arith.constant 0 : index
      %13 = vector.load %arg5[%c0_12, %c0_13] : memref<1x128xf32, #tpu.memory_space<vmem>>, vector<1x128xf32>
      %14 = vector.broadcast %13 : vector<1x128xf32> to vector<128x128xf32>
      %15 = arith.addf %12, %14 : vector<128x128xf32>
      %c0_14 = arith.constant 0 : index
      %c0_15 = arith.constant 0 : index
      %16 = vector.load %arg6[%c0_14, %c0_15] : memref<128x128xf32, #tpu.memory_space<vmem>>, vector<128x128xf32>
      tpu.vector_store %arg6[%c0_14, %c0_15], %15 {strides = array<i32>} : memref<128x128xf32, #tpu.memory_space<vmem>>, vector<128x128xf32>,
    } else {
    }
    return
  }
  func.func @transform_0(%arg0: i32, %arg1: i32, %arg2: i32) -> (i32, i32) {
    %c0_i32 = arith.constant 0 : i32
    return %arg0, %arg2 : i32, i32
  }
  func.func @transform_1(%arg0: i32, %arg1: i32, %arg2: i32) -> (i32, i32) {
    %c0_i32 = arith.constant 0 : i32
    return %arg2, %arg1 : i32, i32
  }
  func.func @transform_2(%arg0: i32, %arg1: i32, %arg2: i32) -> (i32, i32) {
    %c0_i32 = arith.constant 0 : i32
    %c0_i32_0 = arith.constant 0 : i32
    return %c0_i32, %arg1 : i32, i32
  }
  func.func @transform_3(%arg0: i32, %arg1: i32, %arg2: i32) -> (i32, i32) {
    %c0_i32 = arith.constant 0 : i32
    return %arg0, %arg1 : i32, i32
  }
}

</mosaic_0001>

<llo_original>
// kernel: dlgan_forward.16
$region0: #{dlgan_forward.16}
  #allocation0 [shape = 'u32[]', space=smem, size = 0x4, offset = 0x4, fixed_abs, tag = 'smem constant byte address 0x4 - core index']
  #allocation1 [shape = 'u32[144,128]{1,0:T(1,128)}', space=vmem, size = 0x12000, scoped, tag = 'internal scratch']
  #allocation2 [shape = 'f32[128,128]{1,0:T(8,128)}', space=vmem, size = 0x10000, scoped, tag = 'scratch operand']
  %s0 = inlined_call_operand.vmem [shape: bf16[128,128], index: 0, kind: input, shape index: {}]
  %s1 = inlined_call_operand.vmem [shape: bf16[128,128], index: 1, kind: input, shape index: {}]
  %s2 = inlined_call_operand.vmem [shape: f32[1,128], index: 2, kind: input, shape index: {}]
  %s3 = inlined_call_operand.vmem [shape: bf16[128,128], index: 3, kind: output, shape index: {}]
  %s4 = sld [smem:[#allocation0]]
  $region30: #{dlgan_forward.16} parent=0
    _
  %s6 = ssub.s32 1, %s4
  %s7 = scalar_select 0, %s6, %s4
  // Predicated region
  $region2: #{dlgan_forward.16} parent=0 // pred_check
    _
  $region3: #{dlgan_forward.16} parent=0 // pred_check_branch
    %9 = sbr.rel (0) target = $region5
  $region4: #{dlgan_forward.16} parent=0 // pred_region
    _
  $region5: #{dlgan_forward.16} parent=0 // pred_fallthru
    _
  // Predicated region
  $region6: #{dlgan_forward.16} parent=0 // pred_check
    _
  $region7: #{dlgan_forward.16} parent=0 // pred_check_branch
    %11 = sbr.rel (0) target = $region9
  $region8: #{dlgan_forward.16} parent=0 // pred_region
    _
  $region9: #{dlgan_forward.16} parent=0 // pred_fallthru
    _
  // Predicated region
  $region10: #{dlgan_forward.16} parent=0 // pred_check
    _
  $region11: #{dlgan_forward.16} parent=0 // pred_check_branch
    %13 = sbr.rel (0) target = $region13
  $region12: #{dlgan_forward.16} parent=0 // pred_region
    _
  $region13: #{dlgan_forward.16} parent=0 // pred_fallthru
    _
  %p15 = scmp.eq.s32.totalorder 0, 0
  // Predicated region
  $region14: #{dlgan_forward.16} parent=0 // pred_check
    %p16 = pneg %p15
  $region15: #{dlgan_forward.16} parent=0 // pred_check_branch
    %18 = sbr.rel (%p16) target = $region17
  $region16: #{dlgan_forward.16} parent=0 // pred_region
    %19 = vst [vmem:[#allocation2] sm:$0xff] 0.0
    %20 = vst [vmem:[#allocation2 + $0x8] sm:$0xff] 0.0
    %21 = vst [vmem:[#allocation2 + $0x10] sm:$0xff] 0.0
    %22 = vst [vmem:[#allocation2 + $0x18] sm:$0xff] 0.0
    %23 = vst [vmem:[#allocation2 + $0x20] sm:$0xff] 0.0
    %24 = vst [vmem:[#allocation2 + $0x28] sm:$0xff] 0.0
    %25 = vst [vmem:[#allocation2 + $0x30] sm:$0xff] 0.0
    %26 = vst [vmem:[#allocation2 + $0x38] sm:$0xff] 0.0
    %27 = vst [vmem:[#allocation2 + $0x40] sm:$0xff] 0.0
    %28 = vst [vmem:[#allocation2 + $0x48] sm:$0xff] 0.0
    %29 = vst [vmem:[#allocation2 + $0x50] sm:$0xff] 0.0
    %30 = vst [vmem:[#allocation2 + $0x58] sm:$0xff] 0.0
    %31 = vst [vmem:[#allocation2 + $0x60] sm:$0xff] 0.0
    %32 = vst [vmem:[#allocation2 + $0x68] sm:$0xff] 0.0
    %33 = vst [vmem:[#allocation2 + $0x70] sm:$0xff] 0.0
    %34 = vst [vmem:[#allocation2 + $0x78] sm:$0xff] 0.0
  $region17: #{dlgan_forward.16} parent=0 // pred_fallthru
    _
  %v35 = vld [vmem:[%s0] sm:$0xf]
  %v36 = vld [vmem:[%s0 + $0x4] sm:$0xf]
  %v37 = vld [vmem:[%s0 + $0x8] sm:$0xf]
  %v38 = vld [vmem:[%s0 + $0xc] sm:$0xf]
  %v39 = vld [vmem:[%s0 + $0x10] sm:$0xf]
  %v40 = vld [vmem:[%s0 + $0x14] sm:$0xf]
  %v41 = vld [vmem:[%s0 + $0x18] sm:$0xf]
  %v42 = vld [vmem:[%s0 + $0x1c] sm:$0xf]
  %v43 = vld [vmem:[%s0 + $0x20] sm:$0xf]
  %v44 = vld [vmem:[%s0 + $0x24] sm:$0xf]
  %v45 = vld [vmem:[%s0 + $0x28] sm:$0xf]
  %v46 = vld [vmem:[%s0 + $0x2c] sm:$0xf]
  %v47 = vld [vmem:[%s0 + $0x30] sm:$0xf]
  %v48 = vld [vmem:[%s0 + $0x34] sm:$0xf]
  %v49 = vld [vmem:[%s0 + $0x38] sm:$0xf]
  %v50 = vld [vmem:[%s0 + $0x3c] sm:$0xf]
  %v51 = vld [vmem:[#allocation2] sm:$0xff]
  %v52 = vld [vmem:[#allocation2 + $0x8] sm:$0xff]
  %v53 = vld [vmem:[#allocation2 + $0x10] sm:$0xff]
  %v54 = vld [vmem:[#allocation2 + $0x18] sm:$0xff]
  %v55 = vld [vmem:[#allocation2 + $0x20] sm:$0xff]
  %v56 = vld [vmem:[#allocation2 + $0x28] sm:$0xff]
  %v57 = vld [vmem:[#allocation2 + $0x30] sm:$0xff]
  %v58 = vld [vmem:[#allocation2 + $0x38] sm:$0xff]
  %v59 = vld [vmem:[#allocation2 + $0x40] sm:$0xff]
  %v60 = vld [vmem:[#allocation2 + $0x48] sm:$0xff]
  %v61 = vld [vmem:[#allocation2 + $0x50] sm:$0xff]
  %v62 = vld [vmem:[#allocation2 + $0x58] sm:$0xff]
  %v63 = vld [vmem:[#allocation2 + $0x60] sm:$0xff]
  %v64 = vld [vmem:[#allocation2 + $0x68] sm:$0xff]
  %v65 = vld [vmem:[#allocation2 + $0x70] sm:$0xff]
  %v66 = vld [vmem:[#allocation2 + $0x78] sm:$0xff]
  %v67 = vld [vmem:[%s1] sm:$0xf]
  %v68 = vld [vmem:[%s1 + $0x4] sm:$0xf]
  %v69 = vld [vmem:[%s1 + $0x8] sm:$0xf]
  %v70 = vld [vmem:[%s1 + $0xc] sm:$0xf]
  %v71 = vld [vmem:[%s1 + $0x10] sm:$0xf]
  %v72 = vld [vmem:[%s1 + $0x14] sm:$0xf]
  %v73 = vld [vmem:[%s1 + $0x18] sm:$0xf]
  %v74 = vld [vmem:[%s1 + $0x1c] sm:$0xf]
  %v75 = vld [vmem:[%s1 + $0x20] sm:$0xf]
  %v76 = vld [vmem:[%s1 + $0x24] sm:$0xf]
  %v77 = vld [vmem:[%s1 + $0x28] sm:$0xf]
  %v78 = vld [vmem:[%s1 + $0x2c] sm:$0xf]
  %v79 = vld [vmem:[%s1 + $0x30] sm:$0xf]
  %v80 = vld [vmem:[%s1 + $0x34] sm:$0xf]
  %v81 = vld [vmem:[%s1 + $0x38] sm:$0xf]
  %v82 = vld [vmem:[%s1 + $0x3c] sm:$0xf]
  %v99 = vunpack.c.l.b16 %v35
  %v100 = vunpack.c.l.b16 %v36
  %v101 = vunpack.c.l.b16 %v37
  %v102 = vunpack.c.l.b16 %v38
  %v103 = vunpack.c.l.b16 %v39
  %v104 = vunpack.c.l.b16 %v40
  %v105 = vunpack.c.l.b16 %v41
  %v106 = vunpack.c.l.b16 %v42
  %v107 = vunpack.c.l.b16 %v43
  %v108 = vunpack.c.l.b16 %v44
  %v109 = vunpack.c.l.b16 %v45
  %v110 = vunpack.c.l.b16 %v46
  %v111 = vunpack.c.l.b16 %v47
  %v112 = vunpack.c.l.b16 %v48
  %v113 = vunpack.c.l.b16 %v49
  %v114 = vunpack.c.l.b16 %v50
  %v115 = vpack.c.b16 %v100, %v99
  %v116 = vpack.c.b16 %v102, %v101
  %v117 = vpack.c.b16 %v104, %v103
  %v118 = vpack.c.b16 %v106, %v105
  %v119 = vpack.c.b16 %v108, %v107
  %v120 = vpack.c.b16 %v110, %v109
  %v121 = vpack.c.b16 %v112, %v111
  %v122 = vpack.c.b16 %v114, %v113
  %v147 = vunpack.c.l.b16 %v67
  %v148 = vunpack.c.l.b16 %v68
  %v149 = vunpack.c.l.b16 %v69
  %v150 = vunpack.c.l.b16 %v70
  %v151 = vunpack.c.l.b16 %v71
  %v152 = vunpack.c.l.b16 %v72
  %v153 = vunpack.c.l.b16 %v73
  %v154 = vunpack.c.l.b16 %v74
  %v155 = vunpack.c.l.b16 %v75
  %v156 = vunpack.c.l.b16 %v76
  %v157 = vunpack.c.l.b16 %v77
  %v158 = vunpack.c.l.b16 %v78
  %v159 = vunpack.c.l.b16 %v79
  %v160 = vunpack.c.l.b16 %v80
  %v161 = vunpack.c.l.b16 %v81
  %v162 = vunpack.c.l.b16 %v82
  %v163 = vpack.c.b16 %v148, %v147
  %v164 = vpack.c.b16 %v150, %v149
  %v165 = vpack.c.b16 %v152, %v151
  %v166 = vpack.c.b16 %v154, %v153
  %v167 = vpack.c.b16 %v156, %v155
  %v168 = vpack.c.b16 %v158, %v157
  %v169 = vpack.c.b16 %v160, %v159
  %v170 = vpack.c.b16 %v162, %v161
  %179 = vmatprep.subr.bf16.mxu0 0
  %180 = vmatpush1.bf16.msra.mxu0 %v163
  %181 = vmatprep.subr.bf16.mxu0 0
  %182 = vmatpush1.bf16.msra.mxu0 %v164
  %183 = vmatprep.subr.bf16.mxu0 0
  %184 = vmatpush1.bf16.msra.mxu0 %v165
  %185 = vmatprep.subr.bf16.mxu0 0
  %186 = vmatpush1.bf16.msra.mxu0 %v166
  %187 = vmatprep.subr.bf16.mxu0 0
  %188 = vmatpush1.bf16.msra.mxu0 %v167
  %189 = vmatprep.subr.bf16.mxu0 0
  %190 = vmatpush1.bf16.msra.mxu0 %v168
  %191 = vmatprep.subr.bf16.mxu0 0
  %192 = vmatpush1.bf16.msra.mxu0 %v169
  %193 = vmatprep.subr.bf16.mxu0 0
  %194 = vmatpush1.bf16.msra.mxu0 %v170
  %195 = vmatprep.subr.bf16.mxu0 0
  %196 = vmatpush1.bf16.msra.mxu0 0
  %197 = vmatprep.subr.bf16.mxu0 0
  %198 = vmatpush1.bf16.msra.mxu0 0
  %199 = vmatprep.subr.bf16.mxu0 0
  %200 = vmatpush1.bf16.msra.mxu0 0
  %201 = vmatprep.subr.bf16.mxu0 0
  %202 = vmatpush1.bf16.msra.mxu0 0
  %203 = vmatprep.subr.bf16.mxu0 0
  %204 = vmatpush1.bf16.msra.mxu0 0
  %205 = vmatprep.subr.bf16.mxu0 0
  %206 = vmatpush1.bf16.msra.mxu0 0
  %207 = vmatprep.subr.bf16.mxu0 0
  %208 = vmatpush1.bf16.msra.mxu0 0
  %209 = vmatprep.subr.bf16.mxu0 0
  %210 = vmatpush1.bf16.msra.mxu0 0
  %211 = vmatprep.mubr.bf16.mxu0 0
  %212 = vmatmul.mubr.bf16.gmra.mrb[0].mxu0 %v115
  %v213 = vpop.f32.mrb[0].mxu0
  %v214 = vadd.f32 0.0, %v213
  %v215 = vpop.f32.mrb[0].mxu0
  %v216 = vpop.f32.mrb[0].mxu0
  %v217 = vadd.f32 0.0, %v216
  %v218 = vpop.f32.mrb[0].mxu0
  %219 = vmatprep.mubr.bf16.mxu0 0
  %220 = vmatmul.mubr.bf16.gmra.mrb[0].mxu0 %v116
  %v221 = vpop.f32.mrb[0].mxu0
  %v222 = vadd.f32 0.0, %v221
  %v223 = vpop.f32.mrb[0].mxu0
  %v224 = vpop.f32.mrb[0].mxu0
  %v225 = vadd.f32 0.0, %v224
  %v226 = vpop.f32.mrb[0].mxu0
  %227 = vmatprep.mubr.bf16.mxu0 0
  %228 = vmatmul.mubr.bf16.gmra.mrb[0].mxu0 %v117
  %v229 = vpop.f32.mrb[0].mxu0
  %v230 = vadd.f32 0.0, %v229
  %v231 = vpop.f32.mrb[0].mxu0
  %v232 = vpop.f32.mrb[0].mxu0
  %v233 = vadd.f32 0.0, %v232
  %v234 = vpop.f32.mrb[0].mxu0
  %235 = vmatprep.mubr.bf16.mxu0 0
  %236 = vmatmul.mubr.bf16.gmra.mrb[0].mxu0 %v118
  %v237 = vpop.f32.mrb[0].mxu0
  %v238 = vadd.f32 0.0, %v237
  %v239 = vpop.f32.mrb[0].mxu0
  %v240 = vpop.f32.mrb[0].mxu0
  %v241 = vadd.f32 0.0, %v240
  %v242 = vpop.f32.mrb[0].mxu0
  %243 = vmatprep.mubr.bf16.mxu0 0
  %244 = vmatmul.mubr.bf16.gmra.mrb[0].mxu0 %v119
  %v245 = vpop.f32.mrb[0].mxu0
  %v246 = vadd.f32 0.0, %v245
  %v247 = vpop.f32.mrb[0].mxu0
  %v248 = vpop.f32.mrb[0].mxu0
  %v249 = vadd.f32 0.0, %v248
  %v250 = vpop.f32.mrb[0].mxu0
  %251 = vmatprep.mubr.bf16.mxu0 0
  %252 = vmatmul.mubr.bf16.gmra.mrb[0].mxu0 %v120
  %v253 = vpop.f32.mrb[0].mxu0
  %v254 = vadd.f32 0.0, %v253
  %v255 = vpop.f32.mrb[0].mxu0
  %v256 = vpop.f32.mrb[0].mxu0
  %v257 = vadd.f32 0.0, %v256
  %v258 = vpop.f32.mrb[0].mxu0
  %259 = vmatprep.mubr.bf16.mxu0 0
  %260 = vmatmul.mubr.bf16.gmra.mrb[0].mxu0 %v121
  %v261 = vpop.f32.mrb[0].mxu0
  %v262 = vadd.f32 0.0, %v261
  %v263 = vpop.f32.mrb[0].mxu0
  %v264 = vpop.f32.mrb[0].mxu0
  %v265 = vadd.f32 0.0, %v264
  %v266 = vpop.f32.mrb[0].mxu0
  %267 = vmatprep.mubr.bf16.mxu0 0
  %268 = vmatmul.mubr.bf16.gmra.mrb[0].mxu0 %v122
  %v269 = vpop.f32.mrb[0].mxu0
  %v270 = vadd.f32 0.0, %v269
  %v271 = vpop.f32.mrb[0].mxu0
  %v272 = vpop.f32.mrb[0].mxu0
  %v273 = vadd.f32 0.0, %v272
  %v274 = vpop.f32.mrb[0].mxu0
  %275 = vdwg.mxu0
  %v276 = vadd.f32 %v51, %v214
  %v277 = vadd.f32 %v52, %v217
  %v278 = vadd.f32 %v53, %v222
  %v279 = vadd.f32 %v54, %v225
  %v280 = vadd.f32 %v55, %v230
  %v281 = vadd.f32 %v56, %v233
  %v282 = vadd.f32 %v57, %v238
  %v283 = vadd.f32 %v58, %v241
  %v284 = vadd.f32 %v59, %v246
  %v285 = vadd.f32 %v60, %v249
  %v286 = vadd.f32 %v61, %v254
  %v287 = vadd.f32 %v62, %v257
  %v288 = vadd.f32 %v63, %v262
  %v289 = vadd.f32 %v64, %v265
  %v290 = vadd.f32 %v65, %v270
  %v291 = vadd.f32 %v66, %v273
  %292 = vst [vmem:[#allocation2] sm:$0xff] %v276
  %293 = vst [vmem:[#allocation2 + $0x8] sm:$0xff] %v277
  %294 = vst [vmem:[#allocation2 + $0x10] sm:$0xff] %v278
  %295 = vst [vmem:[#allocation2 + $0x18] sm:$0xff] %v279
  %296 = vst [vmem:[#allocation2 + $0x20] sm:$0xff] %v280
  %297 = vst [vmem:[#allocation2 + $0x28] sm:$0xff] %v281
  %298 = vst [vmem:[#allocation2 + $0x30] sm:$0xff] %v282
  %299 = vst [vmem:[#allocation2 + $0x38] sm:$0xff] %v283
  %300 = vst [vmem:[#allocation2 + $0x40] sm:$0xff] %v284
  %301 = vst [vmem:[#allocation2 + $0x48] sm:$0xff] %v285
  %302 = vst [vmem:[#allocation2 + $0x50] sm:$0xff] %v286
  %303 = vst [vmem:[#allocation2 + $0x58] sm:$0xff] %v287
  %304 = vst [vmem:[#allocation2 + $0x60] sm:$0xff] %v288
  %305 = vst [vmem:[#allocation2 + $0x68] sm:$0xff] %v289
  %306 = vst [vmem:[#allocation2 + $0x70] sm:$0xff] %v290
  %307 = vst [vmem:[#allocation2 + $0x78] sm:$0xff] %v291
  // Predicated region
  $region18: #{dlgan_forward.16} parent=0 // pred_check
    %p308 = pneg %p15
  $region19: #{dlgan_forward.16} parent=0 // pred_check_branch
    %310 = sbr.rel (%p308) target = $region21
  $region20: #{dlgan_forward.16} parent=0 // pred_region
    %v311 = vld [vmem:[#allocation2] sm:$0xff]
    %v312 = vld [vmem:[#allocation2 + $0x8] sm:$0xff]
    %v313 = vld [vmem:[#allocation2 + $0x10] sm:$0xff]
    %v314 = vld [vmem:[#allocation2 + $0x18] sm:$0xff]
    %v315 = vld [vmem:[#allocation2 + $0x20] sm:$0xff]
    %v316 = vld [vmem:[#allocation2 + $0x28] sm:$0xff]
    %v317 = vld [vmem:[#allocation2 + $0x30] sm:$0xff]
    %v318 = vld [vmem:[#allocation2 + $0x38] sm:$0xff]
    %v319 = vld [vmem:[#allocation2 + $0x40] sm:$0xff]
    %v320 = vld [vmem:[#allocation2 + $0x48] sm:$0xff]
    %v321 = vld [vmem:[#allocation2 + $0x50] sm:$0xff]
    %v322 = vld [vmem:[#allocation2 + $0x58] sm:$0xff]
    %v323 = vld [vmem:[#allocation2 + $0x60] sm:$0xff]
    %v324 = vld [vmem:[#allocation2 + $0x68] sm:$0xff]
    %v325 = vld [vmem:[#allocation2 + $0x70] sm:$0xff]
    %v326 = vld [vmem:[#allocation2 + $0x78] sm:$0xff]
    %v327 = vld [vmem:[%s2] sm:$0x1]
    %v329 = vlaneseq
    %v330 = vshrl.u32 %v329, 7
    %v331 = vsub.s32 0, %v330
    %v332 = vrot.slane %v327, %v331
    %v334 = vadd.f32 %v311, %v332
    %v335 = vadd.f32 %v312, %v332
    %v336 = vadd.f32 %v313, %v332
    %v337 = vadd.f32 %v314, %v332
    %v338 = vadd.f32 %v315, %v332
    %v339 = vadd.f32 %v316, %v332
    %v340 = vadd.f32 %v317, %v332
    %v341 = vadd.f32 %v318, %v332
    %v342 = vadd.f32 %v319, %v332
    %v343 = vadd.f32 %v320, %v332
    %v344 = vadd.f32 %v321, %v332
    %v345 = vadd.f32 %v322, %v332
    %v346 = vadd.f32 %v323, %v332
    %v347 = vadd.f32 %v324, %v332
    %v348 = vadd.f32 %v325, %v332
    %v349 = vadd.f32 %v326, %v332
    %v350 = vmax.f32 %v334, 0.0
    %v351 = vmax.f32 %v335, 0.0
    %v352 = vmax.f32 %v336, 0.0
    %v353 = vmax.f32 %v337, 0.0
    %v354 = vmax.f32 %v338, 0.0
    %v355 = vmax.f32 %v339, 0.0
    %v356 = vmax.f32 %v340, 0.0
    %v357 = vmax.f32 %v341, 0.0
    %v358 = vmax.f32 %v342, 0.0
    %v359 = vmax.f32 %v343, 0.0
    %v360 = vmax.f32 %v344, 0.0
    %v361 = vmax.f32 %v345, 0.0
    %v362 = vmax.f32 %v346, 0.0
    %v363 = vmax.f32 %v347, 0.0
    %v364 = vmax.f32 %v348, 0.0
    %v365 = vmax.f32 %v349, 0.0
    %v366 = vpack.c.bf16 %v351, %v350
    %v367 = vpack.c.bf16 %v353, %v352
    %v368 = vpack.c.bf16 %v355, %v354
    %v369 = vpack.c.bf16 %v357, %v356
    %v370 = vpack.c.bf16 %v359, %v358
    %v371 = vpack.c.bf16 %v361, %v360
    %v372 = vpack.c.bf16 %v363, %v362
    %v373 = vpack.c.bf16 %v365, %v364
    %v382 = vunpack.c.l.b16 %v366
    %v383 = vunpack.c.h.b16 %v366
    %v384 = vunpack.c.l.b16 %v367
    %v385 = vunpack.c.h.b16 %v367
    %v386 = vunpack.c.l.b16 %v368
    %v387 = vunpack.c.h.b16 %v368
    %v388 = vunpack.c.l.b16 %v369
    %v389 = vunpack.c.h.b16 %v369
    %v390 = vunpack.c.l.b16 %v370
    %v391 = vunpack.c.h.b16 %v370
    %v392 = vunpack.c.l.b16 %v371
    %v393 = vunpack.c.h.b16 %v371
    %v394 = vunpack.c.l.b16 %v372
    %v395 = vunpack.c.h.b16 %v372
    %v396 = vunpack.c.l.b16 %v373
    %v397 = vunpack.c.h.b16 %v373
    %v398 = vpack.c.b16 %v382, %v382
    %v399 = vpack.c.b16 %v383, %v383
    %v400 = vpack.c.b16 %v384, %v384
    %v401 = vpack.c.b16 %v385, %v385
    %v402 = vpack.c.b16 %v386, %v386
    %v403 = vpack.c.b16 %v387, %v387
    %v404 = vpack.c.b16 %v388, %v388
    %v405 = vpack.c.b16 %v389, %v389
    %v406 = vpack.c.b16 %v390, %v390
    %v407 = vpack.c.b16 %v391, %v391
    %v408 = vpack.c.b16 %v392, %v392
    %v409 = vpack.c.b16 %v393, %v393
    %v410 = vpack.c.b16 %v394, %v394
    %v411 = vpack.c.b16 %v395, %v395
    %v412 = vpack.c.b16 %v396, %v396
    %v413 = vpack.c.b16 %v397, %v397
    %430 = vst [vmem:[%s3] sm:$0xf] %v398
    %431 = vst [vmem:[%s3 + $0x4] sm:$0xf] %v399
    %432 = vst [vmem:[%s3 + $0x8] sm:$0xf] %v400
    %433 = vst [vmem:[%s3 + $0xc] sm:$0xf] %v401
    %434 = vst [vmem:[%s3 + $0x10] sm:$0xf] %v402
    %435 = vst [vmem:[%s3 + $0x14] sm:$0xf] %v403
    %436 = vst [vmem:[%s3 + $0x18] sm:$0xf] %v404
    %437 = vst [vmem:[%s3 + $0x1c] sm:$0xf] %v405
    %438 = vst [vmem:[%s3 + $0x20] sm:$0xf] %v406
    %439 = vst [vmem:[%s3 + $0x24] sm:$0xf] %v407
    %440 = vst [vmem:[%s3 + $0x28] sm:$0xf] %v408
    %441 = vst [vmem:[%s3 + $0x2c] sm:$0xf] %v409
    %442 = vst [vmem:[%s3 + $0x30] sm:$0xf] %v410
    %443 = vst [vmem:[%s3 + $0x34] sm:$0xf] %v411
    %444 = vst [vmem:[%s3 + $0x38] sm:$0xf] %v412
    %445 = vst [vmem:[%s3 + $0x3c] sm:$0xf] %v413
  $region21: #{dlgan_forward.16} parent=0 // pred_fallthru
    _
  // Predicated region
  $region22: #{dlgan_forward.16} parent=0 // pred_check
    _
  $region23: #{dlgan_forward.16} parent=0 // pred_check_branch
    %447 = sbr.rel (0) target = $region25
  $region24: #{dlgan_forward.16} parent=0 // pred_region
    _
  $region25: #{dlgan_forward.16} parent=0 // pred_fallthru
    _
  // Predicated region
  $region26: #{dlgan_forward.16} parent=0 // pred_check
    _
  $region27: #{dlgan_forward.16} parent=0 // pred_check_branch
    %449 = sbr.rel (0) target = $region29
  $region28: #{dlgan_forward.16} parent=0 // pred_region
    _
  $region29: #{dlgan_forward.16} parent=0 // pred_fallthru
    _

// kernel: dlgan_forward.17
$region0: #{dlgan_forward.17}
  #allocation0 [shape = 'u32[]', space=smem, size = 0x4, offset = 0x4, fixed_abs, tag = 'smem constant byte address 0x4 - core index']
  #allocation1 [shape = 'u32[144,128]{1,0:T(1,128)}', space=vmem, size = 0x12000, scoped, tag = 'internal scratch']
  #allocation2 [shape = 'f32[32,128]{1,0:T(8,128)}', space=vmem, size = 0x4000, scoped, tag = 'scratch operand']
  %s0 = inlined_call_operand.vmem [shape: bf16[32,256], index: 0, kind: input, shape index: {}]
  %s1 = inlined_call_operand.vmem [shape: bf16[256,128], index: 1, kind: input, shape index: {}]
  %s2 = inlined_call_operand.vmem [shape: f32[1,128], index: 2, kind: input, shape index: {}]
  %s3 = inlined_call_operand.vmem [shape: bf16[32,128], index: 3, kind: output, shape index: {}]
  %s4 = sld [smem:[#allocation0]]
  $region30: #{dlgan_forward.17} parent=0
    _
  %s6 = ssub.s32 1, %s4
  %s7 = scalar_select 0, %s6, %s4
  // Predicated region
  $region2: #{dlgan_forward.17} parent=0 // pred_check
    _
  $region3: #{dlgan_forward.17} parent=0 // pred_check_branch
    %9 = sbr.rel (0) target = $region5
  $region4: #{dlgan_forward.17} parent=0 // pred_region
    _
  $region5: #{dlgan_forward.17} parent=0 // pred_fallthru
    _
  // Predicated region
  $region6: #{dlgan_forward.17} parent=0 // pred_check
    _
  $region7: #{dlgan_forward.17} parent=0 // pred_check_branch
    %11 = sbr.rel (0) target = $region9
  $region8: #{dlgan_forward.17} parent=0 // pred_region
    _
  $region9: #{dlgan_forward.17} parent=0 // pred_fallthru
    _
  // Predicated region
  $region10: #{dlgan_forward.17} parent=0 // pred_check
    _
  $region11: #{dlgan_forward.17} parent=0 // pred_check_branch
    %13 = sbr.rel (0) target = $region13
  $region12: #{dlgan_forward.17} parent=0 // pred_region
    _
  $region13: #{dlgan_forward.17} parent=0 // pred_fallthru
    _
  %p15 = scmp.eq.s32.totalorder 0, 0
  // Predicated region
  $region14: #{dlgan_forward.17} parent=0 // pred_check
    %p16 = pneg %p15
  $region15: #{dlgan_forward.17} parent=0 // pred_check_branch
    %18 = sbr.rel (%p16) target = $region17
  $region16: #{dlgan_forward.17} parent=0 // pred_region
    %19 = vst [vmem:[#allocation2] sm:$0xff] 0.0
    %20 = vst [vmem:[#allocation2 + $0x8] sm:$0xff] 0.0
    %21 = vst [vmem:[#allocation2 + $0x10] sm:$0xff] 0.0
    %22 = vst [vmem:[#allocation2 + $0x18] sm:$0xff] 0.0
  $region17: #{dlgan_forward.17} parent=0 // pred_fallthru
    _
  %v23 = vld [vmem:[%s0] sm:$0xff]
  %v24 = vld [vmem:[%s0 + $0x8] sm:$0xff]
  %v25 = vld [vmem:[%s0 + $0x10] sm:$0xff]
  %v26 = vld [vmem:[%s0 + $0x18] sm:$0xff]
  %v27 = vld [vmem:[#allocation2] sm:$0xff]
  %v28 = vld [vmem:[#allocation2 + $0x8] sm:$0xff]
  %v29 = vld [vmem:[#allocation2 + $0x10] sm:$0xff]
  %v30 = vld [vmem:[#allocation2 + $0x18] sm:$0xff]
  %v31 = vld [vmem:[%s1] sm:$0xf]
  %v32 = vld [vmem:[%s1 + $0x4] sm:$0xf]
  %v33 = vld [vmem:[%s1 + $0x8] sm:$0xf]
  %v34 = vld [vmem:[%s1 + $0xc] sm:$0xf]
  %v35 = vld [vmem:[%s1 + $0x10] sm:$0xf]
  %v36 = vld [vmem:[%s1 + $0x14] sm:$0xf]
  %v37 = vld [vmem:[%s1 + $0x18] sm:$0xf]
  %v38 = vld [vmem:[%s1 + $0x1c] sm:$0xf]
  %v39 = vld [vmem:[%s1 + $0x20] sm:$0xf]
  %v40 = vld [vmem:[%s1 + $0x24] sm:$0xf]
  %v41 = vld [vmem:[%s1 + $0x28] sm:$0xf]
  %v42 = vld [vmem:[%s1 + $0x2c] sm:$0xf]
  %v43 = vld [vmem:[%s1 + $0x30] sm:$0xf]
  %v44 = vld [vmem:[%s1 + $0x34] sm:$0xf]
  %v45 = vld [vmem:[%s1 + $0x38] sm:$0xf]
  %v46 = vld [vmem:[%s1 + $0x3c] sm:$0xf]
  %v47 = vld [vmem:[%s1 + $0x40] sm:$0xf]
  %v48 = vld [vmem:[%s1 + $0x44] sm:$0xf]
  %v49 = vld [vmem:[%s1 + $0x48] sm:$0xf]
  %v50 = vld [vmem:[%s1 + $0x4c] sm:$0xf]
  %v51 = vld [vmem:[%s1 + $0x50] sm:$0xf]
  %v52 = vld [vmem:[%s1 + $0x54] sm:$0xf]
  %v53 = vld [vmem:[%s1 + $0x58] sm:$0xf]
  %v54 = vld [vmem:[%s1 + $0x5c] sm:$0xf]
  %v55 = vld [vmem:[%s1 + $0x60] sm:$0xf]
  %v56 = vld [vmem:[%s1 + $0x64] sm:$0xf]
  %v57 = vld [vmem:[%s1 + $0x68] sm:$0xf]
  %v58 = vld [vmem:[%s1 + $0x6c] sm:$0xf]
  %v59 = vld [vmem:[%s1 + $0x70] sm:$0xf]
  %v60 = vld [vmem:[%s1 + $0x74] sm:$0xf]
  %v61 = vld [vmem:[%s1 + $0x78] sm:$0xf]
  %v62 = vld [vmem:[%s1 + $0x7c] sm:$0xf]
  %v67 = vunpack.c.l.b16 %v23
  %v68 = vunpack.c.h.b16 %v23
  %v69 = vunpack.c.l.b16 %v24
  %v70 = vunpack.c.h.b16 %v24
  %v71 = vunpack.c.l.b16 %v25
  %v72 = vunpack.c.h.b16 %v25
  %v73 = vunpack.c.l.b16 %v26
  %v74 = vunpack.c.h.b16 %v26
  %v75 = vpack.c.b16 %v69, %v67
  %v76 = vpack.c.b16 %v70, %v68
  %v77 = vpack.c.b16 %v73, %v71
  %v78 = vpack.c.b16 %v74, %v72
  %v115 = vunpack.c.l.b16 %v31
  %v116 = vunpack.c.l.b16 %v32
  %v117 = vunpack.c.l.b16 %v33
  %v118 = vunpack.c.l.b16 %v34
  %v119 = vunpack.c.l.b16 %v35
  %v120 = vunpack.c.l.b16 %v36
  %v121 = vunpack.c.l.b16 %v37
  %v122 = vunpack.c.l.b16 %v38
  %v123 = vunpack.c.l.b16 %v39
  %v124 = vunpack.c.l.b16 %v40
  %v125 = vunpack.c.l.b16 %v41
  %v126 = vunpack.c.l.b16 %v42
  %v127 = vunpack.c.l.b16 %v43
  %v128 = vunpack.c.l.b16 %v44
  %v129 = vunpack.c.l.b16 %v45
  %v130 = vunpack.c.l.b16 %v46
  %v131 = vunpack.c.l.b16 %v47
  %v132 = vunpack.c.l.b16 %v48
  %v133 = vunpack.c.l.b16 %v49
  %v134 = vunpack.c.l.b16 %v50
  %v135 = vunpack.c.l.b16 %v51
  %v136 = vunpack.c.l.b16 %v52
  %v137 = vunpack.c.l.b16 %v53
  %v138 = vunpack.c.l.b16 %v54
  %v139 = vunpack.c.l.b16 %v55
  %v140 = vunpack.c.l.b16 %v56
  %v141 = vunpack.c.l.b16 %v57
  %v142 = vunpack.c.l.b16 %v58
  %v143 = vunpack.c.l.b16 %v59
  %v144 = vunpack.c.l.b16 %v60
  %v145 = vunpack.c.l.b16 %v61
  %v146 = vunpack.c.l.b16 %v62
  %v147 = vpack.c.b16 %v116, %v115
  %v148 = vpack.c.b16 %v118, %v117
  %v149 = vpack.c.b16 %v120, %v119
  %v150 = vpack.c.b16 %v122, %v121
  %v151 = vpack.c.b16 %v124, %v123
  %v152 = vpack.c.b16 %v126, %v125
  %v153 = vpack.c.b16 %v128, %v127
  %v154 = vpack.c.b16 %v130, %v129
  %v155 = vpack.c.b16 %v132, %v131
  %v156 = vpack.c.b16 %v134, %v133
  %v157 = vpack.c.b16 %v136, %v135
  %v158 = vpack.c.b16 %v138, %v137
  %v159 = vpack.c.b16 %v140, %v139
  %v160 = vpack.c.b16 %v142, %v141
  %v161 = vpack.c.b16 %v144, %v143
  %v162 = vpack.c.b16 %v146, %v145
  %179 = vmatprep.subr.bf16.mxu0 0
  %180 = vmatpush1.bf16.msra.mxu0 %v147
  %181 = vmatprep.subr.bf16.mxu0 0
  %182 = vmatpush1.bf16.msra.mxu0 %v148
  %183 = vmatprep.subr.bf16.mxu0 0
  %184 = vmatpush1.bf16.msra.mxu0 %v149
  %185 = vmatprep.subr.bf16.mxu0 0
  %186 = vmatpush1.bf16.msra.mxu0 %v150
  %187 = vmatprep.subr.bf16.mxu0 0
  %188 = vmatpush1.bf16.msra.mxu0 %v151
  %189 = vmatprep.subr.bf16.mxu0 0
  %190 = vmatpush1.bf16.msra.mxu0 %v152
  %191 = vmatprep.subr.bf16.mxu0 0
  %192 = vmatpush1.bf16.msra.mxu0 %v153
  %193 = vmatprep.subr.bf16.mxu0 0
  %194 = vmatpush1.bf16.msra.mxu0 %v154
  %195 = vmatprep.subr.bf16.mxu0 0
  %196 = vmatpush1.bf16.msra.mxu0 %v155
  %197 = vmatprep.subr.bf16.mxu0 0
  %198 = vmatpush1.bf16.msra.mxu0 %v156
  %199 = vmatprep.subr.bf16.mxu0 0
  %200 = vmatpush1.bf16.msra.mxu0 %v157
  %201 = vmatprep.subr.bf16.mxu0 0
  %202 = vmatpush1.bf16.msra.mxu0 %v158
  %203 = vmatprep.subr.bf16.mxu0 0
  %204 = vmatpush1.bf16.msra.mxu0 %v159
  %205 = vmatprep.subr.bf16.mxu0 0
  %206 = vmatpush1.bf16.msra.mxu0 %v160
  %207 = vmatprep.subr.bf16.mxu0 0
  %208 = vmatpush1.bf16.msra.mxu0 %v161
  %209 = vmatprep.subr.bf16.mxu0 0
  %210 = vmatpush1.bf16.msra.mxu0 %v162
  %211 = vmatprep.mubr.bf16.mxu0 %v76
  %212 = vmatmul.mubr.bf16.gmra.mrb[0].mxu0 %v75
  %v213 = vpop.f32.mrb[0].mxu0
  %v214 = vadd.f32 0.0, %v213
  %v215 = vpop.f32.mrb[0].mxu0
  %v216 = vpop.f32.mrb[0].mxu0
  %v217 = vadd.f32 0.0, %v216
  %v218 = vpop.f32.mrb[0].mxu0
  %219 = vmatprep.mubr.bf16.mxu0 %v78
  %220 = vmatmul.mubr.bf16.gmra.mrb[0].mxu0 %v77
  %v221 = vpop.f32.mrb[0].mxu0
  %v222 = vadd.f32 0.0, %v221
  %v223 = vpop.f32.mrb[0].mxu0
  %v224 = vpop.f32.mrb[0].mxu0
  %v225 = vadd.f32 0.0, %v224
  %v226 = vpop.f32.mrb[0].mxu0
  %227 = vdwg.mxu0
  %v228 = vadd.f32 %v27, %v214
  %v229 = vadd.f32 %v28, %v217
  %v230 = vadd.f32 %v29, %v222
  %v231 = vadd.f32 %v30, %v225
  %232 = vst [vmem:[#allocation2] sm:$0xff] %v228
  %233 = vst [vmem:[#allocation2 + $0x8] sm:$0xff] %v229
  %234 = vst [vmem:[#allocation2 + $0x10] sm:$0xff] %v230
  %235 = vst [vmem:[#allocation2 + $0x18] sm:$0xff] %v231
  // Predicated region
  $region18: #{dlgan_forward.17} parent=0 // pred_check
    %p236 = pneg %p15
  $region19: #{dlgan_forward.17} parent=0 // pred_check_branch
    %238 = sbr.rel (%p236) target = $region21
  $region20: #{dlgan_forward.17} parent=0 // pred_region
    %v239 = vld [vmem:[#allocation2] sm:$0xff]
    %v240 = vld [vmem:[#allocation2 + $0x8] sm:$0xff]
    %v241 = vld [vmem:[#allocation2 + $0x10] sm:$0xff]
    %v242 = vld [vmem:[#allocation2 + $0x18] sm:$0xff]
    %v243 = vld [vmem:[%s2] sm:$0x1]
    %v245 = vlaneseq
    %v246 = vshrl.u32 %v245, 7
    %v247 = vsub.s32 0, %v246
    %v248 = vrot.slane %v243, %v247
    %v250 = vadd.f32 %v239, %v248
    %v251 = vadd.f32 %v240, %v248
    %v252 = vadd.f32 %v241, %v248
    %v253 = vadd.f32 %v242, %v248
    %v254 = vmax.f32 %v250, 0.0
    %v255 = vmax.f32 %v251, 0.0
    %v256 = vmax.f32 %v252, 0.0
    %v257 = vmax.f32 %v253, 0.0
    %v258 = vpack.c.bf16 %v255, %v254
    %v259 = vpack.c.bf16 %v257, %v256
    %v262 = vunpack.c.l.b16 %v258
    %v263 = vunpack.c.h.b16 %v258
    %v264 = vunpack.c.l.b16 %v259
    %v265 = vunpack.c.h.b16 %v259
    %v266 = vpack.c.b16 %v262, %v262
    %v267 = vpack.c.b16 %v263, %v263
    %v268 = vpack.c.b16 %v264, %v264
    %v269 = vpack.c.b16 %v265, %v265
    %274 = vst [vmem:[%s3] sm:$0xf] %v266
    %275 = vst [vmem:[%s3 + $0x4] sm:$0xf] %v267
    %276 = vst [vmem:[%s3 + $0x8] sm:$0xf] %v268
    %277 = vst [vmem:[%s3 + $0xc] sm:$0xf] %v269
  $region21: #{dlgan_forward.17} parent=0 // pred_fallthru
    _
  // Predicated region
  $region22: #{dlgan_forward.17} parent=0 // pred_check
    _
  $region23: #{dlgan_forward.17} parent=0 // pred_check_branch
    %279 = sbr.rel (0) target = $region25
  $region24: #{dlgan_forward.17} parent=0 // pred_region
    _
  $region25: #{dlgan_forward.17} parent=0 // pred_fallthru
    _
  // Predicated region
  $region26: #{dlgan_forward.17} parent=0 // pred_check
    _
  $region27: #{dlgan_forward.17} parent=0 // pred_check_branch
    %281 = sbr.rel (0) target = $region29
  $region28: #{dlgan_forward.17} parent=0 // pred_region
    _
  $region29: #{dlgan_forward.17} parent=0 // pred_fallthru
    _

// kernel: dlgan_forward.19
$region0: #{dlgan_forward.19}
  #allocation0 [shape = 'u32[]', space=smem, size = 0x4, offset = 0x4, fixed_abs, tag = 'smem constant byte address 0x4 - core index']
  #allocation1 [shape = 'u32[144,128]{1,0:T(1,128)}', space=vmem, size = 0x12000, scoped, tag = 'internal scratch']
  #allocation2 [shape = 'f32[32,128]{1,0:T(8,128)}', space=vmem, size = 0x4000, scoped, tag = 'scratch operand']
  %s0 = inlined_call_operand.vmem [shape: bf16[32,384], index: 0, kind: input, shape index: {}]
  %s1 = inlined_call_operand.vmem [shape: bf16[384,128], index: 1, kind: input, shape index: {}]
  %s2 = inlined_call_operand.vmem [shape: f32[1,128], index: 2, kind: input, shape index: {}]
  %s3 = inlined_call_operand.vmem [shape: bf16[32,128], index: 3, kind: output, shape index: {}]
  %s4 = sld [smem:[#allocation0]]
  $region30: #{dlgan_forward.19} parent=0
    _
  %s6 = ssub.s32 1, %s4
  %s7 = scalar_select 0, %s6, %s4
  // Predicated region
  $region2: #{dlgan_forward.19} parent=0 // pred_check
    _
  $region3: #{dlgan_forward.19} parent=0 // pred_check_branch
    %9 = sbr.rel (0) target = $region5
  $region4: #{dlgan_forward.19} parent=0 // pred_region
    _
  $region5: #{dlgan_forward.19} parent=0 // pred_fallthru
    _
  // Predicated region
  $region6: #{dlgan_forward.19} parent=0 // pred_check
    _
  $region7: #{dlgan_forward.19} parent=0 // pred_check_branch
    %11 = sbr.rel (0) target = $region9
  $region8: #{dlgan_forward.19} parent=0 // pred_region
    _
  $region9: #{dlgan_forward.19} parent=0 // pred_fallthru
    _
  // Predicated region
  $region10: #{dlgan_forward.19} parent=0 // pred_check
    _
  $region11: #{dlgan_forward.19} parent=0 // pred_check_branch
    %13 = sbr.rel (0) target = $region13
  $region12: #{dlgan_forward.19} parent=0 // pred_region
    _
  $region13: #{dlgan_forward.19} parent=0 // pred_fallthru
    _
  %p15 = scmp.eq.s32.totalorder 0, 0
  // Predicated region
  $region14: #{dlgan_forward.19} parent=0 // pred_check
    %p16 = pneg %p15
  $region15: #{dlgan_forward.19} parent=0 // pred_check_branch
    %18 = sbr.rel (%p16) target = $region17
  $region16: #{dlgan_forward.19} parent=0 // pred_region
    %19 = vst [vmem:[#allocation2] sm:$0xff] 0.0
    %20 = vst [vmem:[#allocation2 + $0x8] sm:$0xff] 0.0
    %21 = vst [vmem:[#allocation2 + $0x10] sm:$0xff] 0.0
    %22 = vst [vmem:[#allocation2 + $0x18] sm:$0xff] 0.0
  $region17: #{dlgan_forward.19} parent=0 // pred_fallthru
    _
  %v23 = vld [vmem:[%s0] sm:$0xff]
  %v24 = vld [vmem:[%s0 + $0x8] sm:$0xf]
  %v25 = vld [vmem:[%s0 + $0xc] sm:$0xff]
  %v26 = vld [vmem:[%s0 + $0x14] sm:$0xf]
  %v27 = vld [vmem:[%s0 + $0x18] sm:$0xff]
  %v28 = vld [vmem:[%s0 + $0x20] sm:$0xf]
  %v29 = vld [vmem:[%s0 + $0x24] sm:$0xff]
  %v30 = vld [vmem:[%s0 + $0x2c] sm:$0xf]
  %v31 = vmax.bf16 %v23, 0
  %v32 = vmax.bf16 %v24, 0
  %v33 = vmax.bf16 %v25, 0
  %v34 = vmax.bf16 %v26, 0
  %v35 = vmax.bf16 %v27, 0
  %v36 = vmax.bf16 %v28, 0
  %v37 = vmax.bf16 %v29, 0
  %v38 = vmax.bf16 %v30, 0
  %v39 = vld [vmem:[#allocation2] sm:$0xff]
  %v40 = vld [vmem:[#allocation2 + $0x8] sm:$0xff]
  %v41 = vld [vmem:[#allocation2 + $0x10] sm:$0xff]
  %v42 = vld [vmem:[#allocation2 + $0x18] sm:$0xff]
  %v43 = vld [vmem:[%s1] sm:$0xf]
  %v44 = vld [vmem:[%s1 + $0x4] sm:$0xf]
  %v45 = vld [vmem:[%s1 + $0x8] sm:$0xf]
  %v46 = vld [vmem:[%s1 + $0xc] sm:$0xf]
  %v47 = vld [vmem:[%s1 + $0x10] sm:$0xf]
  %v48 = vld [vmem:[%s1 + $0x14] sm:$0xf]
  %v49 = vld [vmem:[%s1 + $0x18] sm:$0xf]
  %v50 = vld [vmem:[%s1 + $0x1c] sm:$0xf]
  %v51 = vld [vmem:[%s1 + $0x20] sm:$0xf]
  %v52 = vld [vmem:[%s1 + $0x24] sm:$0xf]
  %v53 = vld [vmem:[%s1 + $0x28] sm:$0xf]
  %v54 = vld [vmem:[%s1 + $0x2c] sm:$0xf]
  %v55 = vld [vmem:[%s1 + $0x30] sm:$0xf]
  %v56 = vld [vmem:[%s1 + $0x34] sm:$0xf]
  %v57 = vld [vmem:[%s1 + $0x38] sm:$0xf]
  %v58 = vld [vmem:[%s1 + $0x3c] sm:$0xf]
  %v59 = vld [vmem:[%s1 + $0x40] sm:$0xf]
  %v60 = vld [vmem:[%s1 + $0x44] sm:$0xf]
  %v61 = vld [vmem:[%s1 + $0x48] sm:$0xf]
  %v62 = vld [vmem:[%s1 + $0x4c] sm:$0xf]
  %v63 = vld [vmem:[%s1 + $0x50] sm:$0xf]
  %v64 = vld [vmem:[%s1 + $0x54] sm:$0xf]
  %v65 = vld [vmem:[%s1 + $0x58] sm:$0xf]
  %v66 = vld [vmem:[%s1 + $0x5c] sm:$0xf]
  %v67 = vld [vmem:[%s1 + $0x60] sm:$0xf]
  %v68 = vld [vmem:[%s1 + $0x64] sm:$0xf]
  %v69 = vld [vmem:[%s1 + $0x68] sm:$0xf]
  %v70 = vld [vmem:[%s1 + $0x6c] sm:$0xf]
  %v71 = vld [vmem:[%s1 + $0x70] sm:$0xf]
  %v72 = vld [vmem:[%s1 + $0x74] sm:$0xf]
  %v73 = vld [vmem:[%s1 + $0x78] sm:$0xf]
  %v74 = vld [vmem:[%s1 + $0x7c] sm:$0xf]
  %v75 = vld [vmem:[%s1 + $0x80] sm:$0xf]
  %v76 = vld [vmem:[%s1 + $0x84] sm:$0xf]
  %v77 = vld [vmem:[%s1 + $0x88] sm:$0xf]
  %v78 = vld [vmem:[%s1 + $0x8c] sm:$0xf]
  %v79 = vld [vmem:[%s1 + $0x90] sm:$0xf]
  %v80 = vld [vmem:[%s1 + $0x94] sm:$0xf]
  %v81 = vld [vmem:[%s1 + $0x98] sm:$0xf]
  %v82 = vld [vmem:[%s1 + $0x9c] sm:$0xf]
  %v83 = vld [vmem:[%s1 + $0xa0] sm:$0xf]
  %v84 = vld [vmem:[%s1 + $0xa4] sm:$0xf]
  %v85 = vld [vmem:[%s1 + $0xa8] sm:$0xf]
  %v86 = vld [vmem:[%s1 + $0xac] sm:$0xf]
  %v87 = vld [vmem:[%s1 + $0xb0] sm:$0xf]
  %v88 = vld [vmem:[%s1 + $0xb4] sm:$0xf]
  %v89 = vld [vmem:[%s1 + $0xb8] sm:$0xf]
  %v90 = vld [vmem:[%s1 + $0xbc] sm:$0xf]
  %v99 = vunpack.c.l.b16 %v31
  %v100 = vunpack.c.h.b16 %v31
  %v101 = vunpack.c.l.b16 %v32
  %v102 = vunpack.c.l.b16 %v33
  %v103 = vunpack.c.h.b16 %v33
  %v104 = vunpack.c.l.b16 %v34
  %v105 = vunpack.c.l.b16 %v35
  %v106 = vunpack.c.h.b16 %v35
  %v107 = vunpack.c.l.b16 %v36
  %v108 = vunpack.c.l.b16 %v37
  %v109 = vunpack.c.h.b16 %v37
  %v110 = vunpack.c.l.b16 %v38
  %v111 = vpack.c.b16 %v102, %v99
  %v112 = vpack.c.b16 %v103, %v100
  %v113 = vpack.c.b16 %v104, %v101
  %v114 = vpack.c.b16 %v108, %v105
  %v115 = vpack.c.b16 %v109, %v106
  %v116 = vpack.c.b16 %v110, %v107
  %v171 = vunpack.c.l.b16 %v43
  %v172 = vunpack.c.l.b16 %v44
  %v173 = vunpack.c.l.b16 %v45
  %v174 = vunpack.c.l.b16 %v46
  %v175 = vunpack.c.l.b16 %v47
  %v176 = vunpack.c.l.b16 %v48
  %v177 = vunpack.c.l.b16 %v49
  %v178 = vunpack.c.l.b16 %v50
  %v179 = vunpack.c.l.b16 %v51
  %v180 = vunpack.c.l.b16 %v52
  %v181 = vunpack.c.l.b16 %v53
  %v182 = vunpack.c.l.b16 %v54
  %v183 = vunpack.c.l.b16 %v55
  %v184 = vunpack.c.l.b16 %v56
  %v185 = vunpack.c.l.b16 %v57
  %v186 = vunpack.c.l.b16 %v58
  %v187 = vunpack.c.l.b16 %v59
  %v188 = vunpack.c.l.b16 %v60
  %v189 = vunpack.c.l.b16 %v61
  %v190 = vunpack.c.l.b16 %v62
  %v191 = vunpack.c.l.b16 %v63
  %v192 = vunpack.c.l.b16 %v64
  %v193 = vunpack.c.l.b16 %v65
  %v194 = vunpack.c.l.b16 %v66
  %v195 = vunpack.c.l.b16 %v67
  %v196 = vunpack.c.l.b16 %v68
  %v197 = vunpack.c.l.b16 %v69
  %v198 = vunpack.c.l.b16 %v70
  %v199 = vunpack.c.l.b16 %v71
  %v200 = vunpack.c.l.b16 %v72
  %v201 = vunpack.c.l.b16 %v73
  %v202 = vunpack.c.l.b16 %v74
  %v203 = vunpack.c.l.b16 %v75
  %v204 = vunpack.c.l.b16 %v76
  %v205 = vunpack.c.l.b16 %v77
  %v206 = vunpack.c.l.b16 %v78
  %v207 = vunpack.c.l.b16 %v79
  %v208 = vunpack.c.l.b16 %v80
  %v209 = vunpack.c.l.b16 %v81
  %v210 = vunpack.c.l.b16 %v82
  %v211 = vunpack.c.l.b16 %v83
  %v212 = vunpack.c.l.b16 %v84
  %v213 = vunpack.c.l.b16 %v85
  %v214 = vunpack.c.l.b16 %v86
  %v215 = vunpack.c.l.b16 %v87
  %v216 = vunpack.c.l.b16 %v88
  %v217 = vunpack.c.l.b16 %v89
  %v218 = vunpack.c.l.b16 %v90
  %v219 = vpack.c.b16 %v172, %v171
  %v220 = vpack.c.b16 %v174, %v173
  %v221 = vpack.c.b16 %v176, %v175
  %v222 = vpack.c.b16 %v178, %v177
  %v223 = vpack.c.b16 %v180, %v179
  %v224 = vpack.c.b16 %v182, %v181
  %v225 = vpack.c.b16 %v184, %v183
  %v226 = vpack.c.b16 %v186, %v185
  %v227 = vpack.c.b16 %v188, %v187
  %v228 = vpack.c.b16 %v190, %v189
  %v229 = vpack.c.b16 %v192, %v191
  %v230 = vpack.c.b16 %v194, %v193
  %v231 = vpack.c.b16 %v196, %v195
  %v232 = vpack.c.b16 %v198, %v197
  %v233 = vpack.c.b16 %v200, %v199
  %v234 = vpack.c.b16 %v202, %v201
  %v235 = vpack.c.b16 %v204, %v203
  %v236 = vpack.c.b16 %v206, %v205
  %v237 = vpack.c.b16 %v208, %v207
  %v238 = vpack.c.b16 %v210, %v209
  %v239 = vpack.c.b16 %v212, %v211
  %v240 = vpack.c.b16 %v214, %v213
  %v241 = vpack.c.b16 %v216, %v215
  %v242 = vpack.c.b16 %v218, %v217
  %267 = vmatprep.subr.bf16.mxu0 0
  %268 = vmatpush1.bf16.msra.mxu0 %v219
  %269 = vmatprep.subr.bf16.mxu0 0
  %270 = vmatpush1.bf16.msra.mxu0 %v220
  %271 = vmatprep.subr.bf16.mxu0 0
  %272 = vmatpush1.bf16.msra.mxu0 %v221
  %273 = vmatprep.subr.bf16.mxu0 0
  %274 = vmatpush1.bf16.msra.mxu0 %v222
  %275 = vmatprep.subr.bf16.mxu0 0
  %276 = vmatpush1.bf16.msra.mxu0 %v223
  %277 = vmatprep.subr.bf16.mxu0 0
  %278 = vmatpush1.bf16.msra.mxu0 %v224
  %279 = vmatprep.subr.bf16.mxu0 0
  %280 = vmatpush1.bf16.msra.mxu0 %v225
  %281 = vmatprep.subr.bf16.mxu0 0
  %282 = vmatpush1.bf16.msra.mxu0 %v226
  %283 = vmatprep.subr.bf16.mxu0 0
  %284 = vmatpush1.bf16.msra.mxu0 %v227
  %285 = vmatprep.subr.bf16.mxu0 0
  %286 = vmatpush1.bf16.msra.mxu0 %v228
  %287 = vmatprep.subr.bf16.mxu0 0
  %288 = vmatpush1.bf16.msra.mxu0 %v229
  %289 = vmatprep.subr.bf16.mxu0 0
  %290 = vmatpush1.bf16.msra.mxu0 %v230
  %291 = vmatprep.subr.bf16.mxu0 0
  %292 = vmatpush1.bf16.msra.mxu0 %v231
  %293 = vmatprep.subr.bf16.mxu0 0
  %294 = vmatpush1.bf16.msra.mxu0 %v232
  %295 = vmatprep.subr.bf16.mxu0 0
  %296 = vmatpush1.bf16.msra.mxu0 %v233
  %297 = vmatprep.subr.bf16.mxu0 0
  %298 = vmatpush1.bf16.msra.mxu0 %v234
  %299 = vmatprep.mubr.bf16.mxu0 %v112
  %300 = vmatmul.mubr.bf16.gmra.mrb[0].mxu0 %v111
  %v301 = vpop.f32.mrb[0].mxu0
  %v302 = vadd.f32 0.0, %v301
  %v303 = vpop.f32.mrb[0].mxu0
  %v304 = vpop.f32.mrb[0].mxu0
  %v305 = vadd.f32 0.0, %v304
  %v306 = vpop.f32.mrb[0].mxu0
  %307 = vmatprep.mubr.bf16.mxu0 %v115
  %308 = vmatmul.mubr.bf16.gmra.mrb[0].mxu0 %v114
  %v309 = vpop.f32.mrb[0].mxu0
  %v310 = vadd.f32 0.0, %v309
  %v311 = vpop.f32.mrb[0].mxu0
  %v312 = vpop.f32.mrb[0].mxu0
  %v313 = vadd.f32 0.0, %v312
  %v314 = vpop.f32.mrb[0].mxu0
  %315 = vdwg.mxu0
  %316 = vmatprep.subr.bf16.mxu0 0
  %317 = vmatpush1.bf16.msra.mxu0 %v235
  %318 = vmatprep.subr.bf16.mxu0 0
  %319 = vmatpush1.bf16.msra.mxu0 %v236
  %320 = vmatprep.subr.bf16.mxu0 0
  %321 = vmatpush1.bf16.msra.mxu0 %v237
  %322 = vmatprep.subr.bf16.mxu0 0
  %323 = vmatpush1.bf16.msra.mxu0 %v238
  %324 = vmatprep.subr.bf16.mxu0 0
  %325 = vmatpush1.bf16.msra.mxu0 %v239
  %326 = vmatprep.subr.bf16.mxu0 0
  %327 = vmatpush1.bf16.msra.mxu0 %v240
  %328 = vmatprep.subr.bf16.mxu0 0
  %329 = vmatpush1.bf16.msra.mxu0 %v241
  %330 = vmatprep.subr.bf16.mxu0 0
  %331 = vmatpush1.bf16.msra.mxu0 %v242
  %332 = vmatprep.subr.bf16.mxu0 0
  %333 = vmatpush1.bf16.msra.mxu0 0
  %334 = vmatprep.subr.bf16.mxu0 0
  %335 = vmatpush1.bf16.msra.mxu0 0
  %336 = vmatprep.subr.bf16.mxu0 0
  %337 = vmatpush1.bf16.msra.mxu0 0
  %338 = vmatprep.subr.bf16.mxu0 0
  %339 = vmatpush1.bf16.msra.mxu0 0
  %340 = vmatprep.subr.bf16.mxu0 0
  %341 = vmatpush1.bf16.msra.mxu0 0
  %342 = vmatprep.subr.bf16.mxu0 0
  %343 = vmatpush1.bf16.msra.mxu0 0
  %344 = vmatprep.subr.bf16.mxu0 0
  %345 = vmatpush1.bf16.msra.mxu0 0
  %346 = vmatprep.subr.bf16.mxu0 0
  %347 = vmatpush1.bf16.msra.mxu0 0
  %348 = vmatprep.mubr.bf16.mxu0 0
  %349 = vmatmul.mubr.bf16.gmra.mrb[0].mxu0 %v113
  %v350 = vpop.f32.mrb[0].mxu0
  %v351 = vadd.f32 %v302, %v350
  %v352 = vpop.f32.mrb[0].mxu0
  %v353 = vpop.f32.mrb[0].mxu0
  %v354 = vadd.f32 %v305, %v353
  %v355 = vpop.f32.mrb[0].mxu0
  %356 = vmatprep.mubr.bf16.mxu0 0
  %357 = vmatmul.mubr.bf16.gmra.mrb[0].mxu0 %v116
  %v358 = vpop.f32.mrb[0].mxu0
  %v359 = vadd.f32 %v310, %v358
  %v360 = vpop.f32.mrb[0].mxu0
  %v361 = vpop.f32.mrb[0].mxu0
  %v362 = vadd.f32 %v313, %v361
  %v363 = vpop.f32.mrb[0].mxu0
  %364 = vdwg.mxu0
  %v365 = vadd.f32 %v39, %v351
  %v366 = vadd.f32 %v40, %v354
  %v367 = vadd.f32 %v41, %v359
  %v368 = vadd.f32 %v42, %v362
  %369 = vst [vmem:[#allocation2] sm:$0xff] %v365
  %370 = vst [vmem:[#allocation2 + $0x8] sm:$0xff] %v366
  %371 = vst [vmem:[#allocation2 + $0x10] sm:$0xff] %v367
  %372 = vst [vmem:[#allocation2 + $0x18] sm:$0xff] %v368
  // Predicated region
  $region18: #{dlgan_forward.19} parent=0 // pred_check
    %p373 = pneg %p15
  $region19: #{dlgan_forward.19} parent=0 // pred_check_branch
    %375 = sbr.rel (%p373) target = $region21
  $region20: #{dlgan_forward.19} parent=0 // pred_region
    %v376 = vld [vmem:[#allocation2] sm:$0xff]
    %v377 = vld [vmem:[#allocation2 + $0x8] sm:$0xff]
    %v378 = vld [vmem:[#allocation2 + $0x10] sm:$0xff]
    %v379 = vld [vmem:[#allocation2 + $0x18] sm:$0xff]
    %v380 = vld [vmem:[%s2] sm:$0x1]
    %v382 = vlaneseq
    %v383 = vshrl.u32 %v382, 7
    %v384 = vsub.s32 0, %v383
    %v385 = vrot.slane %v380, %v384
    %v387 = vadd.f32 %v376, %v385
    %v388 = vadd.f32 %v377, %v385
    %v389 = vadd.f32 %v378, %v385
    %v390 = vadd.f32 %v379, %v385
    %v391 = vmax.f32 %v387, 0.0
    %v392 = vmax.f32 %v388, 0.0
    %v393 = vmax.f32 %v389, 0.0
    %v394 = vmax.f32 %v390, 0.0
    %v395 = vpack.c.bf16 %v392, %v391
    %v396 = vpack.c.bf16 %v394, %v393
    %v399 = vunpack.c.l.b16 %v395
    %v400 = vunpack.c.h.b16 %v395
    %v401 = vunpack.c.l.b16 %v396
    %v402 = vunpack.c.h.b16 %v396
    %v403 = vpack.c.b16 %v399, %v399
    %v404 = vpack.c.b16 %v400, %v400
    %v405 = vpack.c.b16 %v401, %v401
    %v406 = vpack.c.b16 %v402, %v402
    %411 = vst [vmem:[%s3] sm:$0xf] %v403
    %412 = vst [vmem:[%s3 + $0x4] sm:$0xf] %v404
    %413 = vst [vmem:[%s3 + $0x8] sm:$0xf] %v405
    %414 = vst [vmem:[%s3 + $0xc] sm:$0xf] %v406
  $region21: #{dlgan_forward.19} parent=0 // pred_fallthru
    _
  // Predicated region
  $region22: #{dlgan_forward.19} parent=0 // pred_check
    _
  $region23: #{dlgan_forward.19} parent=0 // pred_check_branch
    %416 = sbr.rel (0) target = $region25
  $region24: #{dlgan_forward.19} parent=0 // pred_region
    _
  $region25: #{dlgan_forward.19} parent=0 // pred_fallthru
    _
  // Predicated region
  $region26: #{dlgan_forward.19} parent=0 // pred_check
    _
  $region27: #{dlgan_forward.19} parent=0 // pred_check_branch
    %418 = sbr.rel (0) target = $region29
  $region28: #{dlgan_forward.19} parent=0 // pred_region
    _
  $region29: #{dlgan_forward.19} parent=0 // pred_fallthru
    _

// kernel: dlgan_forward.20
$region0: #{dlgan_forward.20}
  #allocation0 [shape = 'u32[]', space=smem, size = 0x4, offset = 0x4, fixed_abs, tag = 'smem constant byte address 0x4 - core index']
  #allocation1 [shape = 'u32[144,128]{1,0:T(1,128)}', space=vmem, size = 0x12000, scoped, tag = 'internal scratch']
  %s0 = inlined_call_operand.vmem [shape: bf16[32,128], index: 0, kind: input, shape index: {}]
  %s1 = inlined_call_operand.vmem [shape: bf16[128,128], index: 1, kind: input, shape index: {}]
  %s2 = inlined_call_operand.vmem [shape: f32[1,128], index: 2, kind: input, shape index: {}]
  %s3 = inlined_call_operand.vmem [shape: f32[32,128], index: 3, kind: input, shape index: {}]
  %s4 = inlined_call_operand.vmem [shape: f32[32,128], index: 4, kind: output, shape index: {}]
  %s5 = sld [smem:[#allocation0]]
  $region34: #{dlgan_forward.20} parent=0
    _
  %s7 = ssub.s32 1, %s5
  %s8 = scalar_select 0, %s7, %s5
  // Predicated region
  $region2: #{dlgan_forward.20} parent=0 // pred_check
    _
  $region3: #{dlgan_forward.20} parent=0 // pred_check_branch
    %10 = sbr.rel (0) target = $region5
  $region4: #{dlgan_forward.20} parent=0 // pred_region
    _
  $region5: #{dlgan_forward.20} parent=0 // pred_fallthru
    _
  // Predicated region
  $region6: #{dlgan_forward.20} parent=0 // pred_check
    _
  $region7: #{dlgan_forward.20} parent=0 // pred_check_branch
    %12 = sbr.rel (0) target = $region9
  $region8: #{dlgan_forward.20} parent=0 // pred_region
    _
  $region9: #{dlgan_forward.20} parent=0 // pred_fallthru
    _
  // Predicated region
  $region10: #{dlgan_forward.20} parent=0 // pred_check
    _
  $region11: #{dlgan_forward.20} parent=0 // pred_check_branch
    %14 = sbr.rel (0) target = $region13
  $region12: #{dlgan_forward.20} parent=0 // pred_region
    _
  $region13: #{dlgan_forward.20} parent=0 // pred_fallthru
    _
  // Predicated region
  $region14: #{dlgan_forward.20} parent=0 // pred_check
    _
  $region15: #{dlgan_forward.20} parent=0 // pred_check_branch
    %16 = sbr.rel (0) target = $region17
  $region16: #{dlgan_forward.20} parent=0 // pred_region
    _
  $region17: #{dlgan_forward.20} parent=0 // pred_fallthru
    _
  %p18 = scmp.eq.s32.totalorder 0, 0
  // Predicated region
  $region18: #{dlgan_forward.20} parent=0 // pred_check
    %p19 = pneg %p18
  $region19: #{dlgan_forward.20} parent=0 // pred_check_branch
    %21 = sbr.rel (%p19) target = $region21
  $region20: #{dlgan_forward.20} parent=0 // pred_region
    %22 = vst [vmem:[%s4] sm:$0xff] 0.0
    %23 = vst [vmem:[%s4 + $0x8] sm:$0xff] 0.0
    %24 = vst [vmem:[%s4 + $0x10] sm:$0xff] 0.0
    %25 = vst [vmem:[%s4 + $0x18] sm:$0xff] 0.0
  $region21: #{dlgan_forward.20} parent=0 // pred_fallthru
    _
  %v26 = vld [vmem:[%s0] sm:$0xf]
  %v27 = vld [vmem:[%s0 + $0x4] sm:$0xf]
  %v28 = vld [vmem:[%s0 + $0x8] sm:$0xf]
  %v29 = vld [vmem:[%s0 + $0xc] sm:$0xf]
  %v30 = vld [vmem:[%s4] sm:$0xff]
  %v31 = vld [vmem:[%s4 + $0x8] sm:$0xff]
  %v32 = vld [vmem:[%s4 + $0x10] sm:$0xff]
  %v33 = vld [vmem:[%s4 + $0x18] sm:$0xff]
  %v34 = vld [vmem:[%s1] sm:$0xf]
  %v35 = vld [vmem:[%s1 + $0x4] sm:$0xf]
  %v36 = vld [vmem:[%s1 + $0x8] sm:$0xf]
  %v37 = vld [vmem:[%s1 + $0xc] sm:$0xf]
  %v38 = vld [vmem:[%s1 + $0x10] sm:$0xf]
  %v39 = vld [vmem:[%s1 + $0x14] sm:$0xf]
  %v40 = vld [vmem:[%s1 + $0x18] sm:$0xf]
  %v41 = vld [vmem:[%s1 + $0x1c] sm:$0xf]
  %v42 = vld [vmem:[%s1 + $0x20] sm:$0xf]
  %v43 = vld [vmem:[%s1 + $0x24] sm:$0xf]
  %v44 = vld [vmem:[%s1 + $0x28] sm:$0xf]
  %v45 = vld [vmem:[%s1 + $0x2c] sm:$0xf]
  %v46 = vld [vmem:[%s1 + $0x30] sm:$0xf]
  %v47 = vld [vmem:[%s1 + $0x34] sm:$0xf]
  %v48 = vld [vmem:[%s1 + $0x38] sm:$0xf]
  %v49 = vld [vmem:[%s1 + $0x3c] sm:$0xf]
  %v54 = vunpack.c.l.b16 %v26
  %v55 = vunpack.c.l.b16 %v27
  %v56 = vunpack.c.l.b16 %v28
  %v57 = vunpack.c.l.b16 %v29
  %v58 = vpack.c.b16 %v55, %v54
  %v59 = vpack.c.b16 %v57, %v56
  %v78 = vunpack.c.l.b16 %v34
  %v79 = vunpack.c.l.b16 %v35
  %v80 = vunpack.c.l.b16 %v36
  %v81 = vunpack.c.l.b16 %v37
  %v82 = vunpack.c.l.b16 %v38
  %v83 = vunpack.c.l.b16 %v39
  %v84 = vunpack.c.l.b16 %v40
  %v85 = vunpack.c.l.b16 %v41
  %v86 = vunpack.c.l.b16 %v42
  %v87 = vunpack.c.l.b16 %v43
  %v88 = vunpack.c.l.b16 %v44
  %v89 = vunpack.c.l.b16 %v45
  %v90 = vunpack.c.l.b16 %v46
  %v91 = vunpack.c.l.b16 %v47
  %v92 = vunpack.c.l.b16 %v48
  %v93 = vunpack.c.l.b16 %v49
  %v94 = vpack.c.b16 %v79, %v78
  %v95 = vpack.c.b16 %v81, %v80
  %v96 = vpack.c.b16 %v83, %v82
  %v97 = vpack.c.b16 %v85, %v84
  %v98 = vpack.c.b16 %v87, %v86
  %v99 = vpack.c.b16 %v89, %v88
  %v100 = vpack.c.b16 %v91, %v90
  %v101 = vpack.c.b16 %v93, %v92
  %110 = vmatprep.subr.bf16.mxu0 0
  %111 = vmatpush1.bf16.msra.mxu0 %v94
  %112 = vmatprep.subr.bf16.mxu0 0
  %113 = vmatpush1.bf16.msra.mxu0 %v95
  %114 = vmatprep.subr.bf16.mxu0 0
  %115 = vmatpush1.bf16.msra.mxu0 %v96
  %116 = vmatprep.subr.bf16.mxu0 0
  %117 = vmatpush1.bf16.msra.mxu0 %v97
  %118 = vmatprep.subr.bf16.mxu0 0
  %119 = vmatpush1.bf16.msra.mxu0 %v98
  %120 = vmatprep.subr.bf16.mxu0 0
  %121 = vmatpush1.bf16.msra.mxu0 %v99
  %122 = vmatprep.subr.bf16.mxu0 0
  %123 = vmatpush1.bf16.msra.mxu0 %v100
  %124 = vmatprep.subr.bf16.mxu0 0
  %125 = vmatpush1.bf16.msra.mxu0 %v101
  %126 = vmatprep.subr.bf16.mxu0 0
  %127 = vmatpush1.bf16.msra.mxu0 0
  %128 = vmatprep.subr.bf16.mxu0 0
  %129 = vmatpush1.bf16.msra.mxu0 0
  %130 = vmatprep.subr.bf16.mxu0 0
  %131 = vmatpush1.bf16.msra.mxu0 0
  %132 = vmatprep.subr.bf16.mxu0 0
  %133 = vmatpush1.bf16.msra.mxu0 0
  %134 = vmatprep.subr.bf16.mxu0 0
  %135 = vmatpush1.bf16.msra.mxu0 0
  %136 = vmatprep.subr.bf16.mxu0 0
  %137 = vmatpush1.bf16.msra.mxu0 0
  %138 = vmatprep.subr.bf16.mxu0 0
  %139 = vmatpush1.bf16.msra.mxu0 0
  %140 = vmatprep.subr.bf16.mxu0 0
  %141 = vmatpush1.bf16.msra.mxu0 0
  %142 = vmatprep.mubr.bf16.mxu0 0
  %143 = vmatmul.mubr.bf16.gmra.mrb[0].mxu0 %v58
  %v144 = vpop.f32.mrb[0].mxu0
  %v145 = vadd.f32 0.0, %v144
  %v146 = vpop.f32.mrb[0].mxu0
  %v147 = vpop.f32.mrb[0].mxu0
  %v148 = vadd.f32 0.0, %v147
  %v149 = vpop.f32.mrb[0].mxu0
  %150 = vmatprep.mubr.bf16.mxu0 0
  %151 = vmatmul.mubr.bf16.gmra.mrb[0].mxu0 %v59
  %v152 = vpop.f32.mrb[0].mxu0
  %v153 = vadd.f32 0.0, %v152
  %v154 = vpop.f32.mrb[0].mxu0
  %v155 = vpop.f32.mrb[0].mxu0
  %v156 = vadd.f32 0.0, %v155
  %v157 = vpop.f32.mrb[0].mxu0
  %158 = vdwg.mxu0
  %v159 = vadd.f32 %v30, %v145
  %v160 = vadd.f32 %v31, %v148
  %v161 = vadd.f32 %v32, %v153
  %v162 = vadd.f32 %v33, %v156
  %163 = vst [vmem:[%s4] sm:$0xff] %v159
  %164 = vst [vmem:[%s4 + $0x8] sm:$0xff] %v160
  %165 = vst [vmem:[%s4 + $0x10] sm:$0xff] %v161
  %166 = vst [vmem:[%s4 + $0x18] sm:$0xff] %v162
  // Predicated region
  $region22: #{dlgan_forward.20} parent=0 // pred_check
    %p167 = pneg %p18
  $region23: #{dlgan_forward.20} parent=0 // pred_check_branch
    %169 = sbr.rel (%p167) target = $region25
  $region24: #{dlgan_forward.20} parent=0 // pred_region
    %v170 = vld [vmem:[%s4] sm:$0xff]
    %v171 = vld [vmem:[%s4 + $0x8] sm:$0xff]
    %v172 = vld [vmem:[%s4 + $0x10] sm:$0xff]
    %v173 = vld [vmem:[%s4 + $0x18] sm:$0xff]
    %v174 = vld [vmem:[%s2] sm:$0x1]
    %v176 = vlaneseq
    %v177 = vshrl.u32 %v176, 7
    %v178 = vsub.s32 0, %v177
    %v179 = vrot.slane %v174, %v178
    %v181 = vadd.f32 %v170, %v179
    %v182 = vadd.f32 %v171, %v179
    %v183 = vadd.f32 %v172, %v179
    %v184 = vadd.f32 %v173, %v179
    %v185 = vld [vmem:[%s3] sm:$0xff]
    %v186 = vld [vmem:[%s3 + $0x8] sm:$0xff]
    %v187 = vld [vmem:[%s3 + $0x10] sm:$0xff]
    %v188 = vld [vmem:[%s3 + $0x18] sm:$0xff]
    %v189 = vadd.f32 %v181, %v185
    %v190 = vadd.f32 %v182, %v186
    %v191 = vadd.f32 %v183, %v187
    %v192 = vadd.f32 %v184, %v188
    %193 = vst [vmem:[%s4] sm:$0xff] %v189
    %194 = vst [vmem:[%s4 + $0x8] sm:$0xff] %v190
    %195 = vst [vmem:[%s4 + $0x10] sm:$0xff] %v191
    %196 = vst [vmem:[%s4 + $0x18] sm:$0xff] %v192
  $region25: #{dlgan_forward.20} parent=0 // pred_fallthru
    _
  // Predicated region
  $region26: #{dlgan_forward.20} parent=0 // pred_check
    _
  $region27: #{dlgan_forward.20} parent=0 // pred_check_branch
    %198 = sbr.rel (0) target = $region29
  $region28: #{dlgan_forward.20} parent=0 // pred_region
    _
  $region29: #{dlgan_forward.20} parent=0 // pred_fallthru
    _
  // Predicated region
  $region30: #{dlgan_forward.20} parent=0 // pred_check
    _
  $region31: #{dlgan_forward.20} parent=0 // pred_check_branch
    %200 = sbr.rel (0) target = $region33
  $region32: #{dlgan_forward.20} parent=0 // pred_region
    _
  $region33: #{dlgan_forward.20} parent=0 // pred_fallthru
    _

// kernel: dlgan_forward.18
$region0: #{dlgan_forward.18}
  #allocation0 [shape = 'u32[]', space=smem, size = 0x4, offset = 0x4, fixed_abs, tag = 'smem constant byte address 0x4 - core index']
  #allocation1 [shape = 'u32[144,128]{1,0:T(1,128)}', space=vmem, size = 0x12000, scoped, tag = 'internal scratch']
  %s0 = inlined_call_operand.vmem [shape: bf16[32,384], index: 0, kind: input, shape index: {}]
  %s1 = inlined_call_operand.vmem [shape: bf16[384,128], index: 1, kind: input, shape index: {}]
  %s2 = inlined_call_operand.vmem [shape: f32[1,128], index: 2, kind: input, shape index: {}]
  %s3 = inlined_call_operand.vmem [shape: f32[32,128], index: 3, kind: output, shape index: {}]
  %s4 = sld [smem:[#allocation0]]
  $region30: #{dlgan_forward.18} parent=0
    _
  %s6 = ssub.s32 1, %s4
  %s7 = scalar_select 0, %s6, %s4
  // Predicated region
  $region2: #{dlgan_forward.18} parent=0 // pred_check
    _
  $region3: #{dlgan_forward.18} parent=0 // pred_check_branch
    %9 = sbr.rel (0) target = $region5
  $region4: #{dlgan_forward.18} parent=0 // pred_region
    _
  $region5: #{dlgan_forward.18} parent=0 // pred_fallthru
    _
  // Predicated region
  $region6: #{dlgan_forward.18} parent=0 // pred_check
    _
  $region7: #{dlgan_forward.18} parent=0 // pred_check_branch
    %11 = sbr.rel (0) target = $region9
  $region8: #{dlgan_forward.18} parent=0 // pred_region
    _
  $region9: #{dlgan_forward.18} parent=0 // pred_fallthru
    _
  // Predicated region
  $region10: #{dlgan_forward.18} parent=0 // pred_check
    _
  $region11: #{dlgan_forward.18} parent=0 // pred_check_branch
    %13 = sbr.rel (0) target = $region13
  $region12: #{dlgan_forward.18} parent=0 // pred_region
    _
  $region13: #{dlgan_forward.18} parent=0 // pred_fallthru
    _
  %p15 = scmp.eq.s32.totalorder 0, 0
  // Predicated region
  $region14: #{dlgan_forward.18} parent=0 // pred_check
    %p16 = pneg %p15
  $region15: #{dlgan_forward.18} parent=0 // pred_check_branch
    %18 = sbr.rel (%p16) target = $region17
  $region16: #{dlgan_forward.18} parent=0 // pred_region
    %19 = vst [vmem:[%s3] sm:$0xff] 0.0
    %20 = vst [vmem:[%s3 + $0x8] sm:$0xff] 0.0
    %21 = vst [vmem:[%s3 + $0x10] sm:$0xff] 0.0
    %22 = vst [vmem:[%s3 + $0x18] sm:$0xff] 0.0
  $region17: #{dlgan_forward.18} parent=0 // pred_fallthru
    _
  %v23 = vld [vmem:[%s0] sm:$0xff]
  %v24 = vld [vmem:[%s0 + $0x8] sm:$0xf]
  %v25 = vld [vmem:[%s0 + $0xc] sm:$0xff]
  %v26 = vld [vmem:[%s0 + $0x14] sm:$0xf]
  %v27 = vld [vmem:[%s0 + $0x18] sm:$0xff]
  %v28 = vld [vmem:[%s0 + $0x20] sm:$0xf]
  %v29 = vld [vmem:[%s0 + $0x24] sm:$0xff]
  %v30 = vld [vmem:[%s0 + $0x2c] sm:$0xf]
  %v31 = vld [vmem:[%s3] sm:$0xff]
  %v32 = vld [vmem:[%s3 + $0x8] sm:$0xff]
  %v33 = vld [vmem:[%s3 + $0x10] sm:$0xff]
  %v34 = vld [vmem:[%s3 + $0x18] sm:$0xff]
  %v35 = vld [vmem:[%s1] sm:$0xf]
  %v36 = vld [vmem:[%s1 + $0x4] sm:$0xf]
  %v37 = vld [vmem:[%s1 + $0x8] sm:$0xf]
  %v38 = vld [vmem:[%s1 + $0xc] sm:$0xf]
  %v39 = vld [vmem:[%s1 + $0x10] sm:$0xf]
  %v40 = vld [vmem:[%s1 + $0x14] sm:$0xf]
  %v41 = vld [vmem:[%s1 + $0x18] sm:$0xf]
  %v42 = vld [vmem:[%s1 + $0x1c] sm:$0xf]
  %v43 = vld [vmem:[%s1 + $0x20] sm:$0xf]
  %v44 = vld [vmem:[%s1 + $0x24] sm:$0xf]
  %v45 = vld [vmem:[%s1 + $0x28] sm:$0xf]
  %v46 = vld [vmem:[%s1 + $0x2c] sm:$0xf]
  %v47 = vld [vmem:[%s1 + $0x30] sm:$0xf]
  %v48 = vld [vmem:[%s1 + $0x34] sm:$0xf]
  %v49 = vld [vmem:[%s1 + $0x38] sm:$0xf]
  %v50 = vld [vmem:[%s1 + $0x3c] sm:$0xf]
  %v51 = vld [vmem:[%s1 + $0x40] sm:$0xf]
  %v52 = vld [vmem:[%s1 + $0x44] sm:$0xf]
  %v53 = vld [vmem:[%s1 + $0x48] sm:$0xf]
  %v54 = vld [vmem:[%s1 + $0x4c] sm:$0xf]
  %v55 = vld [vmem:[%s1 + $0x50] sm:$0xf]
  %v56 = vld [vmem:[%s1 + $0x54] sm:$0xf]
  %v57 = vld [vmem:[%s1 + $0x58] sm:$0xf]
  %v58 = vld [vmem:[%s1 + $0x5c] sm:$0xf]
  %v59 = vld [vmem:[%s1 + $0x60] sm:$0xf]
  %v60 = vld [vmem:[%s1 + $0x64] sm:$0xf]
  %v61 = vld [vmem:[%s1 + $0x68] sm:$0xf]
  %v62 = vld [vmem:[%s1 + $0x6c] sm:$0xf]
  %v63 = vld [vmem:[%s1 + $0x70] sm:$0xf]
  %v64 = vld [vmem:[%s1 + $0x74] sm:$0xf]
  %v65 = vld [vmem:[%s1 + $0x78] sm:$0xf]
  %v66 = vld [vmem:[%s1 + $0x7c] sm:$0xf]
  %v67 = vld [vmem:[%s1 + $0x80] sm:$0xf]
  %v68 = vld [vmem:[%s1 + $0x84] sm:$0xf]
  %v69 = vld [vmem:[%s1 + $0x88] sm:$0xf]
  %v70 = vld [vmem:[%s1 + $0x8c] sm:$0xf]
  %v71 = vld [vmem:[%s1 + $0x90] sm:$0xf]
  %v72 = vld [vmem:[%s1 + $0x94] sm:$0xf]
  %v73 = vld [vmem:[%s1 + $0x98] sm:$0xf]
  %v74 = vld [vmem:[%s1 + $0x9c] sm:$0xf]
  %v75 = vld [vmem:[%s1 + $0xa0] sm:$0xf]
  %v76 = vld [vmem:[%s1 + $0xa4] sm:$0xf]
  %v77 = vld [vmem:[%s1 + $0xa8] sm:$0xf]
  %v78 = vld [vmem:[%s1 + $0xac] sm:$0xf]
  %v79 = vld [vmem:[%s1 + $0xb0] sm:$0xf]
  %v80 = vld [vmem:[%s1 + $0xb4] sm:$0xf]
  %v81 = vld [vmem:[%s1 + $0xb8] sm:$0xf]
  %v82 = vld [vmem:[%s1 + $0xbc] sm:$0xf]
  %v91 = vunpack.c.l.b16 %v23
  %v92 = vunpack.c.h.b16 %v23
  %v93 = vunpack.c.l.b16 %v24
  %v94 = vunpack.c.l.b16 %v25
  %v95 = vunpack.c.h.b16 %v25
  %v96 = vunpack.c.l.b16 %v26
  %v97 = vunpack.c.l.b16 %v27
  %v98 = vunpack.c.h.b16 %v27
  %v99 = vunpack.c.l.b16 %v28
  %v100 = vunpack.c.l.b16 %v29
  %v101 = vunpack.c.h.b16 %v29
  %v102 = vunpack.c.l.b16 %v30
  %v103 = vpack.c.b16 %v94, %v91
  %v104 = vpack.c.b16 %v95, %v92
  %v105 = vpack.c.b16 %v96, %v93
  %v106 = vpack.c.b16 %v100, %v97
  %v107 = vpack.c.b16 %v101, %v98
  %v108 = vpack.c.b16 %v102, %v99
  %v163 = vunpack.c.l.b16 %v35
  %v164 = vunpack.c.l.b16 %v36
  %v165 = vunpack.c.l.b16 %v37
  %v166 = vunpack.c.l.b16 %v38
  %v167 = vunpack.c.l.b16 %v39
  %v168 = vunpack.c.l.b16 %v40
  %v169 = vunpack.c.l.b16 %v41
  %v170 = vunpack.c.l.b16 %v42
  %v171 = vunpack.c.l.b16 %v43
  %v172 = vunpack.c.l.b16 %v44
  %v173 = vunpack.c.l.b16 %v45
  %v174 = vunpack.c.l.b16 %v46
  %v175 = vunpack.c.l.b16 %v47
  %v176 = vunpack.c.l.b16 %v48
  %v177 = vunpack.c.l.b16 %v49
  %v178 = vunpack.c.l.b16 %v50
  %v179 = vunpack.c.l.b16 %v51
  %v180 = vunpack.c.l.b16 %v52
  %v181 = vunpack.c.l.b16 %v53
  %v182 = vunpack.c.l.b16 %v54
  %v183 = vunpack.c.l.b16 %v55
  %v184 = vunpack.c.l.b16 %v56
  %v185 = vunpack.c.l.b16 %v57
  %v186 = vunpack.c.l.b16 %v58
  %v187 = vunpack.c.l.b16 %v59
  %v188 = vunpack.c.l.b16 %v60
  %v189 = vunpack.c.l.b16 %v61
  %v190 = vunpack.c.l.b16 %v62
  %v191 = vunpack.c.l.b16 %v63
  %v192 = vunpack.c.l.b16 %v64
  %v193 = vunpack.c.l.b16 %v65
  %v194 = vunpack.c.l.b16 %v66
  %v195 = vunpack.c.l.b16 %v67
  %v196 = vunpack.c.l.b16 %v68
  %v197 = vunpack.c.l.b16 %v69
  %v198 = vunpack.c.l.b16 %v70
  %v199 = vunpack.c.l.b16 %v71
  %v200 = vunpack.c.l.b16 %v72
  %v201 = vunpack.c.l.b16 %v73
  %v202 = vunpack.c.l.b16 %v74
  %v203 = vunpack.c.l.b16 %v75
  %v204 = vunpack.c.l.b16 %v76
  %v205 = vunpack.c.l.b16 %v77
  %v206 = vunpack.c.l.b16 %v78
  %v207 = vunpack.c.l.b16 %v79
  %v208 = vunpack.c.l.b16 %v80
  %v209 = vunpack.c.l.b16 %v81
  %v210 = vunpack.c.l.b16 %v82
  %v211 = vpack.c.b16 %v164, %v163
  %v212 = vpack.c.b16 %v166, %v165
  %v213 = vpack.c.b16 %v168, %v167
  %v214 = vpack.c.b16 %v170, %v169
  %v215 = vpack.c.b16 %v172, %v171
  %v216 = vpack.c.b16 %v174, %v173
  %v217 = vpack.c.b16 %v176, %v175
  %v218 = vpack.c.b16 %v178, %v177
  %v219 = vpack.c.b16 %v180, %v179
  %v220 = vpack.c.b16 %v182, %v181
  %v221 = vpack.c.b16 %v184, %v183
  %v222 = vpack.c.b16 %v186, %v185
  %v223 = vpack.c.b16 %v188, %v187
  %v224 = vpack.c.b16 %v190, %v189
  %v225 = vpack.c.b16 %v192, %v191
  %v226 = vpack.c.b16 %v194, %v193
  %v227 = vpack.c.b16 %v196, %v195
  %v228 = vpack.c.b16 %v198, %v197
  %v229 = vpack.c.b16 %v200, %v199
  %v230 = vpack.c.b16 %v202, %v201
  %v231 = vpack.c.b16 %v204, %v203
  %v232 = vpack.c.b16 %v206, %v205
  %v233 = vpack.c.b16 %v208, %v207
  %v234 = vpack.c.b16 %v210, %v209
  %259 = vmatprep.subr.bf16.mxu0 0
  %260 = vmatpush1.bf16.msra.mxu0 %v211
  %261 = vmatprep.subr.bf16.mxu0 0
  %262 = vmatpush1.bf16.msra.mxu0 %v212
  %263 = vmatprep.subr.bf16.mxu0 0
  %264 = vmatpush1.bf16.msra.mxu0 %v213
  %265 = vmatprep.subr.bf16.mxu0 0
  %266 = vmatpush1.bf16.msra.mxu0 %v214
  %267 = vmatprep.subr.bf16.mxu0 0
  %268 = vmatpush1.bf16.msra.mxu0 %v215
  %269 = vmatprep.subr.bf16.mxu0 0
  %270 = vmatpush1.bf16.msra.mxu0 %v216
  %271 = vmatprep.subr.bf16.mxu0 0
  %272 = vmatpush1.bf16.msra.mxu0 %v217
  %273 = vmatprep.subr.bf16.mxu0 0
  %274 = vmatpush1.bf16.msra.mxu0 %v218
  %275 = vmatprep.subr.bf16.mxu0 0
  %276 = vmatpush1.bf16.msra.mxu0 %v219
  %277 = vmatprep.subr.bf16.mxu0 0
  %278 = vmatpush1.bf16.msra.mxu0 %v220
  %279 = vmatprep.subr.bf16.mxu0 0
  %280 = vmatpush1.bf16.msra.mxu0 %v221
  %281 = vmatprep.subr.bf16.mxu0 0
  %282 = vmatpush1.bf16.msra.mxu0 %v222
  %283 = vmatprep.subr.bf16.mxu0 0
  %284 = vmatpush1.bf16.msra.mxu0 %v223
  %285 = vmatprep.subr.bf16.mxu0 0
  %286 = vmatpush1.bf16.msra.mxu0 %v224
  %287 = vmatprep.subr.bf16.mxu0 0
  %288 = vmatpush1.bf16.msra.mxu0 %v225
  %289 = vmatprep.subr.bf16.mxu0 0
  %290 = vmatpush1.bf16.msra.mxu0 %v226
  %291 = vmatprep.mubr.bf16.mxu0 %v104
  %292 = vmatmul.mubr.bf16.gmra.mrb[0].mxu0 %v103
  %v293 = vpop.f32.mrb[0].mxu0
  %v294 = vadd.f32 0.0, %v293
  %v295 = vpop.f32.mrb[0].mxu0
  %v296 = vpop.f32.mrb[0].mxu0
  %v297 = vadd.f32 0.0, %v296
  %v298 = vpop.f32.mrb[0].mxu0
  %299 = vmatprep.mubr.bf16.mxu0 %v107
  %300 = vmatmul.mubr.bf16.gmra.mrb[0].mxu0 %v106
  %v301 = vpop.f32.mrb[0].mxu0
  %v302 = vadd.f32 0.0, %v301
  %v303 = vpop.f32.mrb[0].mxu0
  %v304 = vpop.f32.mrb[0].mxu0
  %v305 = vadd.f32 0.0, %v304
  %v306 = vpop.f32.mrb[0].mxu0
  %307 = vdwg.mxu0
  %308 = vmatprep.subr.bf16.mxu0 0
  %309 = vmatpush1.bf16.msra.mxu0 %v227
  %310 = vmatprep.subr.bf16.mxu0 0
  %311 = vmatpush1.bf16.msra.mxu0 %v228
  %312 = vmatprep.subr.bf16.mxu0 0
  %313 = vmatpush1.bf16.msra.mxu0 %v229
  %314 = vmatprep.subr.bf16.mxu0 0
  %315 = vmatpush1.bf16.msra.mxu0 %v230
  %316 = vmatprep.subr.bf16.mxu0 0
  %317 = vmatpush1.bf16.msra.mxu0 %v231
  %318 = vmatprep.subr.bf16.mxu0 0
  %319 = vmatpush1.bf16.msra.mxu0 %v232
  %320 = vmatprep.subr.bf16.mxu0 0
  %321 = vmatpush1.bf16.msra.mxu0 %v233
  %322 = vmatprep.subr.bf16.mxu0 0
  %323 = vmatpush1.bf16.msra.mxu0 %v234
  %324 = vmatprep.subr.bf16.mxu0 0
  %325 = vmatpush1.bf16.msra.mxu0 0
  %326 = vmatprep.subr.bf16.mxu0 0
  %327 = vmatpush1.bf16.msra.mxu0 0
  %328 = vmatprep.subr.bf16.mxu0 0
  %329 = vmatpush1.bf16.msra.mxu0 0
  %330 = vmatprep.subr.bf16.mxu0 0
  %331 = vmatpush1.bf16.msra.mxu0 0
  %332 = vmatprep.subr.bf16.mxu0 0
  %333 = vmatpush1.bf16.msra.mxu0 0
  %334 = vmatprep.subr.bf16.mxu0 0
  %335 = vmatpush1.bf16.msra.mxu0 0
  %336 = vmatprep.subr.bf16.mxu0 0
  %337 = vmatpush1.bf16.msra.mxu0 0
  %338 = vmatprep.subr.bf16.mxu0 0
  %339 = vmatpush1.bf16.msra.mxu0 0
  %340 = vmatprep.mubr.bf16.mxu0 0
  %341 = vmatmul.mubr.bf16.gmra.mrb[0].mxu0 %v105
  %v342 = vpop.f32.mrb[0].mxu0
  %v343 = vadd.f32 %v294, %v342
  %v344 = vpop.f32.mrb[0].mxu0
  %v345 = vpop.f32.mrb[0].mxu0
  %v346 = vadd.f32 %v297, %v345
  %v347 = vpop.f32.mrb[0].mxu0
  %348 = vmatprep.mubr.bf16.mxu0 0
  %349 = vmatmul.mubr.bf16.gmra.mrb[0].mxu0 %v108
  %v350 = vpop.f32.mrb[0].mxu0
  %v351 = vadd.f32 %v302, %v350
  %v352 = vpop.f32.mrb[0].mxu0
  %v353 = vpop.f32.mrb[0].mxu0
  %v354 = vadd.f32 %v305, %v353
  %v355 = vpop.f32.mrb[0].mxu0
  %356 = vdwg.mxu0
  %v357 = vadd.f32 %v31, %v343
  %v358 = vadd.f32 %v32, %v346
  %v359 = vadd.f32 %v33, %v351
  %v360 = vadd.f32 %v34, %v354
  %361 = vst [vmem:[%s3] sm:$0xff] %v357
  %362 = vst [vmem:[%s3 + $0x8] sm:$0xff] %v358
  %363 = vst [vmem:[%s3 + $0x10] sm:$0xff] %v359
  %364 = vst [vmem:[%s3 + $0x18] sm:$0xff] %v360
  // Predicated region
  $region18: #{dlgan_forward.18} parent=0 // pred_check
    %p365 = pneg %p15
  $region19: #{dlgan_forward.18} parent=0 // pred_check_branch
    %367 = sbr.rel (%p365) target = $region21
  $region20: #{dlgan_forward.18} parent=0 // pred_region
    %v368 = vld [vmem:[%s3] sm:$0xff]
    %v369 = vld [vmem:[%s3 + $0x8] sm:$0xff]
    %v370 = vld [vmem:[%s3 + $0x10] sm:$0xff]
    %v371 = vld [vmem:[%s3 + $0x18] sm:$0xff]
    %v372 = vld [vmem:[%s2] sm:$0x1]
    %v374 = vlaneseq
    %v375 = vshrl.u32 %v374, 7
    %v376 = vsub.s32 0, %v375
    %v377 = vrot.slane %v372, %v376
    %v379 = vadd.f32 %v368, %v377
    %v380 = vadd.f32 %v369, %v377
    %v381 = vadd.f32 %v370, %v377
    %v382 = vadd.f32 %v371, %v377
    %383 = vst [vmem:[%s3] sm:$0xff] %v379
    %384 = vst [vmem:[%s3 + $0x8] sm:$0xff] %v380
    %385 = vst [vmem:[%s3 + $0x10] sm:$0xff] %v381
    %386 = vst [vmem:[%s3 + $0x18] sm:$0xff] %v382
  $region21: #{dlgan_forward.18} parent=0 // pred_fallthru
    _
  // Predicated region
  $region22: #{dlgan_forward.18} parent=0 // pred_check
    _
  $region23: #{dlgan_forward.18} parent=0 // pred_check_branch
    %388 = sbr.rel (0) target = $region25
  $region24: #{dlgan_forward.18} parent=0 // pred_region
    _
  $region25: #{dlgan_forward.18} parent=0 // pred_fallthru
    _
  // Predicated region
  $region26: #{dlgan_forward.18} parent=0 // pred_check
    _
  $region27: #{dlgan_forward.18} parent=0 // pred_check_branch
    %390 = sbr.rel (0) target = $region29
  $region28: #{dlgan_forward.18} parent=0 // pred_region
    _
  $region29: #{dlgan_forward.18} parent=0 // pred_fallthru
    _

// kernel: dlgan_forward.23
$region0: #{dlgan_forward.23}
  #allocation0 [shape = 'u32[]', space=smem, size = 0x4, offset = 0x4, fixed_abs, tag = 'smem constant byte address 0x4 - core index']
  #allocation1 [shape = 'u32[144,128]{1,0:T(1,128)}', space=vmem, size = 0x12000, scoped, tag = 'internal scratch']
  %s0 = inlined_call_operand.vmem [shape: bf16[32,128], index: 0, kind: input, shape index: {}]
  %s1 = inlined_call_operand.vmem [shape: bf16[128,128], index: 1, kind: input, shape index: {}]
  %s2 = inlined_call_operand.vmem [shape: f32[1,128], index: 2, kind: input, shape index: {}]
  %s3 = inlined_call_operand.vmem [shape: f32[32,128], index: 3, kind: output, shape index: {}]
  %s4 = sld [smem:[#allocation0]]
  $region30: #{dlgan_forward.23} parent=0
    _
  %s6 = ssub.s32 1, %s4
  %s7 = scalar_select 0, %s6, %s4
  // Predicated region
  $region2: #{dlgan_forward.23} parent=0 // pred_check
    _
  $region3: #{dlgan_forward.23} parent=0 // pred_check_branch
    %9 = sbr.rel (0) target = $region5
  $region4: #{dlgan_forward.23} parent=0 // pred_region
    _
  $region5: #{dlgan_forward.23} parent=0 // pred_fallthru
    _
  // Predicated region
  $region6: #{dlgan_forward.23} parent=0 // pred_check
    _
  $region7: #{dlgan_forward.23} parent=0 // pred_check_branch
    %11 = sbr.rel (0) target = $region9
  $region8: #{dlgan_forward.23} parent=0 // pred_region
    _
  $region9: #{dlgan_forward.23} parent=0 // pred_fallthru
    _
  // Predicated region
  $region10: #{dlgan_forward.23} parent=0 // pred_check
    _
  $region11: #{dlgan_forward.23} parent=0 // pred_check_branch
    %13 = sbr.rel (0) target = $region13
  $region12: #{dlgan_forward.23} parent=0 // pred_region
    _
  $region13: #{dlgan_forward.23} parent=0 // pred_fallthru
    _
  %p15 = scmp.eq.s32.totalorder 0, 0
  // Predicated region
  $region14: #{dlgan_forward.23} parent=0 // pred_check
    %p16 = pneg %p15
  $region15: #{dlgan_forward.23} parent=0 // pred_check_branch
    %18 = sbr.rel (%p16) target = $region17
  $region16: #{dlgan_forward.23} parent=0 // pred_region
    %19 = vst [vmem:[%s3] sm:$0xff] 0.0
    %20 = vst [vmem:[%s3 + $0x8] sm:$0xff] 0.0
    %21 = vst [vmem:[%s3 + $0x10] sm:$0xff] 0.0
    %22 = vst [vmem:[%s3 + $0x18] sm:$0xff] 0.0
  $region17: #{dlgan_forward.23} parent=0 // pred_fallthru
    _
  %v23 = vld [vmem:[%s0] sm:$0xf]
  %v24 = vld [vmem:[%s0 + $0x4] sm:$0xf]
  %v25 = vld [vmem:[%s0 + $0x8] sm:$0xf]
  %v26 = vld [vmem:[%s0 + $0xc] sm:$0xf]
  %v27 = vmax.bf16 %v23, 0
  %v28 = vmax.bf16 %v24, 0
  %v29 = vmax.bf16 %v25, 0
  %v30 = vmax.bf16 %v26, 0
  %v31 = vld [vmem:[%s3] sm:$0xff]
  %v32 = vld [vmem:[%s3 + $0x8] sm:$0xff]
  %v33 = vld [vmem:[%s3 + $0x10] sm:$0xff]
  %v34 = vld [vmem:[%s3 + $0x18] sm:$0xff]
  %v35 = vld [vmem:[%s1] sm:$0xf]
  %v36 = vld [vmem:[%s1 + $0x4] sm:$0xf]
  %v37 = vld [vmem:[%s1 + $0x8] sm:$0xf]
  %v38 = vld [vmem:[%s1 + $0xc] sm:$0xf]
  %v39 = vld [vmem:[%s1 + $0x10] sm:$0xf]
  %v40 = vld [vmem:[%s1 + $0x14] sm:$0xf]
  %v41 = vld [vmem:[%s1 + $0x18] sm:$0xf]
  %v42 = vld [vmem:[%s1 + $0x1c] sm:$0xf]
  %v43 = vld [vmem:[%s1 + $0x20] sm:$0xf]
  %v44 = vld [vmem:[%s1 + $0x24] sm:$0xf]
  %v45 = vld [vmem:[%s1 + $0x28] sm:$0xf]
  %v46 = vld [vmem:[%s1 + $0x2c] sm:$0xf]
  %v47 = vld [vmem:[%s1 + $0x30] sm:$0xf]
  %v48 = vld [vmem:[%s1 + $0x34] sm:$0xf]
  %v49 = vld [vmem:[%s1 + $0x38] sm:$0xf]
  %v50 = vld [vmem:[%s1 + $0x3c] sm:$0xf]
  %v55 = vunpack.c.l.b16 %v27
  %v56 = vunpack.c.l.b16 %v28
  %v57 = vunpack.c.l.b16 %v29
  %v58 = vunpack.c.l.b16 %v30
  %v59 = vpack.c.b16 %v56, %v55
  %v60 = vpack.c.b16 %v58, %v57
  %v79 = vunpack.c.l.b16 %v35
  %v80 = vunpack.c.l.b16 %v36
  %v81 = vunpack.c.l.b16 %v37
  %v82 = vunpack.c.l.b16 %v38
  %v83 = vunpack.c.l.b16 %v39
  %v84 = vunpack.c.l.b16 %v40
  %v85 = vunpack.c.l.b16 %v41
  %v86 = vunpack.c.l.b16 %v42
  %v87 = vunpack.c.l.b16 %v43
  %v88 = vunpack.c.l.b16 %v44
  %v89 = vunpack.c.l.b16 %v45
  %v90 = vunpack.c.l.b16 %v46
  %v91 = vunpack.c.l.b16 %v47
  %v92 = vunpack.c.l.b16 %v48
  %v93 = vunpack.c.l.b16 %v49
  %v94 = vunpack.c.l.b16 %v50
  %v95 = vpack.c.b16 %v80, %v79
  %v96 = vpack.c.b16 %v82, %v81
  %v97 = vpack.c.b16 %v84, %v83
  %v98 = vpack.c.b16 %v86, %v85
  %v99 = vpack.c.b16 %v88, %v87
  %v100 = vpack.c.b16 %v90, %v89
  %v101 = vpack.c.b16 %v92, %v91
  %v102 = vpack.c.b16 %v94, %v93
  %111 = vmatprep.subr.bf16.mxu0 0
  %112 = vmatpush1.bf16.msra.mxu0 %v95
  %113 = vmatprep.subr.bf16.mxu0 0
  %114 = vmatpush1.bf16.msra.mxu0 %v96
  %115 = vmatprep.subr.bf16.mxu0 0
  %116 = vmatpush1.bf16.msra.mxu0 %v97
  %117 = vmatprep.subr.bf16.mxu0 0
  %118 = vmatpush1.bf16.msra.mxu0 %v98
  %119 = vmatprep.subr.bf16.mxu0 0
  %120 = vmatpush1.bf16.msra.mxu0 %v99
  %121 = vmatprep.subr.bf16.mxu0 0
  %122 = vmatpush1.bf16.msra.mxu0 %v100
  %123 = vmatprep.subr.bf16.mxu0 0
  %124 = vmatpush1.bf16.msra.mxu0 %v101
  %125 = vmatprep.subr.bf16.mxu0 0
  %126 = vmatpush1.bf16.msra.mxu0 %v102
  %127 = vmatprep.subr.bf16.mxu0 0
  %128 = vmatpush1.bf16.msra.mxu0 0
  %129 = vmatprep.subr.bf16.mxu0 0
  %130 = vmatpush1.bf16.msra.mxu0 0
  %131 = vmatprep.subr.bf16.mxu0 0
  %132 = vmatpush1.bf16.msra.mxu0 0
  %133 = vmatprep.subr.bf16.mxu0 0
  %134 = vmatpush1.bf16.msra.mxu0 0
  %135 = vmatprep.subr.bf16.mxu0 0
  %136 = vmatpush1.bf16.msra.mxu0 0
  %137 = vmatprep.subr.bf16.mxu0 0
  %138 = vmatpush1.bf16.msra.mxu0 0
  %139 = vmatprep.subr.bf16.mxu0 0
  %140 = vmatpush1.bf16.msra.mxu0 0
  %141 = vmatprep.subr.bf16.mxu0 0
  %142 = vmatpush1.bf16.msra.mxu0 0
  %143 = vmatprep.mubr.bf16.mxu0 0
  %144 = vmatmul.mubr.bf16.gmra.mrb[0].mxu0 %v59
  %v145 = vpop.f32.mrb[0].mxu0
  %v146 = vadd.f32 0.0, %v145
  %v147 = vpop.f32.mrb[0].mxu0
  %v148 = vpop.f32.mrb[0].mxu0
  %v149 = vadd.f32 0.0, %v148
  %v150 = vpop.f32.mrb[0].mxu0
  %151 = vmatprep.mubr.bf16.mxu0 0
  %152 = vmatmul.mubr.bf16.gmra.mrb[0].mxu0 %v60
  %v153 = vpop.f32.mrb[0].mxu0
  %v154 = vadd.f32 0.0, %v153
  %v155 = vpop.f32.mrb[0].mxu0
  %v156 = vpop.f32.mrb[0].mxu0
  %v157 = vadd.f32 0.0, %v156
  %v158 = vpop.f32.mrb[0].mxu0
  %159 = vdwg.mxu0
  %v160 = vadd.f32 %v31, %v146
  %v161 = vadd.f32 %v32, %v149
  %v162 = vadd.f32 %v33, %v154
  %v163 = vadd.f32 %v34, %v157
  %164 = vst [vmem:[%s3] sm:$0xff] %v160
  %165 = vst [vmem:[%s3 + $0x8] sm:$0xff] %v161
  %166 = vst [vmem:[%s3 + $0x10] sm:$0xff] %v162
  %167 = vst [vmem:[%s3 + $0x18] sm:$0xff] %v163
  // Predicated region
  $region18: #{dlgan_forward.23} parent=0 // pred_check
    %p168 = pneg %p15
  $region19: #{dlgan_forward.23} parent=0 // pred_check_branch
    %170 = sbr.rel (%p168) target = $region21
  $region20: #{dlgan_forward.23} parent=0 // pred_region
    %v171 = vld [vmem:[%s3] sm:$0xff]
    %v172 = vld [vmem:[%s3 + $0x8] sm:$0xff]
    %v173 = vld [vmem:[%s3 + $0x10] sm:$0xff]
    %v174 = vld [vmem:[%s3 + $0x18] sm:$0xff]
    %v175 = vld [vmem:[%s2] sm:$0x1]
    %v177 = vlaneseq
    %v178 = vshrl.u32 %v177, 7
    %v179 = vsub.s32 0, %v178
    %v180 = vrot.slane %v175, %v179
    %v182 = vadd.f32 %v171, %v180
    %v183 = vadd.f32 %v172, %v180
    %v184 = vadd.f32 %v173, %v180
    %v185 = vadd.f32 %v174, %v180
    %186 = vst [vmem:[%s3] sm:$0xff] %v182
    %187 = vst [vmem:[%s3 + $0x8] sm:$0xff] %v183
    %188 = vst [vmem:[%s3 + $0x10] sm:$0xff] %v184
    %189 = vst [vmem:[%s3 + $0x18] sm:$0xff] %v185
  $region21: #{dlgan_forward.23} parent=0 // pred_fallthru
    _
  // Predicated region
  $region22: #{dlgan_forward.23} parent=0 // pred_check
    _
  $region23: #{dlgan_forward.23} parent=0 // pred_check_branch
    %191 = sbr.rel (0) target = $region25
  $region24: #{dlgan_forward.23} parent=0 // pred_region
    _
  $region25: #{dlgan_forward.23} parent=0 // pred_fallthru
    _
  // Predicated region
  $region26: #{dlgan_forward.23} parent=0 // pred_check
    _
  $region27: #{dlgan_forward.23} parent=0 // pred_check_branch
    %193 = sbr.rel (0) target = $region29
  $region28: #{dlgan_forward.23} parent=0 // pred_region
    _
  $region29: #{dlgan_forward.23} parent=0 // pred_fallthru
    _

// kernel: dlgan_forward.25
$region0: #{dlgan_forward.25}
  #allocation0 [shape = 'u32[]', space=smem, size = 0x4, offset = 0x4, fixed_abs, tag = 'smem constant byte address 0x4 - core index']
  #allocation1 [shape = 'u32[144,128]{1,0:T(1,128)}', space=vmem, size = 0x12000, scoped, tag = 'internal scratch']
  %s0 = inlined_call_operand.vmem [shape: bf16[32,256], index: 0, kind: input, shape index: {}]
  %s1 = inlined_call_operand.vmem [shape: bf16[256,128], index: 1, kind: input, shape index: {}]
  %s2 = inlined_call_operand.vmem [shape: f32[1,128], index: 2, kind: input, shape index: {}]
  %s3 = inlined_call_operand.vmem [shape: f32[32,128], index: 3, kind: output, shape index: {}]
  %s4 = sld [smem:[#allocation0]]
  $region30: #{dlgan_forward.25} parent=0
    _
  %s6 = ssub.s32 1, %s4
  %s7 = scalar_select 0, %s6, %s4
  // Predicated region
  $region2: #{dlgan_forward.25} parent=0 // pred_check
    _
  $region3: #{dlgan_forward.25} parent=0 // pred_check_branch
    %9 = sbr.rel (0) target = $region5
  $region4: #{dlgan_forward.25} parent=0 // pred_region
    _
  $region5: #{dlgan_forward.25} parent=0 // pred_fallthru
    _
  // Predicated region
  $region6: #{dlgan_forward.25} parent=0 // pred_check
    _
  $region7: #{dlgan_forward.25} parent=0 // pred_check_branch
    %11 = sbr.rel (0) target = $region9
  $region8: #{dlgan_forward.25} parent=0 // pred_region
    _
  $region9: #{dlgan_forward.25} parent=0 // pred_fallthru
    _
  // Predicated region
  $region10: #{dlgan_forward.25} parent=0 // pred_check
    _
  $region11: #{dlgan_forward.25} parent=0 // pred_check_branch
    %13 = sbr.rel (0) target = $region13
  $region12: #{dlgan_forward.25} parent=0 // pred_region
    _
  $region13: #{dlgan_forward.25} parent=0 // pred_fallthru
    _
  %p15 = scmp.eq.s32.totalorder 0, 0
  // Predicated region
  $region14: #{dlgan_forward.25} parent=0 // pred_check
    %p16 = pneg %p15
  $region15: #{dlgan_forward.25} parent=0 // pred_check_branch
    %18 = sbr.rel (%p16) target = $region17
  $region16: #{dlgan_forward.25} parent=0 // pred_region
    %19 = vst [vmem:[%s3] sm:$0xff] 0.0
    %20 = vst [vmem:[%s3 + $0x8] sm:$0xff] 0.0
    %21 = vst [vmem:[%s3 + $0x10] sm:$0xff] 0.0
    %22 = vst [vmem:[%s3 + $0x18] sm:$0xff] 0.0
  $region17: #{dlgan_forward.25} parent=0 // pred_fallthru
    _
  %v23 = vld [vmem:[%s0] sm:$0xff]
  %v24 = vld [vmem:[%s0 + $0x8] sm:$0xff]
  %v25 = vld [vmem:[%s0 + $0x10] sm:$0xff]
  %v26 = vld [vmem:[%s0 + $0x18] sm:$0xff]
  %v27 = vld [vmem:[%s3] sm:$0xff]
  %v28 = vld [vmem:[%s3 + $0x8] sm:$0xff]
  %v29 = vld [vmem:[%s3 + $0x10] sm:$0xff]
  %v30 = vld [vmem:[%s3 + $0x18] sm:$0xff]
  %v31 = vld [vmem:[%s1] sm:$0xf]
  %v32 = vld [vmem:[%s1 + $0x4] sm:$0xf]
  %v33 = vld [vmem:[%s1 + $0x8] sm:$0xf]
  %v34 = vld [vmem:[%s1 + $0xc] sm:$0xf]
  %v35 = vld [vmem:[%s1 + $0x10] sm:$0xf]
  %v36 = vld [vmem:[%s1 + $0x14] sm:$0xf]
  %v37 = vld [vmem:[%s1 + $0x18] sm:$0xf]
  %v38 = vld [vmem:[%s1 + $0x1c] sm:$0xf]
  %v39 = vld [vmem:[%s1 + $0x20] sm:$0xf]
  %v40 = vld [vmem:[%s1 + $0x24] sm:$0xf]
  %v41 = vld [vmem:[%s1 + $0x28] sm:$0xf]
  %v42 = vld [vmem:[%s1 + $0x2c] sm:$0xf]
  %v43 = vld [vmem:[%s1 + $0x30] sm:$0xf]
  %v44 = vld [vmem:[%s1 + $0x34] sm:$0xf]
  %v45 = vld [vmem:[%s1 + $0x38] sm:$0xf]
  %v46 = vld [vmem:[%s1 + $0x3c] sm:$0xf]
  %v47 = vld [vmem:[%s1 + $0x40] sm:$0xf]
  %v48 = vld [vmem:[%s1 + $0x44] sm:$0xf]
  %v49 = vld [vmem:[%s1 + $0x48] sm:$0xf]
  %v50 = vld [vmem:[%s1 + $0x4c] sm:$0xf]
  %v51 = vld [vmem:[%s1 + $0x50] sm:$0xf]
  %v52 = vld [vmem:[%s1 + $0x54] sm:$0xf]
  %v53 = vld [vmem:[%s1 + $0x58] sm:$0xf]
  %v54 = vld [vmem:[%s1 + $0x5c] sm:$0xf]
  %v55 = vld [vmem:[%s1 + $0x60] sm:$0xf]
  %v56 = vld [vmem:[%s1 + $0x64] sm:$0xf]
  %v57 = vld [vmem:[%s1 + $0x68] sm:$0xf]
  %v58 = vld [vmem:[%s1 + $0x6c] sm:$0xf]
  %v59 = vld [vmem:[%s1 + $0x70] sm:$0xf]
  %v60 = vld [vmem:[%s1 + $0x74] sm:$0xf]
  %v61 = vld [vmem:[%s1 + $0x78] sm:$0xf]
  %v62 = vld [vmem:[%s1 + $0x7c] sm:$0xf]
  %v67 = vunpack.c.l.b16 %v23
  %v68 = vunpack.c.h.b16 %v23
  %v69 = vunpack.c.l.b16 %v24
  %v70 = vunpack.c.h.b16 %v24
  %v71 = vunpack.c.l.b16 %v25
  %v72 = vunpack.c.h.b16 %v25
  %v73 = vunpack.c.l.b16 %v26
  %v74 = vunpack.c.h.b16 %v26
  %v75 = vpack.c.b16 %v69, %v67
  %v76 = vpack.c.b16 %v70, %v68
  %v77 = vpack.c.b16 %v73, %v71
  %v78 = vpack.c.b16 %v74, %v72
  %v115 = vunpack.c.l.b16 %v31
  %v116 = vunpack.c.l.b16 %v32
  %v117 = vunpack.c.l.b16 %v33
  %v118 = vunpack.c.l.b16 %v34
  %v119 = vunpack.c.l.b16 %v35
  %v120 = vunpack.c.l.b16 %v36
  %v121 = vunpack.c.l.b16 %v37
  %v122 = vunpack.c.l.b16 %v38
  %v123 = vunpack.c.l.b16 %v39
  %v124 = vunpack.c.l.b16 %v40
  %v125 = vunpack.c.l.b16 %v41
  %v126 = vunpack.c.l.b16 %v42
  %v127 = vunpack.c.l.b16 %v43
  %v128 = vunpack.c.l.b16 %v44
  %v129 = vunpack.c.l.b16 %v45
  %v130 = vunpack.c.l.b16 %v46
  %v131 = vunpack.c.l.b16 %v47
  %v132 = vunpack.c.l.b16 %v48
  %v133 = vunpack.c.l.b16 %v49
  %v134 = vunpack.c.l.b16 %v50
  %v135 = vunpack.c.l.b16 %v51
  %v136 = vunpack.c.l.b16 %v52
  %v137 = vunpack.c.l.b16 %v53
  %v138 = vunpack.c.l.b16 %v54
  %v139 = vunpack.c.l.b16 %v55
  %v140 = vunpack.c.l.b16 %v56
  %v141 = vunpack.c.l.b16 %v57
  %v142 = vunpack.c.l.b16 %v58
  %v143 = vunpack.c.l.b16 %v59
  %v144 = vunpack.c.l.b16 %v60
  %v145 = vunpack.c.l.b16 %v61
  %v146 = vunpack.c.l.b16 %v62
  %v147 = vpack.c.b16 %v116, %v115
  %v148 = vpack.c.b16 %v118, %v117
  %v149 = vpack.c.b16 %v120, %v119
  %v150 = vpack.c.b16 %v122, %v121
  %v151 = vpack.c.b16 %v124, %v123
  %v152 = vpack.c.b16 %v126, %v125
  %v153 = vpack.c.b16 %v128, %v127
  %v154 = vpack.c.b16 %v130, %v129
  %v155 = vpack.c.b16 %v132, %v131
  %v156 = vpack.c.b16 %v134, %v133
  %v157 = vpack.c.b16 %v136, %v135
  %v158 = vpack.c.b16 %v138, %v137
  %v159 = vpack.c.b16 %v140, %v139
  %v160 = vpack.c.b16 %v142, %v141
  %v161 = vpack.c.b16 %v144, %v143
  %v162 = vpack.c.b16 %v146, %v145
  %179 = vmatprep.subr.bf16.mxu0 0
  %180 = vmatpush1.bf16.msra.mxu0 %v147
  %181 = vmatprep.subr.bf16.mxu0 0
  %182 = vmatpush1.bf16.msra.mxu0 %v148
  %183 = vmatprep.subr.bf16.mxu0 0
  %184 = vmatpush1.bf16.msra.mxu0 %v149
  %185 = vmatprep.subr.bf16.mxu0 0
  %186 = vmatpush1.bf16.msra.mxu0 %v150
  %187 = vmatprep.subr.bf16.mxu0 0
  %188 = vmatpush1.bf16.msra.mxu0 %v151
  %189 = vmatprep.subr.bf16.mxu0 0
  %190 = vmatpush1.bf16.msra.mxu0 %v152
  %191 = vmatprep.subr.bf16.mxu0 0
  %192 = vmatpush1.bf16.msra.mxu0 %v153
  %193 = vmatprep.subr.bf16.mxu0 0
  %194 = vmatpush1.bf16.msra.mxu0 %v154
  %195 = vmatprep.subr.bf16.mxu0 0
  %196 = vmatpush1.bf16.msra.mxu0 %v155
  %197 = vmatprep.subr.bf16.mxu0 0
  %198 = vmatpush1.bf16.msra.mxu0 %v156
  %199 = vmatprep.subr.bf16.mxu0 0
  %200 = vmatpush1.bf16.msra.mxu0 %v157
  %201 = vmatprep.subr.bf16.mxu0 0
  %202 = vmatpush1.bf16.msra.mxu0 %v158
  %203 = vmatprep.subr.bf16.mxu0 0
  %204 = vmatpush1.bf16.msra.mxu0 %v159
  %205 = vmatprep.subr.bf16.mxu0 0
  %206 = vmatpush1.bf16.msra.mxu0 %v160
  %207 = vmatprep.subr.bf16.mxu0 0
  %208 = vmatpush1.bf16.msra.mxu0 %v161
  %209 = vmatprep.subr.bf16.mxu0 0
  %210 = vmatpush1.bf16.msra.mxu0 %v162
  %211 = vmatprep.mubr.bf16.mxu0 %v76
  %212 = vmatmul.mubr.bf16.gmra.mrb[0].mxu0 %v75
  %v213 = vpop.f32.mrb[0].mxu0
  %v214 = vadd.f32 0.0, %v213
  %v215 = vpop.f32.mrb[0].mxu0
  %v216 = vpop.f32.mrb[0].mxu0
  %v217 = vadd.f32 0.0, %v216
  %v218 = vpop.f32.mrb[0].mxu0
  %219 = vmatprep.mubr.bf16.mxu0 %v78
  %220 = vmatmul.mubr.bf16.gmra.mrb[0].mxu0 %v77
  %v221 = vpop.f32.mrb[0].mxu0
  %v222 = vadd.f32 0.0, %v221
  %v223 = vpop.f32.mrb[0].mxu0
  %v224 = vpop.f32.mrb[0].mxu0
  %v225 = vadd.f32 0.0, %v224
  %v226 = vpop.f32.mrb[0].mxu0
  %227 = vdwg.mxu0
  %v228 = vadd.f32 %v27, %v214
  %v229 = vadd.f32 %v28, %v217
  %v230 = vadd.f32 %v29, %v222
  %v231 = vadd.f32 %v30, %v225
  %232 = vst [vmem:[%s3] sm:$0xff] %v228
  %233 = vst [vmem:[%s3 + $0x8] sm:$0xff] %v229
  %234 = vst [vmem:[%s3 + $0x10] sm:$0xff] %v230
  %235 = vst [vmem:[%s3 + $0x18] sm:$0xff] %v231
  // Predicated region
  $region18: #{dlgan_forward.25} parent=0 // pred_check
    %p236 = pneg %p15
  $region19: #{dlgan_forward.25} parent=0 // pred_check_branch
    %238 = sbr.rel (%p236) target = $region21
  $region20: #{dlgan_forward.25} parent=0 // pred_region
    %v239 = vld [vmem:[%s3] sm:$0xff]
    %v240 = vld [vmem:[%s3 + $0x8] sm:$0xff]
    %v241 = vld [vmem:[%s3 + $0x10] sm:$0xff]
    %v242 = vld [vmem:[%s3 + $0x18] sm:$0xff]
    %v243 = vld [vmem:[%s2] sm:$0x1]
    %v245 = vlaneseq
    %v246 = vshrl.u32 %v245, 7
    %v247 = vsub.s32 0, %v246
    %v248 = vrot.slane %v243, %v247
    %v250 = vadd.f32 %v239, %v248
    %v251 = vadd.f32 %v240, %v248
    %v252 = vadd.f32 %v241, %v248
    %v253 = vadd.f32 %v242, %v248
    %254 = vst [vmem:[%s3] sm:$0xff] %v250
    %255 = vst [vmem:[%s3 + $0x8] sm:$0xff] %v251
    %256 = vst [vmem:[%s3 + $0x10] sm:$0xff] %v252
    %257 = vst [vmem:[%s3 + $0x18] sm:$0xff] %v253
  $region21: #{dlgan_forward.25} parent=0 // pred_fallthru
    _
  // Predicated region
  $region22: #{dlgan_forward.25} parent=0 // pred_check
    _
  $region23: #{dlgan_forward.25} parent=0 // pred_check_branch
    %259 = sbr.rel (0) target = $region25
  $region24: #{dlgan_forward.25} parent=0 // pred_region
    _
  $region25: #{dlgan_forward.25} parent=0 // pred_fallthru
    _
  // Predicated region
  $region26: #{dlgan_forward.25} parent=0 // pred_check
    _
  $region27: #{dlgan_forward.25} parent=0 // pred_check_branch
    %261 = sbr.rel (0) target = $region29
  $region28: #{dlgan_forward.25} parent=0 // pred_region
    _
  $region29: #{dlgan_forward.25} parent=0 // pred_fallthru
    _

// kernel: dlgan_forward.24
$region0: #{dlgan_forward.24}
  #allocation0 [shape = 'u32[]', space=smem, size = 0x4, offset = 0x4, fixed_abs, tag = 'smem constant byte address 0x4 - core index']
  #allocation1 [shape = 'u32[144,128]{1,0:T(1,128)}', space=vmem, size = 0x12000, scoped, tag = 'internal scratch']
  %s0 = inlined_call_operand.vmem [shape: f32[32,128], index: 0, kind: input, shape index: {}]
  %s1 = inlined_call_operand.vmem [shape: f32[128,128], index: 1, kind: input, shape index: {}]
  %s2 = inlined_call_operand.vmem [shape: f32[32,128], index: 2, kind: output, shape index: {0}]
  %s3 = inlined_call_operand.hbm [shape: f32[32,128], index: 3, kind: output, shape index: {1}]
  %s4 = inlined_call_operand.vmem [shape: f32[8,128], index: 4, kind: output, shape index: {2}]
  %s5 = inlined_call_operand.vmem [shape: f32[8,128], index: 5, kind: output, shape index: {3}]
  %6 = xla_tuple %s2, %s3, %s4, %s5
  %s7 = sld [smem:[#allocation0]]
  $region42: #{dlgan_forward.24} parent=0
    _
  %s9 = ssub.s32 1, %s7
  %s10 = scalar_select 0, %s9, %s7
  $region1: #{dlgan_forward.24} parent=0
    #allocation2 [shape = 'u8[16384]{0}', space=vmem, size = 0x4000, scoped, tag = 'output window, operand 1, single buffered']
    #allocation3 [shape = 's32[1]{0}', space=sflag, size = 0x4, scoped, tag = 'scoped memory for dlgan_forward.24']
    %11 = vsyncpa [#allocation3], 0
    // Predicated region
    $region2: #{dlgan_forward.24} parent=1 // pred_check
      _
    $region3: #{dlgan_forward.24} parent=1 // pred_check_branch
      %13 = sbr.rel (0) target = $region5
    $region4: #{dlgan_forward.24} parent=1 // pred_region
      _
    $region5: #{dlgan_forward.24} parent=1 // pred_fallthru
      _
    // Predicated region
    $region6: #{dlgan_forward.24} parent=1 // pred_check
      _
    $region7: #{dlgan_forward.24} parent=1 // pred_check_branch
      %15 = sbr.rel (0) target = $region9
    $region8: #{dlgan_forward.24} parent=1 // pred_region
      _
    $region9: #{dlgan_forward.24} parent=1 // pred_fallthru
      _
    %v16 = vld [vmem:[%s0] sm:$0xff]
    %v17 = vld [vmem:[%s0 + $0x8] sm:$0xff]
    %v18 = vld [vmem:[%s0 + $0x10] sm:$0xff]
    %v19 = vld [vmem:[%s0 + $0x18] sm:$0xff]
    %20 = vst [vmem:[#allocation2] sm:$0xff] 0.0
    %21 = vst [vmem:[#allocation2 + $0x8] sm:$0xff] 0.0
    %22 = vst [vmem:[#allocation2 + $0x10] sm:$0xff] 0.0
    %23 = vst [vmem:[#allocation2 + $0x18] sm:$0xff] 0.0
    %v24 = vlaneseq
    %v25 = vand.u32 %v24, 127
    %s26 = smul.u32 0, 32
    %v27 = vlaneseq
    %v28 = vshrl.u32 %v27, 7
    %v29 = vadd.s32 %v28, 8
    %v30 = vadd.s32 %v28, 16
    %v31 = vadd.s32 %v28, 24
    %v32 = vstv %s26
    %v33 = vadd.s32 %v32, %v28
    %v34 = vadd.s32 %v32, %v29
    %v35 = vadd.s32 %v32, %v30
    %v36 = vadd.s32 %v32, %v31
    %vm37 = vcmp.lt.s32.totalorder %v33, 32
    %vm38 = vcmp.lt.s32.totalorder %v34, 32
    %vm39 = vcmp.lt.s32.totalorder %v35, 32
    %vm40 = vcmp.lt.s32.totalorder %v36, 32
    %v41 = vsel %vm37, 1, 0
    %v42 = vsel %vm38, 1, 0
    %v43 = vsel %vm39, 1, 0
    %v44 = vsel %vm40, 1, 0
    %v45 = vcvt.s32.f32 %v41
    %v46 = vcvt.s32.f32 %v42
    %v47 = vcvt.s32.f32 %v43
    %v48 = vcvt.s32.f32 %v44
    %v49 = vld [vmem:[%s1] sm:$0xff]
    %v50 = vld [vmem:[%s1 + $0x8] sm:$0xff]
    %v51 = vld [vmem:[%s1 + $0x10] sm:$0xff]
    %v52 = vld [vmem:[%s1 + $0x18] sm:$0xff]
    %v53 = vld [vmem:[%s1 + $0x20] sm:$0xff]
    %v54 = vld [vmem:[%s1 + $0x28] sm:$0xff]
    %v55 = vld [vmem:[%s1 + $0x30] sm:$0xff]
    %v56 = vld [vmem:[%s1 + $0x38] sm:$0xff]
    %v57 = vld [vmem:[%s1 + $0x40] sm:$0xff]
    %v58 = vld [vmem:[%s1 + $0x48] sm:$0xff]
    %v59 = vld [vmem:[%s1 + $0x50] sm:$0xff]
    %v60 = vld [vmem:[%s1 + $0x58] sm:$0xff]
    %v61 = vld [vmem:[%s1 + $0x60] sm:$0xff]
    %v62 = vld [vmem:[%s1 + $0x68] sm:$0xff]
    %v63 = vld [vmem:[%s1 + $0x70] sm:$0xff]
    %v64 = vld [vmem:[%s1 + $0x78] sm:$0xff]
    %65 = vmatprep.subr.mxu0 0.0
    %66 = vmatpush1.xpose.msra.mxu0 %v49
    %67 = vmatprep.subr.mxu0 0.0
    %68 = vmatpush1.xpose.msra.mxu0 %v50
    %69 = vmatprep.subr.mxu0 0.0
    %70 = vmatpush1.xpose.msra.mxu0 %v51
    %71 = vmatprep.subr.mxu0 0.0
    %72 = vmatpush1.xpose.msra.mxu0 %v52
    %73 = vmatprep.subr.mxu0 0.0
    %74 = vmatpush1.xpose.msra.mxu0 %v53
    %75 = vmatprep.subr.mxu0 0.0
    %76 = vmatpush1.xpose.msra.mxu0 %v54
    %77 = vmatprep.subr.mxu0 0.0
    %78 = vmatpush1.xpose.msra.mxu0 %v55
    %79 = vmatprep.subr.mxu0 0.0
    %80 = vmatpush1.xpose.msra.mxu0 %v56
    %81 = vmatprep.subr.mxu0 0.0
    %82 = vmatpush1.xpose.msra.mxu0 %v57
    %83 = vmatprep.subr.mxu0 0.0
    %84 = vmatpush1.xpose.msra.mxu0 %v58
    %85 = vmatprep.subr.mxu0 0.0
    %86 = vmatpush1.xpose.msra.mxu0 %v59
    %87 = vmatprep.subr.mxu0 0.0
    %88 = vmatpush1.xpose.msra.mxu0 %v60
    %89 = vmatprep.subr.mxu0 0.0
    %90 = vmatpush1.xpose.msra.mxu0 %v61
    %91 = vmatprep.subr.mxu0 0.0
    %92 = vmatpush1.xpose.msra.mxu0 %v62
    %93 = vmatprep.subr.mxu0 0.0
    %94 = vmatpush1.xpose.msra.mxu0 %v63
    %95 = vmatprep.subr.mxu0 0.0
    %96 = vmatpush1.xpose.msra.mxu0 %v64
    %97 = vmatprep.subr.mxu0 0.0
    %98 = vmatpush1.xpose.msra.mxu0 0.0
    %99 = vmatprep.subr.mxu0 0.0
    %100 = vmatpush1.xpose.msra.mxu0 0.0
    %101 = vmatprep.subr.mxu0 0.0
    %102 = vmatpush1.xpose.msra.mxu0 0.0
    %103 = vmatprep.subr.mxu0 0.0
    %104 = vmatpush1.xpose.msra.mxu0 0.0
    %105 = vmatprep.subr.mxu0 0.0
    %106 = vmatpush1.xpose.msra.mxu0 0.0
    %107 = vmatprep.subr.mxu0 0.0
    %108 = vmatpush1.xpose.msra.mxu0 0.0
    %109 = vmatprep.subr.mxu0 0.0
    %110 = vmatpush1.xpose.msra.mxu0 0.0
    %111 = vmatprep.subr.mxu0 0.0
    %112 = vmatpush1.xpose.msra.mxu0 0.0
    %113 = vmatprep.subr.mxu0 0.0
    %114 = vmatpush1.xpose.msra.mxu0 0.0
    %115 = vmatprep.subr.mxu0 0.0
    %116 = vmatpush1.xpose.msra.mxu0 0.0
    %117 = vmatprep.subr.mxu0 0.0
    %118 = vmatpush1.xpose.msra.mxu0 0.0
    %119 = vmatprep.subr.mxu0 0.0
    %120 = vmatpush1.xpose.msra.mxu0 0.0
    %121 = vmatprep.subr.mxu0 0.0
    %122 = vmatpush1.xpose.msra.mxu0 0.0
    %123 = vmatprep.subr.mxu0 0.0
    %124 = vmatpush1.xpose.msra.mxu0 0.0
    %125 = vmatprep.subr.mxu0 0.0
    %126 = vmatpush1.xpose.msra.mxu0 0.0
    %127 = vmatprep.subr.mxu0 0.0
    %128 = vmatpush1.xpose.msra.mxu0 0.0
    %129 = vmatprep.mubr.f32.mxu0 0.0
    %130 = vmatmul.mubr.f32.gmra.mrb[0].mxu0 %v16
    %v131 = vpop.f32.mrb[0].mxu0
    %v132 = vadd.f32 0.0, %v131
    %v133 = vpop.f32.mrb[0].mxu0
    %134 = vmatprep.mubr.f32.mxu0 0.0
    %135 = vmatmul.mubr.f32.gmra.mrb[0].mxu0 %v17
    %v136 = vpop.f32.mrb[0].mxu0
    %v137 = vadd.f32 0.0, %v136
    %v138 = vpop.f32.mrb[0].mxu0
    %139 = vmatprep.mubr.f32.mxu0 0.0
    %140 = vmatmul.mubr.f32.gmra.mrb[0].mxu0 %v18
    %v141 = vpop.f32.mrb[0].mxu0
    %v142 = vadd.f32 0.0, %v141
    %v143 = vpop.f32.mrb[0].mxu0
    %144 = vmatprep.mubr.f32.mxu0 0.0
    %145 = vmatmul.mubr.f32.gmra.mrb[0].mxu0 %v19
    %v146 = vpop.f32.mrb[0].mxu0
    %v147 = vadd.f32 0.0, %v146
    %v148 = vpop.f32.mrb[0].mxu0
    %149 = vdwg.mxu0
    %v150 = vand.u32 2147483647, %v132
    %v151 = vand.u32 2147483647, %v137
    %v152 = vand.u32 2147483647, %v142
    %v153 = vand.u32 2147483647, %v147
    %154 = vmax.index.xlane.f32.xlu0 %v150
    %v155 = vpop.xlane.xlu0 %154
    %156 = vmax.index.xlane.f32.xlu0 %v151
    %v157 = vpop.xlane.xlu0 %156
    %158 = vmax.index.xlane.f32.xlu0 %v152
    %v159 = vpop.xlane.xlu0 %158
    %160 = vmax.index.xlane.f32.xlu0 %v153
    %v161 = vpop.xlane.xlu0 %160
    %vm162 = vcmp.eq.s32.totalorder %v25, %v155
    %vm163 = vcmp.eq.s32.totalorder %v25, %v157
    %vm164 = vcmp.eq.s32.totalorder %v25, %v159
    %vm165 = vcmp.eq.s32.totalorder %v25, %v161
    %v166 = vsel %vm162, 1, 0
    %v167 = vsel %vm163, 1, 0
    %v168 = vsel %vm164, 1, 0
    %v169 = vsel %vm165, 1, 0
    %v170 = vcvt.s32.f32 %v166
    %v171 = vcvt.s32.f32 %v167
    %v172 = vcvt.s32.f32 %v168
    %v173 = vcvt.s32.f32 %v169
    %v174 = vmul.f32 %v132, %v170
    %v175 = vmul.f32 %v137, %v171
    %v176 = vmul.f32 %v142, %v172
    %v177 = vmul.f32 %v147, %v173
    %178 = vadd.xlane.f32.xlu0 %v174
    %v179 = vpop.xlane.xlu0 %178
    %180 = vadd.xlane.f32.xlu0 %v175
    %v181 = vpop.xlane.xlu0 %180
    %182 = vadd.xlane.f32.xlu0 %v176
    %v183 = vpop.xlane.xlu0 %182
    %184 = vadd.xlane.f32.xlu0 %v177
    %v185 = vpop.xlane.xlu0 %184
    %v186 = vld [vmem:[#allocation2] sm:$0xff]
    %v187 = vld [vmem:[#allocation2 + $0x8] sm:$0xff]
    %v188 = vld [vmem:[#allocation2 + $0x10] sm:$0xff]
    %v189 = vld [vmem:[#allocation2 + $0x18] sm:$0xff]
    %v190 = vmul.f32 %v170, %v179
    %v191 = vmul.f32 %v171, %v181
    %v192 = vmul.f32 %v172, %v183
    %v193 = vmul.f32 %v173, %v185
    %v194 = vadd.f32 %v186, %v190
    %v195 = vadd.f32 %v187, %v191
    %v196 = vadd.f32 %v188, %v192
    %v197 = vadd.f32 %v189, %v193
    %198 = vst [vmem:[#allocation2] sm:$0xff] %v194
    %199 = vst [vmem:[#allocation2 + $0x8] sm:$0xff] %v195
    %200 = vst [vmem:[#allocation2 + $0x10] sm:$0xff] %v196
    %201 = vst [vmem:[#allocation2 + $0x18] sm:$0xff] %v197
    %v202 = vmul.f32 %v170, %v45
    %v203 = vmul.f32 %v171, %v46
    %v204 = vmul.f32 %v172, %v47
    %v205 = vmul.f32 %v173, %v48
    %v206 = vadd.f32 %v202, %v203
    %v207 = vadd.f32 %v206, %v204
    %v208 = vadd.f32 %v207, %v205
    %v209 = vrot.slane %v208, 4
    %v210 = vadd.f32 %v208, %v209
    %v211 = vrot.slane %v210, 2
    %v212 = vadd.f32 %v210, %v211
    %v213 = vrot.slane %v212, 1
    %v214 = vadd.f32 %v212, %v213
    %v215 = vadd.f32 %v214, 0.0
    %v216 = vld [vmem:[%s1] sm:$0xff]
    %v217 = vld [vmem:[%s1 + $0x8] sm:$0xff]
    %v218 = vld [vmem:[%s1 + $0x10] sm:$0xff]
    %v219 = vld [vmem:[%s1 + $0x18] sm:$0xff]
    %v220 = vld [vmem:[%s1 + $0x20] sm:$0xff]
    %v221 = vld [vmem:[%s1 + $0x28] sm:$0xff]
    %v222 = vld [vmem:[%s1 + $0x30] sm:$0xff]
    %v223 = vld [vmem:[%s1 + $0x38] sm:$0xff]
    %v224 = vld [vmem:[%s1 + $0x40] sm:$0xff]
    %v225 = vld [vmem:[%s1 + $0x48] sm:$0xff]
    %v226 = vld [vmem:[%s1 + $0x50] sm:$0xff]
    %v227 = vld [vmem:[%s1 + $0x58] sm:$0xff]
    %v228 = vld [vmem:[%s1 + $0x60] sm:$0xff]
    %v229 = vld [vmem:[%s1 + $0x68] sm:$0xff]
    %v230 = vld [vmem:[%s1 + $0x70] sm:$0xff]
    %v231 = vld [vmem:[%s1 + $0x78] sm:$0xff]
    %232 = vmatprep.subr.mxu0 0.0
    %233 = vmatpush1.msra.mxu0 %v216
    %234 = vmatprep.subr.mxu0 0.0
    %235 = vmatpush1.msra.mxu0 %v217
    %236 = vmatprep.subr.mxu0 0.0
    %237 = vmatpush1.msra.mxu0 %v218
    %238 = vmatprep.subr.mxu0 0.0
    %239 = vmatpush1.msra.mxu0 %v219
    %240 = vmatprep.subr.mxu0 0.0
    %241 = vmatpush1.msra.mxu0 %v220
    %242 = vmatprep.subr.mxu0 0.0
    %243 = vmatpush1.msra.mxu0 %v221
    %244 = vmatprep.subr.mxu0 0.0
    %245 = vmatpush1.msra.mxu0 %v222
    %246 = vmatprep.subr.mxu0 0.0
    %247 = vmatpush1.msra.mxu0 %v223
    %248 = vmatprep.subr.mxu0 0.0
    %249 = vmatpush1.msra.mxu0 %v224
    %250 = vmatprep.subr.mxu0 0.0
    %251 = vmatpush1.msra.mxu0 %v225
    %252 = vmatprep.subr.mxu0 0.0
    %253 = vmatpush1.msra.mxu0 %v226
    %254 = vmatprep.subr.mxu0 0.0
    %255 = vmatpush1.msra.mxu0 %v227
    %256 = vmatprep.subr.mxu0 0.0
    %257 = vmatpush1.msra.mxu0 %v228
    %258 = vmatprep.subr.mxu0 0.0
    %259 = vmatpush1.msra.mxu0 %v229
    %260 = vmatprep.subr.mxu0 0.0
    %261 = vmatpush1.msra.mxu0 %v230
    %262 = vmatprep.subr.mxu0 0.0
    %263 = vmatpush1.msra.mxu0 %v231
    %264 = vmatprep.subr.mxu0 0.0
    %265 = vmatpush1.msra.mxu0 0.0
    %266 = vmatprep.subr.mxu0 0.0
    %267 = vmatpush1.msra.mxu0 0.0
    %268 = vmatprep.subr.mxu0 0.0
    %269 = vmatpush1.msra.mxu0 0.0
    %270 = vmatprep.subr.mxu0 0.0
    %271 = vmatpush1.msra.mxu0 0.0
    %272 = vmatprep.subr.mxu0 0.0
    %273 = vmatpush1.msra.mxu0 0.0
    %274 = vmatprep.subr.mxu0 0.0
    %275 = vmatpush1.msra.mxu0 0.0
    %276 = vmatprep.subr.mxu0 0.0
    %277 = vmatpush1.msra.mxu0 0.0
    %278 = vmatprep.subr.mxu0 0.0
    %279 = vmatpush1.msra.mxu0 0.0
    %280 = vmatprep.subr.mxu0 0.0
    %281 = vmatpush1.msra.mxu0 0.0
    %282 = vmatprep.subr.mxu0 0.0
    %283 = vmatpush1.msra.mxu0 0.0
    %284 = vmatprep.subr.mxu0 0.0
    %285 = vmatpush1.msra.mxu0 0.0
    %286 = vmatprep.subr.mxu0 0.0
    %287 = vmatpush1.msra.mxu0 0.0
    %288 = vmatprep.subr.mxu0 0.0
    %289 = vmatpush1.msra.mxu0 0.0
    %290 = vmatprep.subr.mxu0 0.0
    %291 = vmatpush1.msra.mxu0 0.0
    %292 = vmatprep.subr.mxu0 0.0
    %293 = vmatpush1.msra.mxu0 0.0
    %294 = vmatprep.subr.mxu0 0.0
    %295 = vmatpush1.msra.mxu0 0.0
    %296 = vmatprep.mubr.f32.mxu0 0.0
    %297 = vmatmul.mubr.f32.gmra.mrb[0].mxu0 %v170
    %v298 = vpop.f32.mrb[0].mxu0
    %v299 = vadd.f32 0.0, %v298
    %v300 = vpop.f32.mrb[0].mxu0
    %301 = vmatprep.mubr.f32.mxu0 0.0
    %302 = vmatmul.mubr.f32.gmra.mrb[0].mxu0 %v171
    %v303 = vpop.f32.mrb[0].mxu0
    %v304 = vadd.f32 0.0, %v303
    %v305 = vpop.f32.mrb[0].mxu0
    %306 = vmatprep.mubr.f32.mxu0 0.0
    %307 = vmatmul.mubr.f32.gmra.mrb[0].mxu0 %v172
    %v308 = vpop.f32.mrb[0].mxu0
    %v309 = vadd.f32 0.0, %v308
    %v310 = vpop.f32.mrb[0].mxu0
    %311 = vmatprep.mubr.f32.mxu0 0.0
    %312 = vmatmul.mubr.f32.gmra.mrb[0].mxu0 %v173
    %v313 = vpop.f32.mrb[0].mxu0
    %v314 = vadd.f32 0.0, %v313
    %v315 = vpop.f32.mrb[0].mxu0
    %316 = vdwg.mxu0
    %v317 = vmul.f32 %v179, %v299
    %v318 = vmul.f32 %v181, %v304
    %v319 = vmul.f32 %v183, %v309
    %v320 = vmul.f32 %v185, %v314
    %v321 = vsub.f32 %v16, %v317
    %v322 = vsub.f32 %v17, %v318
    %v323 = vsub.f32 %v18, %v319
    %v324 = vsub.f32 %v19, %v320
    %325 = vmatprep.subr.mxu0 0.0
    %326 = vmatpush1.xpose.msra.mxu0 %v216
    %327 = vmatprep.subr.mxu0 0.0
    %328 = vmatpush1.xpose.msra.mxu0 %v217
    %329 = vmatprep.subr.mxu0 0.0
    %330 = vmatpush1.xpose.msra.mxu0 %v218
    %331 = vmatprep.subr.mxu0 0.0
    %332 = vmatpush1.xpose.msra.mxu0 %v219
    %333 = vmatprep.subr.mxu0 0.0
    %334 = vmatpush1.xpose.msra.mxu0 %v220
    %335 = vmatprep.subr.mxu0 0.0
    %336 = vmatpush1.xpose.msra.mxu0 %v221
    %337 = vmatprep.subr.mxu0 0.0
    %338 = vmatpush1.xpose.msra.mxu0 %v222
    %339 = vmatprep.subr.mxu0 0.0
    %340 = vmatpush1.xpose.msra.mxu0 %v223
    %341 = vmatprep.subr.mxu0 0.0
    %342 = vmatpush1.xpose.msra.mxu0 %v224
    %343 = vmatprep.subr.mxu0 0.0
    %344 = vmatpush1.xpose.msra.mxu0 %v225
    %345 = vmatprep.subr.mxu0 0.0
    %346 = vmatpush1.xpose.msra.mxu0 %v226
    %347 = vmatprep.subr.mxu0 0.0
    %348 = vmatpush1.xpose.msra.mxu0 %v227
    %349 = vmatprep.subr.mxu0 0.0
    %350 = vmatpush1.xpose.msra.mxu0 %v228
    %351 = vmatprep.subr.mxu0 0.0
    %352 = vmatpush1.xpose.msra.mxu0 %v229
    %353 = vmatprep.subr.mxu0 0.0
    %354 = vmatpush1.xpose.msra.mxu0 %v230
    %355 = vmatprep.subr.mxu0 0.0
    %356 = vmatpush1.xpose.msra.mxu0 %v231
    %357 = vmatprep.subr.mxu0 0.0
    %358 = vmatpush1.xpose.msra.mxu0 0.0
    %359 = vmatprep.subr.mxu0 0.0
    %360 = vmatpush1.xpose.msra.mxu0 0.0
    %361 = vmatprep.subr.mxu0 0.0
    %362 = vmatpush1.xpose.msra.mxu0 0.0
    %363 = vmatprep.subr.mxu0 0.0
    %364 = vmatpush1.xpose.msra.mxu0 0.0
    %365 = vmatprep.subr.mxu0 0.0
    %366 = vmatpush1.xpose.msra.mxu0 0.0
    %367 = vmatprep.subr.mxu0 0.0
    %368 = vmatpush1.xpose.msra.mxu0 0.0
    %369 = vmatprep.subr.mxu0 0.0
    %370 = vmatpush1.xpose.msra.mxu0 0.0
    %371 = vmatprep.subr.mxu0 0.0
    %372 = vmatpush1.xpose.msra.mxu0 0.0
    %373 = vmatprep.subr.mxu0 0.0
    %374 = vmatpush1.xpose.msra.mxu0 0.0
    %375 = vmatprep.subr.mxu0 0.0
    %376 = vmatpush1.xpose.msra.mxu0 0.0
    %377 = vmatprep.subr.mxu0 0.0
    %378 = vmatpush1.xpose.msra.mxu0 0.0
    %379 = vmatprep.subr.mxu0 0.0
    %380 = vmatpush1.xpose.msra.mxu0 0.0
    %381 = vmatprep.subr.mxu0 0.0
    %382 = vmatpush1.xpose.msra.mxu0 0.0
    %383 = vmatprep.subr.mxu0 0.0
    %384 = vmatpush1.xpose.msra.mxu0 0.0
    %385 = vmatprep.subr.mxu0 0.0
    %386 = vmatpush1.xpose.msra.mxu0 0.0
    %387 = vmatprep.subr.mxu0 0.0
    %388 = vmatpush1.xpose.msra.mxu0 0.0
    %389 = vmatprep.mubr.f32.mxu0 0.0
    %390 = vmatmul.mubr.f32.gmra.mrb[0].mxu0 %v321
    %v391 = vpop.f32.mrb[0].mxu0
    %v392 = vadd.f32 0.0, %v391
    %v393 = vpop.f32.mrb[0].mxu0
    %394 = vmatprep.mubr.f32.mxu0 0.0
    %395 = vmatmul.mubr.f32.gmra.mrb[0].mxu0 %v322
    %v396 = vpop.f32.mrb[0].mxu0
    %v397 = vadd.f32 0.0, %v396
    %v398 = vpop.f32.mrb[0].mxu0
    %399 = vmatprep.mubr.f32.mxu0 0.0
    %400 = vmatmul.mubr.f32.gmra.mrb[0].mxu0 %v323
    %v401 = vpop.f32.mrb[0].mxu0
    %v402 = vadd.f32 0.0, %v401
    %v403 = vpop.f32.mrb[0].mxu0
    %404 = vmatprep.mubr.f32.mxu0 0.0
    %405 = vmatmul.mubr.f32.gmra.mrb[0].mxu0 %v324
    %v406 = vpop.f32.mrb[0].mxu0
    %v407 = vadd.f32 0.0, %v406
    %v408 = vpop.f32.mrb[0].mxu0
    %409 = vdwg.mxu0
    %v410 = vand.u32 2147483647, %v392
    %v411 = vand.u32 2147483647, %v397
    %v412 = vand.u32 2147483647, %v402
    %v413 = vand.u32 2147483647, %v407
    %414 = vmax.index.xlane.f32.xlu0 %v410
    %v415 = vpop.xlane.xlu0 %414
    %416 = vmax.index.xlane.f32.xlu0 %v411
    %v417 = vpop.xlane.xlu0 %416
    %418 = vmax.index.xlane.f32.xlu0 %v412
    %v419 = vpop.xlane.xlu0 %418
    %420 = vmax.index.xlane.f32.xlu0 %v413
    %v421 = vpop.xlane.xlu0 %420
    %vm422 = vcmp.eq.s32.totalorder %v25, %v415
    %vm423 = vcmp.eq.s32.totalorder %v25, %v417
    %vm424 = vcmp.eq.s32.totalorder %v25, %v419
    %vm425 = vcmp.eq.s32.totalorder %v25, %v421
    %v426 = vsel %vm422, 1, 0
    %v427 = vsel %vm423, 1, 0
    %v428 = vsel %vm424, 1, 0
    %v429 = vsel %vm425, 1, 0
    %v430 = vcvt.s32.f32 %v426
    %v431 = vcvt.s32.f32 %v427
    %v432 = vcvt.s32.f32 %v428
    %v433 = vcvt.s32.f32 %v429
    %v434 = vmul.f32 %v392, %v430
    %v435 = vmul.f32 %v397, %v431
    %v436 = vmul.f32 %v402, %v432
    %v437 = vmul.f32 %v407, %v433
    %438 = vadd.xlane.f32.xlu0 %v434
    %v439 = vpop.xlane.xlu0 %438
    %440 = vadd.xlane.f32.xlu0 %v435
    %v441 = vpop.xlane.xlu0 %440
    %442 = vadd.xlane.f32.xlu0 %v436
    %v443 = vpop.xlane.xlu0 %442
    %444 = vadd.xlane.f32.xlu0 %v437
    %v445 = vpop.xlane.xlu0 %444
    %v446 = vld [vmem:[#allocation2] sm:$0xff]
    %v447 = vld [vmem:[#allocation2 + $0x8] sm:$0xff]
    %v448 = vld [vmem:[#allocation2 + $0x10] sm:$0xff]
    %v449 = vld [vmem:[#allocation2 + $0x18] sm:$0xff]
    %v450 = vmul.f32 %v430, %v439
    %v451 = vmul.f32 %v431, %v441
    %v452 = vmul.f32 %v432, %v443
    %v453 = vmul.f32 %v433, %v445
    %v454 = vadd.f32 %v446, %v450
    %v455 = vadd.f32 %v447, %v451
    %v456 = vadd.f32 %v448, %v452
    %v457 = vadd.f32 %v449, %v453
    %458 = vst [vmem:[#allocation2] sm:$0xff] %v454
    %459 = vst [vmem:[#allocation2 + $0x8] sm:$0xff] %v455
    %460 = vst [vmem:[#allocation2 + $0x10] sm:$0xff] %v456
    %461 = vst [vmem:[#allocation2 + $0x18] sm:$0xff] %v457
    %v462 = vmul.f32 %v430, %v45
    %v463 = vmul.f32 %v431, %v46
    %v464 = vmul.f32 %v432, %v47
    %v465 = vmul.f32 %v433, %v48
    %v466 = vadd.f32 %v462, %v463
    %v467 = vadd.f32 %v466, %v464
    %v468 = vadd.f32 %v467, %v465
    %v469 = vrot.slane %v468, 4
    %v470 = vadd.f32 %v468, %v469
    %v471 = vrot.slane %v470, 2
    %v472 = vadd.f32 %v470, %v471
    %v473 = vrot.slane %v472, 1
    %v474 = vadd.f32 %v472, %v473
    %v475 = vadd.f32 %v215, %v474
    %v476 = vld [vmem:[%s1] sm:$0xff]
    %v477 = vld [vmem:[%s1 + $0x8] sm:$0xff]
    %v478 = vld [vmem:[%s1 + $0x10] sm:$0xff]
    %v479 = vld [vmem:[%s1 + $0x18] sm:$0xff]
    %v480 = vld [vmem:[%s1 + $0x20] sm:$0xff]
    %v481 = vld [vmem:[%s1 + $0x28] sm:$0xff]
    %v482 = vld [vmem:[%s1 + $0x30] sm:$0xff]
    %v483 = vld [vmem:[%s1 + $0x38] sm:$0xff]
    %v484 = vld [vmem:[%s1 + $0x40] sm:$0xff]
    %v485 = vld [vmem:[%s1 + $0x48] sm:$0xff]
    %v486 = vld [vmem:[%s1 + $0x50] sm:$0xff]
    %v487 = vld [vmem:[%s1 + $0x58] sm:$0xff]
    %v488 = vld [vmem:[%s1 + $0x60] sm:$0xff]
    %v489 = vld [vmem:[%s1 + $0x68] sm:$0xff]
    %v490 = vld [vmem:[%s1 + $0x70] sm:$0xff]
    %v491 = vld [vmem:[%s1 + $0x78] sm:$0xff]
    %492 = vmatprep.subr.mxu0 0.0
    %493 = vmatpush1.msra.mxu0 %v476
    %494 = vmatprep.subr.mxu0 0.0
    %495 = vmatpush1.msra.mxu0 %v477
    %496 = vmatprep.subr.mxu0 0.0
    %497 = vmatpush1.msra.mxu0 %v478
    %498 = vmatprep.subr.mxu0 0.0
    %499 = vmatpush1.msra.mxu0 %v479
    %500 = vmatprep.subr.mxu0 0.0
    %501 = vmatpush1.msra.mxu0 %v480
    %502 = vmatprep.subr.mxu0 0.0
    %503 = vmatpush1.msra.mxu0 %v481
    %504 = vmatprep.subr.mxu0 0.0
    %505 = vmatpush1.msra.mxu0 %v482
    %506 = vmatprep.subr.mxu0 0.0
    %507 = vmatpush1.msra.mxu0 %v483
    %508 = vmatprep.subr.mxu0 0.0
    %509 = vmatpush1.msra.mxu0 %v484
    %510 = vmatprep.subr.mxu0 0.0
    %511 = vmatpush1.msra.mxu0 %v485
    %512 = vmatprep.subr.mxu0 0.0
    %513 = vmatpush1.msra.mxu0 %v486
    %514 = vmatprep.subr.mxu0 0.0
    %515 = vmatpush1.msra.mxu0 %v487
    %516 = vmatprep.subr.mxu0 0.0
    %517 = vmatpush1.msra.mxu0 %v488
    %518 = vmatprep.subr.mxu0 0.0
    %519 = vmatpush1.msra.mxu0 %v489
    %520 = vmatprep.subr.mxu0 0.0
    %521 = vmatpush1.msra.mxu0 %v490
    %522 = vmatprep.subr.mxu0 0.0
    %523 = vmatpush1.msra.mxu0 %v491
    %524 = vmatprep.subr.mxu0 0.0
    %525 = vmatpush1.msra.mxu0 0.0
    %526 = vmatprep.subr.mxu0 0.0
    %527 = vmatpush1.msra.mxu0 0.0
    %528 = vmatprep.subr.mxu0 0.0
    %529 = vmatpush1.msra.mxu0 0.0
    %530 = vmatprep.subr.mxu0 0.0
    %531 = vmatpush1.msra.mxu0 0.0
    %532 = vmatprep.subr.mxu0 0.0
    %533 = vmatpush1.msra.mxu0 0.0
    %534 = vmatprep.subr.mxu0 0.0
    %535 = vmatpush1.msra.mxu0 0.0
    %536 = vmatprep.subr.mxu0 0.0
    %537 = vmatpush1.msra.mxu0 0.0
    %538 = vmatprep.subr.mxu0 0.0
    %539 = vmatpush1.msra.mxu0 0.0
    %540 = vmatprep.subr.mxu0 0.0
    %541 = vmatpush1.msra.mxu0 0.0
    %542 = vmatprep.subr.mxu0 0.0
    %543 = vmatpush1.msra.mxu0 0.0
    %544 = vmatprep.subr.mxu0 0.0
    %545 = vmatpush1.msra.mxu0 0.0
    %546 = vmatprep.subr.mxu0 0.0
    %547 = vmatpush1.msra.mxu0 0.0
    %548 = vmatprep.subr.mxu0 0.0
    %549 = vmatpush1.msra.mxu0 0.0
    %550 = vmatprep.subr.mxu0 0.0
    %551 = vmatpush1.msra.mxu0 0.0
    %552 = vmatprep.subr.mxu0 0.0
    %553 = vmatpush1.msra.mxu0 0.0
    %554 = vmatprep.subr.mxu0 0.0
    %555 = vmatpush1.msra.mxu0 0.0
    %556 = vmatprep.mubr.f32.mxu0 0.0
    %557 = vmatmul.mubr.f32.gmra.mrb[0].mxu0 %v430
    %v558 = vpop.f32.mrb[0].mxu0
    %v559 = vadd.f32 0.0, %v558
    %v560 = vpop.f32.mrb[0].mxu0
    %561 = vmatprep.mubr.f32.mxu0 0.0
    %562 = vmatmul.mubr.f32.gmra.mrb[0].mxu0 %v431
    %v563 = vpop.f32.mrb[0].mxu0
    %v564 = vadd.f32 0.0, %v563
    %v565 = vpop.f32.mrb[0].mxu0
    %566 = vmatprep.mubr.f32.mxu0 0.0
    %567 = vmatmul.mubr.f32.gmra.mrb[0].mxu0 %v432
    %v568 = vpop.f32.mrb[0].mxu0
    %v569 = vadd.f32 0.0, %v568
    %v570 = vpop.f32.mrb[0].mxu0
    %571 = vmatprep.mubr.f32.mxu0 0.0
    %572 = vmatmul.mubr.f32.gmra.mrb[0].mxu0 %v433
    %v573 = vpop.f32.mrb[0].mxu0
    %v574 = vadd.f32 0.0, %v573
    %v575 = vpop.f32.mrb[0].mxu0
    %576 = vdwg.mxu0
    %v577 = vmul.f32 %v439, %v559
    %v578 = vmul.f32 %v441, %v564
    %v579 = vmul.f32 %v443, %v569
    %v580 = vmul.f32 %v445, %v574
    %v581 = vsub.f32 %v321, %v577
    %v582 = vsub.f32 %v322, %v578
    %v583 = vsub.f32 %v323, %v579
    %v584 = vsub.f32 %v324, %v580
    %585 = vmatprep.subr.mxu0 0.0
    %586 = vmatpush1.xpose.msra.mxu0 %v476
    %587 = vmatprep.subr.mxu0 0.0
    %588 = vmatpush1.xpose.msra.mxu0 %v477
    %589 = vmatprep.subr.mxu0 0.0
    %590 = vmatpush1.xpose.msra.mxu0 %v478
    %591 = vmatprep.subr.mxu0 0.0
    %592 = vmatpush1.xpose.msra.mxu0 %v479
    %593 = vmatprep.subr.mxu0 0.0
    %594 = vmatpush1.xpose.msra.mxu0 %v480
    %595 = vmatprep.subr.mxu0 0.0
    %596 = vmatpush1.xpose.msra.mxu0 %v481
    %597 = vmatprep.subr.mxu0 0.0
    %598 = vmatpush1.xpose.msra.mxu0 %v482
    %599 = vmatprep.subr.mxu0 0.0
    %600 = vmatpush1.xpose.msra.mxu0 %v483
    %601 = vmatprep.subr.mxu0 0.0
    %602 = vmatpush1.xpose.msra.mxu0 %v484
    %603 = vmatprep.subr.mxu0 0.0
    %604 = vmatpush1.xpose.msra.mxu0 %v485
    %605 = vmatprep.subr.mxu0 0.0
    %606 = vmatpush1.xpose.msra.mxu0 %v486
    %607 = vmatprep.subr.mxu0 0.0
    %608 = vmatpush1.xpose.msra.mxu0 %v487
    %609 = vmatprep.subr.mxu0 0.0
    %610 = vmatpush1.xpose.msra.mxu0 %v488
    %611 = vmatprep.subr.mxu0 0.0
    %612 = vmatpush1.xpose.msra.mxu0 %v489
    %613 = vmatprep.subr.mxu0 0.0
    %614 = vmatpush1.xpose.msra.mxu0 %v490
    %615 = vmatprep.subr.mxu0 0.0
    %616 = vmatpush1.xpose.msra.mxu0 %v491
    %617 = vmatprep.subr.mxu0 0.0
    %618 = vmatpush1.xpose.msra.mxu0 0.0
    %619 = vmatprep.subr.mxu0 0.0
    %620 = vmatpush1.xpose.msra.mxu0 0.0
    %621 = vmatprep.subr.mxu0 0.0
    %622 = vmatpush1.xpose.msra.mxu0 0.0
    %623 = vmatprep.subr.mxu0 0.0
    %624 = vmatpush1.xpose.msra.mxu0 0.0
    %625 = vmatprep.subr.mxu0 0.0
    %626 = vmatpush1.xpose.msra.mxu0 0.0
    %627 = vmatprep.subr.mxu0 0.0
    %628 = vmatpush1.xpose.msra.mxu0 0.0
    %629 = vmatprep.subr.mxu0 0.0
    %630 = vmatpush1.xpose.msra.mxu0 0.0
    %631 = vmatprep.subr.mxu0 0.0
    %632 = vmatpush1.xpose.msra.mxu0 0.0
    %633 = vmatprep.subr.mxu0 0.0
    %634 = vmatpush1.xpose.msra.mxu0 0.0
    %635 = vmatprep.subr.mxu0 0.0
    %636 = vmatpush1.xpose.msra.mxu0 0.0
    %637 = vmatprep.subr.mxu0 0.0
    %638 = vmatpush1.xpose.msra.mxu0 0.0
    %639 = vmatprep.subr.mxu0 0.0
    %640 = vmatpush1.xpose.msra.mxu0 0.0
    %641 = vmatprep.subr.mxu0 0.0
    %642 = vmatpush1.xpose.msra.mxu0 0.0
    %643 = vmatprep.subr.mxu0 0.0
    %644 = vmatpush1.xpose.msra.mxu0 0.0
    %645 = vmatprep.subr.mxu0 0.0
    %646 = vmatpush1.xpose.msra.mxu0 0.0
    %647 = vmatprep.subr.mxu0 0.0
    %648 = vmatpush1.xpose.msra.mxu0 0.0
    %649 = vmatprep.mubr.f32.mxu0 0.0
    %650 = vmatmul.mubr.f32.gmra.mrb[0].mxu0 %v581
    %v651 = vpop.f32.mrb[0].mxu0
    %v652 = vadd.f32 0.0, %v651
    %v653 = vpop.f32.mrb[0].mxu0
    %654 = vmatprep.mubr.f32.mxu0 0.0
    %655 = vmatmul.mubr.f32.gmra.mrb[0].mxu0 %v582
    %v656 = vpop.f32.mrb[0].mxu0
    %v657 = vadd.f32 0.0, %v656
    %v658 = vpop.f32.mrb[0].mxu0
    %659 = vmatprep.mubr.f32.mxu0 0.0
    %660 = vmatmul.mubr.f32.gmra.mrb[0].mxu0 %v583
    %v661 = vpop.f32.mrb[0].mxu0
    %v662 = vadd.f32 0.0, %v661
    %v663 = vpop.f32.mrb[0].mxu0
    %664 = vmatprep.mubr.f32.mxu0 0.0
    %665 = vmatmul.mubr.f32.gmra.mrb[0].mxu0 %v584
    %v666 = vpop.f32.mrb[0].mxu0
    %v667 = vadd.f32 0.0, %v666
    %v668 = vpop.f32.mrb[0].mxu0
    %669 = vdwg.mxu0
    %v670 = vand.u32 2147483647, %v652
    %v671 = vand.u32 2147483647, %v657
    %v672 = vand.u32 2147483647, %v662
    %v673 = vand.u32 2147483647, %v667
    %674 = vmax.index.xlane.f32.xlu0 %v670
    %v675 = vpop.xlane.xlu0 %674
    %676 = vmax.index.xlane.f32.xlu0 %v671
    %v677 = vpop.xlane.xlu0 %676
    %678 = vmax.index.xlane.f32.xlu0 %v672
    %v679 = vpop.xlane.xlu0 %678
    %680 = vmax.index.xlane.f32.xlu0 %v673
    %v681 = vpop.xlane.xlu0 %680
    %vm682 = vcmp.eq.s32.totalorder %v25, %v675
    %vm683 = vcmp.eq.s32.totalorder %v25, %v677
    %vm684 = vcmp.eq.s32.totalorder %v25, %v679
    %vm685 = vcmp.eq.s32.totalorder %v25, %v681
    %v686 = vsel %vm682, 1, 0
    %v687 = vsel %vm683, 1, 0
    %v688 = vsel %vm684, 1, 0
    %v689 = vsel %vm685, 1, 0
    %v690 = vcvt.s32.f32 %v686
    %v691 = vcvt.s32.f32 %v687
    %v692 = vcvt.s32.f32 %v688
    %v693 = vcvt.s32.f32 %v689
    %v694 = vmul.f32 %v652, %v690
    %v695 = vmul.f32 %v657, %v691
    %v696 = vmul.f32 %v662, %v692
    %v697 = vmul.f32 %v667, %v693
    %698 = vadd.xlane.f32.xlu0 %v694
    %v699 = vpop.xlane.xlu0 %698
    %700 = vadd.xlane.f32.xlu0 %v695
    %v701 = vpop.xlane.xlu0 %700
    %702 = vadd.xlane.f32.xlu0 %v696
    %v703 = vpop.xlane.xlu0 %702
    %704 = vadd.xlane.f32.xlu0 %v697
    %v705 = vpop.xlane.xlu0 %704
    %v706 = vld [vmem:[#allocation2] sm:$0xff]
    %v707 = vld [vmem:[#allocation2 + $0x8] sm:$0xff]
    %v708 = vld [vmem:[#allocation2 + $0x10] sm:$0xff]
    %v709 = vld [vmem:[#allocation2 + $0x18] sm:$0xff]
    %v710 = vmul.f32 %v690, %v699
    %v711 = vmul.f32 %v691, %v701
    %v712 = vmul.f32 %v692, %v703
    %v713 = vmul.f32 %v693, %v705
    %v714 = vadd.f32 %v706, %v710
    %v715 = vadd.f32 %v707, %v711
    %v716 = vadd.f32 %v708, %v712
    %v717 = vadd.f32 %v709, %v713
    %718 = vst [vmem:[#allocation2] sm:$0xff] %v714
    %719 = vst [vmem:[#allocation2 + $0x8] sm:$0xff] %v715
    %720 = vst [vmem:[#allocation2 + $0x10] sm:$0xff] %v716
    %721 = vst [vmem:[#allocation2 + $0x18] sm:$0xff] %v717
    %v722 = vmul.f32 %v690, %v45
    %v723 = vmul.f32 %v691, %v46
    %v724 = vmul.f32 %v692, %v47
    %v725 = vmul.f32 %v693, %v48
    %v726 = vadd.f32 %v722, %v723
    %v727 = vadd.f32 %v726, %v724
    %v728 = vadd.f32 %v727, %v725
    %v729 = vrot.slane %v728, 4
    %v730 = vadd.f32 %v728, %v729
    %v731 = vrot.slane %v730, 2
    %v732 = vadd.f32 %v730, %v731
    %v733 = vrot.slane %v732, 1
    %v734 = vadd.f32 %v732, %v733
    %v735 = vadd.f32 %v475, %v734
    %v736 = vld [vmem:[%s1] sm:$0xff]
    %v737 = vld [vmem:[%s1 + $0x8] sm:$0xff]
    %v738 = vld [vmem:[%s1 + $0x10] sm:$0xff]
    %v739 = vld [vmem:[%s1 + $0x18] sm:$0xff]
    %v740 = vld [vmem:[%s1 + $0x20] sm:$0xff]
    %v741 = vld [vmem:[%s1 + $0x28] sm:$0xff]
    %v742 = vld [vmem:[%s1 + $0x30] sm:$0xff]
    %v743 = vld [vmem:[%s1 + $0x38] sm:$0xff]
    %v744 = vld [vmem:[%s1 + $0x40] sm:$0xff]
    %v745 = vld [vmem:[%s1 + $0x48] sm:$0xff]
    %v746 = vld [vmem:[%s1 + $0x50] sm:$0xff]
    %v747 = vld [vmem:[%s1 + $0x58] sm:$0xff]
    %v748 = vld [vmem:[%s1 + $0x60] sm:$0xff]
    %v749 = vld [vmem:[%s1 + $0x68] sm:$0xff]
    %v750 = vld [vmem:[%s1 + $0x70] sm:$0xff]
    %v751 = vld [vmem:[%s1 + $0x78] sm:$0xff]
    %752 = vmatprep.subr.mxu0 0.0
    %753 = vmatpush1.msra.mxu0 %v736
    %754 = vmatprep.subr.mxu0 0.0
    %755 = vmatpush1.msra.mxu0 %v737
    %756 = vmatprep.subr.mxu0 0.0
    %757 = vmatpush1.msra.mxu0 %v738
    %758 = vmatprep.subr.mxu0 0.0
    %759 = vmatpush1.msra.mxu0 %v739
    %760 = vmatprep.subr.mxu0 0.0
    %761 = vmatpush1.msra.mxu0 %v740
    %762 = vmatprep.subr.mxu0 0.0
    %763 = vmatpush1.msra.mxu0 %v741
    %764 = vmatprep.subr.mxu0 0.0
    %765 = vmatpush1.msra.mxu0 %v742
    %766 = vmatprep.subr.mxu0 0.0
    %767 = vmatpush1.msra.mxu0 %v743
    %768 = vmatprep.subr.mxu0 0.0
    %769 = vmatpush1.msra.mxu0 %v744
    %770 = vmatprep.subr.mxu0 0.0
    %771 = vmatpush1.msra.mxu0 %v745
    %772 = vmatprep.subr.mxu0 0.0
    %773 = vmatpush1.msra.mxu0 %v746
    %774 = vmatprep.subr.mxu0 0.0
    %775 = vmatpush1.msra.mxu0 %v747
    %776 = vmatprep.subr.mxu0 0.0
    %777 = vmatpush1.msra.mxu0 %v748
    %778 = vmatprep.subr.mxu0 0.0
    %779 = vmatpush1.msra.mxu0 %v749
    %780 = vmatprep.subr.mxu0 0.0
    %781 = vmatpush1.msra.mxu0 %v750
    %782 = vmatprep.subr.mxu0 0.0
    %783 = vmatpush1.msra.mxu0 %v751
    %784 = vmatprep.subr.mxu0 0.0
    %785 = vmatpush1.msra.mxu0 0.0
    %786 = vmatprep.subr.mxu0 0.0
    %787 = vmatpush1.msra.mxu0 0.0
    %788 = vmatprep.subr.mxu0 0.0
    %789 = vmatpush1.msra.mxu0 0.0
    %790 = vmatprep.subr.mxu0 0.0
    %791 = vmatpush1.msra.mxu0 0.0
    %792 = vmatprep.subr.mxu0 0.0
    %793 = vmatpush1.msra.mxu0 0.0
    %794 = vmatprep.subr.mxu0 0.0
    %795 = vmatpush1.msra.mxu0 0.0
    %796 = vmatprep.subr.mxu0 0.0
    %797 = vmatpush1.msra.mxu0 0.0
    %798 = vmatprep.subr.mxu0 0.0
    %799 = vmatpush1.msra.mxu0 0.0
    %800 = vmatprep.subr.mxu0 0.0
    %801 = vmatpush1.msra.mxu0 0.0
    %802 = vmatprep.subr.mxu0 0.0
    %803 = vmatpush1.msra.mxu0 0.0
    %804 = vmatprep.subr.mxu0 0.0
    %805 = vmatpush1.msra.mxu0 0.0
    %806 = vmatprep.subr.mxu0 0.0
    %807 = vmatpush1.msra.mxu0 0.0
    %808 = vmatprep.subr.mxu0 0.0
    %809 = vmatpush1.msra.mxu0 0.0
    %810 = vmatprep.subr.mxu0 0.0
    %811 = vmatpush1.msra.mxu0 0.0
    %812 = vmatprep.subr.mxu0 0.0
    %813 = vmatpush1.msra.mxu0 0.0
    %814 = vmatprep.subr.mxu0 0.0
    %815 = vmatpush1.msra.mxu0 0.0
    %816 = vmatprep.mubr.f32.mxu0 0.0
    %817 = vmatmul.mubr.f32.gmra.mrb[0].mxu0 %v690
    %v818 = vpop.f32.mrb[0].mxu0
    %v819 = vadd.f32 0.0, %v818
    %v820 = vpop.f32.mrb[0].mxu0
    %821 = vmatprep.mubr.f32.mxu0 0.0
    %822 = vmatmul.mubr.f32.gmra.mrb[0].mxu0 %v691
    %v823 = vpop.f32.mrb[0].mxu0
    %v824 = vadd.f32 0.0, %v823
    %v825 = vpop.f32.mrb[0].mxu0
    %826 = vmatprep.mubr.f32.mxu0 0.0
    %827 = vmatmul.mubr.f32.gmra.mrb[0].mxu0 %v692
    %v828 = vpop.f32.mrb[0].mxu0
    %v829 = vadd.f32 0.0, %v828
    %v830 = vpop.f32.mrb[0].mxu0
    %831 = vmatprep.mubr.f32.mxu0 0.0
    %832 = vmatmul.mubr.f32.gmra.mrb[0].mxu0 %v693
    %v833 = vpop.f32.mrb[0].mxu0
    %v834 = vadd.f32 0.0, %v833
    %v835 = vpop.f32.mrb[0].mxu0
    %836 = vdwg.mxu0
    %v837 = vmul.f32 %v699, %v819
    %v838 = vmul.f32 %v701, %v824
    %v839 = vmul.f32 %v703, %v829
    %v840 = vmul.f32 %v705, %v834
    %v841 = vsub.f32 %v581, %v837
    %v842 = vsub.f32 %v582, %v838
    %v843 = vsub.f32 %v583, %v839
    %v844 = vsub.f32 %v584, %v840
    %v845 = vld [vmem:[%s0] sm:$0xff]
    %v846 = vld [vmem:[%s0 + $0x8] sm:$0xff]
    %v847 = vld [vmem:[%s0 + $0x10] sm:$0xff]
    %v848 = vld [vmem:[%s0 + $0x18] sm:$0xff]
    %v849 = vsub.f32 %v845, %v841
    %v850 = vsub.f32 %v846, %v842
    %v851 = vsub.f32 %v847, %v843
    %v852 = vsub.f32 %v848, %v844
    %853 = vst [vmem:[%s2] sm:$0xff] %v849
    %854 = vst [vmem:[%s2 + $0x8] sm:$0xff] %v850
    %855 = vst [vmem:[%s2 + $0x10] sm:$0xff] %v851
    %856 = vst [vmem:[%s2 + $0x18] sm:$0xff] %v852
    %v857 = vmul.f32 %v841, %v841
    %v858 = vmul.f32 %v842, %v842
    %v859 = vmul.f32 %v843, %v843
    %v860 = vmul.f32 %v844, %v844
    %v861 = vadd.f32 %v857, %v858
    %v862 = vadd.f32 %v861, %v859
    %v863 = vadd.f32 %v862, %v860
    %864 = vadd.xlane.f32.xlu0 %v863
    %v865 = vpop.xlane.xlu0 %864
    %v866 = vrot.slane %v865, 4
    %v867 = vadd.f32 %v865, %v866
    %v868 = vrot.slane %v867, 2
    %v869 = vadd.f32 %v867, %v868
    %v870 = vrot.slane %v869, 1
    %v871 = vadd.f32 %v869, %v870
    %s872 = vtos %v871
    %vm873 = vcmp.eq.s32.totalorder %v28, 0
    %v874 = vsel %vm873, %v735, 0.0
    %875 = vst [vmem:[%s4] sm:$0xff] %v874
    %vm876 = vcmp.eq.s32.totalorder %v25, 0
    %vm877 = vmand %vm873, %vm876
    %v878 = vstv %s872
    %v879 = vsel %vm877, %v878, 0.0
    %880 = vst [vmem:[%s5] sm:$0xff] %v879
    // Predicated region
    $region10: #{dlgan_forward.24} parent=1 // pred_check
      _
    $region11: #{dlgan_forward.24} parent=1 // pred_check_branch
      %882 = sbr.rel (0) target = $region13
    $region12: #{dlgan_forward.24} parent=1 // pred_region
      _
    $region13: #{dlgan_forward.24} parent=1 // pred_fallthru
      _
    // Predicated region
    $region14: #{dlgan_forward.24} parent=1 // pred_check
      _
    $region15: #{dlgan_forward.24} parent=1 // pred_check_branch
      %884 = sbr.rel (0) target = $region17
    $region16: #{dlgan_forward.24} parent=1 // pred_region
      %s886 = ssub.s32 512, 512
      %887 = vsyncadd [#allocation3], %s886
      %s888 = sshll.u32 [#allocation2], 4
      %s889 = int_to_ptr.vmem [resolvable:$true] %s888
      %894 = dma.vmem_to_hbm [thread:$0]  %s889, 512, %s3, [#allocation3], 128, 128, 8
    $region17: #{dlgan_forward.24} parent=1 // pred_fallthru
      _
    // Predicated region
    $region18: #{dlgan_forward.24} parent=1 // pred_check
      _
    $region19: #{dlgan_forward.24} parent=1 // pred_check_branch
      %896 = sbr.rel (0) target = $region21
    $region20: #{dlgan_forward.24} parent=1 // pred_region
      _
    $region21: #{dlgan_forward.24} parent=1 // pred_fallthru
      _
    // Predicated region
    $region22: #{dlgan_forward.24} parent=1 // pred_check
      _
    $region23: #{dlgan_forward.24} parent=1 // pred_check_branch
      %898 = sbr.rel (0) target = $region25
    $region24: #{dlgan_forward.24} parent=1 // pred_region
      _
    $region25: #{dlgan_forward.24} parent=1 // pred_fallthru
      _
    // Predicated region
    $region26: #{dlgan_forward.24} parent=1 // pred_check
      _
    $region27: #{dlgan_forward.24} parent=1 // pred_check_branch
      %900 = sbr.rel (0) target = $region29
    $region28: #{dlgan_forward.24} parent=1 // pred_region
      _
    $region29: #{dlgan_forward.24} parent=1 // pred_fallthru
      _
    // Predicated region
    $region30: #{dlgan_forward.24} parent=1 // pred_check
      _
    $region31: #{dlgan_forward.24} parent=1 // pred_check_branch
      %902 = sbr.rel (0) target = $region33
    $region32: #{dlgan_forward.24} parent=1 // pred_region
      %903 = dma.done [#allocation3], 512
    $region33: #{dlgan_forward.24} parent=1 // pred_fallthru
      _
    // Predicated region
    $region34: #{dlgan_forward.24} parent=1 // pred_check
      _
    $region35: #{dlgan_forward.24} parent=1 // pred_check_branch
      %905 = sbr.rel (0) target = $region37
    $region36: #{dlgan_forward.24} parent=1 // pred_region
      _
    $region37: #{dlgan_forward.24} parent=1 // pred_fallthru
      _
    // Predicated region
    $region38: #{dlgan_forward.24} parent=1 // pred_check
      _
    $region39: #{dlgan_forward.24} parent=1 // pred_check_branch
      %907 = sbr.rel (0) target = $region41
    $region40: #{dlgan_forward.24} parent=1 // pred_region
      _
    $region41: #{dlgan_forward.24} parent=1 // pred_fallthru
      _
    %908 = vsyncpa [#allocation3], 1

// kernel: dlgan_forward.31
$region0: #{dlgan_forward.31}
  #allocation0 [shape = 'u32[]', space=smem, size = 0x4, offset = 0x4, fixed_abs, tag = 'smem constant byte address 0x4 - core index']
  #allocation1 [shape = 'u32[144,128]{1,0:T(1,128)}', space=vmem, size = 0x12000, scoped, tag = 'internal scratch']
  %s0 = inlined_call_operand.vmem [shape: bf16[128,256], index: 0, kind: input, shape index: {}]
  %s1 = inlined_call_operand.vmem [shape: bf16[256,128], index: 1, kind: input, shape index: {}]
  %s2 = inlined_call_operand.vmem [shape: f32[1,128], index: 2, kind: input, shape index: {}]
  %s3 = inlined_call_operand.vmem [shape: f32[128,128], index: 3, kind: output, shape index: {}]
  %s4 = sld [smem:[#allocation0]]
  $region30: #{dlgan_forward.31} parent=0
    _
  %s6 = ssub.s32 1, %s4
  %s7 = scalar_select 0, %s6, %s4
  // Predicated region
  $region2: #{dlgan_forward.31} parent=0 // pred_check
    _
  $region3: #{dlgan_forward.31} parent=0 // pred_check_branch
    %9 = sbr.rel (0) target = $region5
  $region4: #{dlgan_forward.31} parent=0 // pred_region
    _
  $region5: #{dlgan_forward.31} parent=0 // pred_fallthru
    _
  // Predicated region
  $region6: #{dlgan_forward.31} parent=0 // pred_check
    _
  $region7: #{dlgan_forward.31} parent=0 // pred_check_branch
    %11 = sbr.rel (0) target = $region9
  $region8: #{dlgan_forward.31} parent=0 // pred_region
    _
  $region9: #{dlgan_forward.31} parent=0 // pred_fallthru
    _
  // Predicated region
  $region10: #{dlgan_forward.31} parent=0 // pred_check
    _
  $region11: #{dlgan_forward.31} parent=0 // pred_check_branch
    %13 = sbr.rel (0) target = $region13
  $region12: #{dlgan_forward.31} parent=0 // pred_region
    _
  $region13: #{dlgan_forward.31} parent=0 // pred_fallthru
    _
  %p15 = scmp.eq.s32.totalorder 0, 0
  // Predicated region
  $region14: #{dlgan_forward.31} parent=0 // pred_check
    %p16 = pneg %p15
  $region15: #{dlgan_forward.31} parent=0 // pred_check_branch
    %18 = sbr.rel (%p16) target = $region17
  $region16: #{dlgan_forward.31} parent=0 // pred_region
    %19 = vst [vmem:[%s3] sm:$0xff] 0.0
    %20 = vst [vmem:[%s3 + $0x8] sm:$0xff] 0.0
    %21 = vst [vmem:[%s3 + $0x10] sm:$0xff] 0.0
    %22 = vst [vmem:[%s3 + $0x18] sm:$0xff] 0.0
    %23 = vst [vmem:[%s3 + $0x20] sm:$0xff] 0.0
    %24 = vst [vmem:[%s3 + $0x28] sm:$0xff] 0.0
    %25 = vst [vmem:[%s3 + $0x30] sm:$0xff] 0.0
    %26 = vst [vmem:[%s3 + $0x38] sm:$0xff] 0.0
    %27 = vst [vmem:[%s3 + $0x40] sm:$0xff] 0.0
    %28 = vst [vmem:[%s3 + $0x48] sm:$0xff] 0.0
    %29 = vst [vmem:[%s3 + $0x50] sm:$0xff] 0.0
    %30 = vst [vmem:[%s3 + $0x58] sm:$0xff] 0.0
    %31 = vst [vmem:[%s3 + $0x60] sm:$0xff] 0.0
    %32 = vst [vmem:[%s3 + $0x68] sm:$0xff] 0.0
    %33 = vst [vmem:[%s3 + $0x70] sm:$0xff] 0.0
    %34 = vst [vmem:[%s3 + $0x78] sm:$0xff] 0.0
  $region17: #{dlgan_forward.31} parent=0 // pred_fallthru
    _
  %v35 = vld [vmem:[%s0] sm:$0xff]
  %v36 = vld [vmem:[%s0 + $0x8] sm:$0xff]
  %v37 = vld [vmem:[%s0 + $0x10] sm:$0xff]
  %v38 = vld [vmem:[%s0 + $0x18] sm:$0xff]
  %v39 = vld [vmem:[%s0 + $0x20] sm:$0xff]
  %v40 = vld [vmem:[%s0 + $0x28] sm:$0xff]
  %v41 = vld [vmem:[%s0 + $0x30] sm:$0xff]
  %v42 = vld [vmem:[%s0 + $0x38] sm:$0xff]
  %v43 = vld [vmem:[%s0 + $0x40] sm:$0xff]
  %v44 = vld [vmem:[%s0 + $0x48] sm:$0xff]
  %v45 = vld [vmem:[%s0 + $0x50] sm:$0xff]
  %v46 = vld [vmem:[%s0 + $0x58] sm:$0xff]
  %v47 = vld [vmem:[%s0 + $0x60] sm:$0xff]
  %v48 = vld [vmem:[%s0 + $0x68] sm:$0xff]
  %v49 = vld [vmem:[%s0 + $0x70] sm:$0xff]
  %v50 = vld [vmem:[%s0 + $0x78] sm:$0xff]
  %v51 = vld [vmem:[%s3] sm:$0xff]
  %v52 = vld [vmem:[%s3 + $0x8] sm:$0xff]
  %v53 = vld [vmem:[%s3 + $0x10] sm:$0xff]
  %v54 = vld [vmem:[%s3 + $0x18] sm:$0xff]
  %v55 = vld [vmem:[%s3 + $0x20] sm:$0xff]
  %v56 = vld [vmem:[%s3 + $0x28] sm:$0xff]
  %v57 = vld [vmem:[%s3 + $0x30] sm:$0xff]
  %v58 = vld [vmem:[%s3 + $0x38] sm:$0xff]
  %v59 = vld [vmem:[%s3 + $0x40] sm:$0xff]
  %v60 = vld [vmem:[%s3 + $0x48] sm:$0xff]
  %v61 = vld [vmem:[%s3 + $0x50] sm:$0xff]
  %v62 = vld [vmem:[%s3 + $0x58] sm:$0xff]
  %v63 = vld [vmem:[%s3 + $0x60] sm:$0xff]
  %v64 = vld [vmem:[%s3 + $0x68] sm:$0xff]
  %v65 = vld [vmem:[%s3 + $0x70] sm:$0xff]
  %v66 = vld [vmem:[%s3 + $0x78] sm:$0xff]
  %v67 = vld [vmem:[%s1] sm:$0xf]
  %v68 = vld [vmem:[%s1 + $0x4] sm:$0xf]
  %v69 = vld [vmem:[%s1 + $0x8] sm:$0xf]
  %v70 = vld [vmem:[%s1 + $0xc] sm:$0xf]
  %v71 = vld [vmem:[%s1 + $0x10] sm:$0xf]
  %v72 = vld [vmem:[%s1 + $0x14] sm:$0xf]
  %v73 = vld [vmem:[%s1 + $0x18] sm:$0xf]
  %v74 = vld [vmem:[%s1 + $0x1c] sm:$0xf]
  %v75 = vld [vmem:[%s1 + $0x20] sm:$0xf]
  %v76 = vld [vmem:[%s1 + $0x24] sm:$0xf]
  %v77 = vld [vmem:[%s1 + $0x28] sm:$0xf]
  %v78 = vld [vmem:[%s1 + $0x2c] sm:$0xf]
  %v79 = vld [vmem:[%s1 + $0x30] sm:$0xf]
  %v80 = vld [vmem:[%s1 + $0x34] sm:$0xf]
  %v81 = vld [vmem:[%s1 + $0x38] sm:$0xf]
  %v82 = vld [vmem:[%s1 + $0x3c] sm:$0xf]
  %v83 = vld [vmem:[%s1 + $0x40] sm:$0xf]
  %v84 = vld [vmem:[%s1 + $0x44] sm:$0xf]
  %v85 = vld [vmem:[%s1 + $0x48] sm:$0xf]
  %v86 = vld [vmem:[%s1 + $0x4c] sm:$0xf]
  %v87 = vld [vmem:[%s1 + $0x50] sm:$0xf]
  %v88 = vld [vmem:[%s1 + $0x54] sm:$0xf]
  %v89 = vld [vmem:[%s1 + $0x58] sm:$0xf]
  %v90 = vld [vmem:[%s1 + $0x5c] sm:$0xf]
  %v91 = vld [vmem:[%s1 + $0x60] sm:$0xf]
  %v92 = vld [vmem:[%s1 + $0x64] sm:$0xf]
  %v93 = vld [vmem:[%s1 + $0x68] sm:$0xf]
  %v94 = vld [vmem:[%s1 + $0x6c] sm:$0xf]
  %v95 = vld [vmem:[%s1 + $0x70] sm:$0xf]
  %v96 = vld [vmem:[%s1 + $0x74] sm:$0xf]
  %v97 = vld [vmem:[%s1 + $0x78] sm:$0xf]
  %v98 = vld [vmem:[%s1 + $0x7c] sm:$0xf]
  %v115 = vunpack.c.l.b16 %v35
  %v116 = vunpack.c.h.b16 %v35
  %v117 = vunpack.c.l.b16 %v36
  %v118 = vunpack.c.h.b16 %v36
  %v119 = vunpack.c.l.b16 %v37
  %v120 = vunpack.c.h.b16 %v37
  %v121 = vunpack.c.l.b16 %v38
  %v122 = vunpack.c.h.b16 %v38
  %v123 = vunpack.c.l.b16 %v39
  %v124 = vunpack.c.h.b16 %v39
  %v125 = vunpack.c.l.b16 %v40
  %v126 = vunpack.c.h.b16 %v40
  %v127 = vunpack.c.l.b16 %v41
  %v128 = vunpack.c.h.b16 %v41
  %v129 = vunpack.c.l.b16 %v42
  %v130 = vunpack.c.h.b16 %v42
  %v131 = vunpack.c.l.b16 %v43
  %v132 = vunpack.c.h.b16 %v43
  %v133 = vunpack.c.l.b16 %v44
  %v134 = vunpack.c.h.b16 %v44
  %v135 = vunpack.c.l.b16 %v45
  %v136 = vunpack.c.h.b16 %v45
  %v137 = vunpack.c.l.b16 %v46
  %v138 = vunpack.c.h.b16 %v46
  %v139 = vunpack.c.l.b16 %v47
  %v140 = vunpack.c.h.b16 %v47
  %v141 = vunpack.c.l.b16 %v48
  %v142 = vunpack.c.h.b16 %v48
  %v143 = vunpack.c.l.b16 %v49
  %v144 = vunpack.c.h.b16 %v49
  %v145 = vunpack.c.l.b16 %v50
  %v146 = vunpack.c.h.b16 %v50
  %v147 = vpack.c.b16 %v117, %v115
  %v148 = vpack.c.b16 %v118, %v116
  %v149 = vpack.c.b16 %v121, %v119
  %v150 = vpack.c.b16 %v122, %v120
  %v151 = vpack.c.b16 %v125, %v123
  %v152 = vpack.c.b16 %v126, %v124
  %v153 = vpack.c.b16 %v129, %v127
  %v154 = vpack.c.b16 %v130, %v128
  %v155 = vpack.c.b16 %v133, %v131
  %v156 = vpack.c.b16 %v134, %v132
  %v157 = vpack.c.b16 %v137, %v135
  %v158 = vpack.c.b16 %v138, %v136
  %v159 = vpack.c.b16 %v141, %v139
  %v160 = vpack.c.b16 %v142, %v140
  %v161 = vpack.c.b16 %v145, %v143
  %v162 = vpack.c.b16 %v146, %v144
  %v211 = vunpack.c.l.b16 %v67
  %v212 = vunpack.c.l.b16 %v68
  %v213 = vunpack.c.l.b16 %v69
  %v214 = vunpack.c.l.b16 %v70
  %v215 = vunpack.c.l.b16 %v71
  %v216 = vunpack.c.l.b16 %v72
  %v217 = vunpack.c.l.b16 %v73
  %v218 = vunpack.c.l.b16 %v74
  %v219 = vunpack.c.l.b16 %v75
  %v220 = vunpack.c.l.b16 %v76
  %v221 = vunpack.c.l.b16 %v77
  %v222 = vunpack.c.l.b16 %v78
  %v223 = vunpack.c.l.b16 %v79
  %v224 = vunpack.c.l.b16 %v80
  %v225 = vunpack.c.l.b16 %v81
  %v226 = vunpack.c.l.b16 %v82
  %v227 = vunpack.c.l.b16 %v83
  %v228 = vunpack.c.l.b16 %v84
  %v229 = vunpack.c.l.b16 %v85
  %v230 = vunpack.c.l.b16 %v86
  %v231 = vunpack.c.l.b16 %v87
  %v232 = vunpack.c.l.b16 %v88
  %v233 = vunpack.c.l.b16 %v89
  %v234 = vunpack.c.l.b16 %v90
  %v235 = vunpack.c.l.b16 %v91
  %v236 = vunpack.c.l.b16 %v92
  %v237 = vunpack.c.l.b16 %v93
  %v238 = vunpack.c.l.b16 %v94
  %v239 = vunpack.c.l.b16 %v95
  %v240 = vunpack.c.l.b16 %v96
  %v241 = vunpack.c.l.b16 %v97
  %v242 = vunpack.c.l.b16 %v98
  %v243 = vpack.c.b16 %v212, %v211
  %v244 = vpack.c.b16 %v214, %v213
  %v245 = vpack.c.b16 %v216, %v215
  %v246 = vpack.c.b16 %v218, %v217
  %v247 = vpack.c.b16 %v220, %v219
  %v248 = vpack.c.b16 %v222, %v221
  %v249 = vpack.c.b16 %v224, %v223
  %v250 = vpack.c.b16 %v226, %v225
  %v251 = vpack.c.b16 %v228, %v227
  %v252 = vpack.c.b16 %v230, %v229
  %v253 = vpack.c.b16 %v232, %v231
  %v254 = vpack.c.b16 %v234, %v233
  %v255 = vpack.c.b16 %v236, %v235
  %v256 = vpack.c.b16 %v238, %v237
  %v257 = vpack.c.b16 %v240, %v239
  %v258 = vpack.c.b16 %v242, %v241
  %275 = vmatprep.subr.bf16.mxu0 0
  %276 = vmatpush1.bf16.msra.mxu0 %v243
  %277 = vmatprep.subr.bf16.mxu0 0
  %278 = vmatpush1.bf16.msra.mxu0 %v244
  %279 = vmatprep.subr.bf16.mxu0 0
  %280 = vmatpush1.bf16.msra.mxu0 %v245
  %281 = vmatprep.subr.bf16.mxu0 0
  %282 = vmatpush1.bf16.msra.mxu0 %v246
  %283 = vmatprep.subr.bf16.mxu0 0
  %284 = vmatpush1.bf16.msra.mxu0 %v247
  %285 = vmatprep.subr.bf16.mxu0 0
  %286 = vmatpush1.bf16.msra.mxu0 %v248
  %287 = vmatprep.subr.bf16.mxu0 0
  %288 = vmatpush1.bf16.msra.mxu0 %v249
  %289 = vmatprep.subr.bf16.mxu0 0
  %290 = vmatpush1.bf16.msra.mxu0 %v250
  %291 = vmatprep.subr.bf16.mxu0 0
  %292 = vmatpush1.bf16.msra.mxu0 %v251
  %293 = vmatprep.subr.bf16.mxu0 0
  %294 = vmatpush1.bf16.msra.mxu0 %v252
  %295 = vmatprep.subr.bf16.mxu0 0
  %296 = vmatpush1.bf16.msra.mxu0 %v253
  %297 = vmatprep.subr.bf16.mxu0 0
  %298 = vmatpush1.bf16.msra.mxu0 %v254
  %299 = vmatprep.subr.bf16.mxu0 0
  %300 = vmatpush1.bf16.msra.mxu0 %v255
  %301 = vmatprep.subr.bf16.mxu0 0
  %302 = vmatpush1.bf16.msra.mxu0 %v256
  %303 = vmatprep.subr.bf16.mxu0 0
  %304 = vmatpush1.bf16.msra.mxu0 %v257
  %305 = vmatprep.subr.bf16.mxu0 0
  %306 = vmatpush1.bf16.msra.mxu0 %v258
  %307 = vmatprep.mubr.bf16.mxu0 %v148
  %308 = vmatmul.mubr.bf16.gmra.mrb[0].mxu0 %v147
  %v309 = vpop.f32.mrb[0].mxu0
  %v310 = vadd.f32 0.0, %v309
  %v311 = vpop.f32.mrb[0].mxu0
  %v312 = vpop.f32.mrb[0].mxu0
  %v313 = vadd.f32 0.0, %v312
  %v314 = vpop.f32.mrb[0].mxu0
  %315 = vmatprep.mubr.bf16.mxu0 %v150
  %316 = vmatmul.mubr.bf16.gmra.mrb[0].mxu0 %v149
  %v317 = vpop.f32.mrb[0].mxu0
  %v318 = vadd.f32 0.0, %v317
  %v319 = vpop.f32.mrb[0].mxu0
  %v320 = vpop.f32.mrb[0].mxu0
  %v321 = vadd.f32 0.0, %v320
  %v322 = vpop.f32.mrb[0].mxu0
  %323 = vmatprep.mubr.bf16.mxu0 %v152
  %324 = vmatmul.mubr.bf16.gmra.mrb[0].mxu0 %v151
  %v325 = vpop.f32.mrb[0].mxu0
  %v326 = vadd.f32 0.0, %v325
  %v327 = vpop.f32.mrb[0].mxu0
  %v328 = vpop.f32.mrb[0].mxu0
  %v329 = vadd.f32 0.0, %v328
  %v330 = vpop.f32.mrb[0].mxu0
  %331 = vmatprep.mubr.bf16.mxu0 %v154
  %332 = vmatmul.mubr.bf16.gmra.mrb[0].mxu0 %v153
  %v333 = vpop.f32.mrb[0].mxu0
  %v334 = vadd.f32 0.0, %v333
  %v335 = vpop.f32.mrb[0].mxu0
  %v336 = vpop.f32.mrb[0].mxu0
  %v337 = vadd.f32 0.0, %v336
  %v338 = vpop.f32.mrb[0].mxu0
  %339 = vmatprep.mubr.bf16.mxu0 %v156
  %340 = vmatmul.mubr.bf16.gmra.mrb[0].mxu0 %v155
  %v341 = vpop.f32.mrb[0].mxu0
  %v342 = vadd.f32 0.0, %v341
  %v343 = vpop.f32.mrb[0].mxu0
  %v344 = vpop.f32.mrb[0].mxu0
  %v345 = vadd.f32 0.0, %v344
  %v346 = vpop.f32.mrb[0].mxu0
  %347 = vmatprep.mubr.bf16.mxu0 %v158
  %348 = vmatmul.mubr.bf16.gmra.mrb[0].mxu0 %v157
  %v349 = vpop.f32.mrb[0].mxu0
  %v350 = vadd.f32 0.0, %v349
  %v351 = vpop.f32.mrb[0].mxu0
  %v352 = vpop.f32.mrb[0].mxu0
  %v353 = vadd.f32 0.0, %v352
  %v354 = vpop.f32.mrb[0].mxu0
  %355 = vmatprep.mubr.bf16.mxu0 %v160
  %356 = vmatmul.mubr.bf16.gmra.mrb[0].mxu0 %v159
  %v357 = vpop.f32.mrb[0].mxu0
  %v358 = vadd.f32 0.0, %v357
  %v359 = vpop.f32.mrb[0].mxu0
  %v360 = vpop.f32.mrb[0].mxu0
  %v361 = vadd.f32 0.0, %v360
  %v362 = vpop.f32.mrb[0].mxu0
  %363 = vmatprep.mubr.bf16.mxu0 %v162
  %364 = vmatmul.mubr.bf16.gmra.mrb[0].mxu0 %v161
  %v365 = vpop.f32.mrb[0].mxu0
  %v366 = vadd.f32 0.0, %v365
  %v367 = vpop.f32.mrb[0].mxu0
  %v368 = vpop.f32.mrb[0].mxu0
  %v369 = vadd.f32 0.0, %v368
  %v370 = vpop.f32.mrb[0].mxu0
  %371 = vdwg.mxu0
  %v372 = vadd.f32 %v51, %v310
  %v373 = vadd.f32 %v52, %v313
  %v374 = vadd.f32 %v53, %v318
  %v375 = vadd.f32 %v54, %v321
  %v376 = vadd.f32 %v55, %v326
  %v377 = vadd.f32 %v56, %v329
  %v378 = vadd.f32 %v57, %v334
  %v379 = vadd.f32 %v58, %v337
  %v380 = vadd.f32 %v59, %v342
  %v381 = vadd.f32 %v60, %v345
  %v382 = vadd.f32 %v61, %v350
  %v383 = vadd.f32 %v62, %v353
  %v384 = vadd.f32 %v63, %v358
  %v385 = vadd.f32 %v64, %v361
  %v386 = vadd.f32 %v65, %v366
  %v387 = vadd.f32 %v66, %v369
  %388 = vst [vmem:[%s3] sm:$0xff] %v372
  %389 = vst [vmem:[%s3 + $0x8] sm:$0xff] %v373
  %390 = vst [vmem:[%s3 + $0x10] sm:$0xff] %v374
  %391 = vst [vmem:[%s3 + $0x18] sm:$0xff] %v375
  %392 = vst [vmem:[%s3 + $0x20] sm:$0xff] %v376
  %393 = vst [vmem:[%s3 + $0x28] sm:$0xff] %v377
  %394 = vst [vmem:[%s3 + $0x30] sm:$0xff] %v378
  %395 = vst [vmem:[%s3 + $0x38] sm:$0xff] %v379
  %396 = vst [vmem:[%s3 + $0x40] sm:$0xff] %v380
  %397 = vst [vmem:[%s3 + $0x48] sm:$0xff] %v381
  %398 = vst [vmem:[%s3 + $0x50] sm:$0xff] %v382
  %399 = vst [vmem:[%s3 + $0x58] sm:$0xff] %v383
  %400 = vst [vmem:[%s3 + $0x60] sm:$0xff] %v384
  %401 = vst [vmem:[%s3 + $0x68] sm:$0xff] %v385
  %402 = vst [vmem:[%s3 + $0x70] sm:$0xff] %v386
  %403 = vst [vmem:[%s3 + $0x78] sm:$0xff] %v387
  // Predicated region
  $region18: #{dlgan_forward.31} parent=0 // pred_check
    %p404 = pneg %p15
  $region19: #{dlgan_forward.31} parent=0 // pred_check_branch
    %406 = sbr.rel (%p404) target = $region21
  $region20: #{dlgan_forward.31} parent=0 // pred_region
    %v407 = vld [vmem:[%s3] sm:$0xff]
    %v408 = vld [vmem:[%s3 + $0x8] sm:$0xff]
    %v409 = vld [vmem:[%s3 + $0x10] sm:$0xff]
    %v410 = vld [vmem:[%s3 + $0x18] sm:$0xff]
    %v411 = vld [vmem:[%s3 + $0x20] sm:$0xff]
    %v412 = vld [vmem:[%s3 + $0x28] sm:$0xff]
    %v413 = vld [vmem:[%s3 + $0x30] sm:$0xff]
    %v414 = vld [vmem:[%s3 + $0x38] sm:$0xff]
    %v415 = vld [vmem:[%s3 + $0x40] sm:$0xff]
    %v416 = vld [vmem:[%s3 + $0x48] sm:$0xff]
    %v417 = vld [vmem:[%s3 + $0x50] sm:$0xff]
    %v418 = vld [vmem:[%s3 + $0x58] sm:$0xff]
    %v419 = vld [vmem:[%s3 + $0x60] sm:$0xff]
    %v420 = vld [vmem:[%s3 + $0x68] sm:$0xff]
    %v421 = vld [vmem:[%s3 + $0x70] sm:$0xff]
    %v422 = vld [vmem:[%s3 + $0x78] sm:$0xff]
    %v423 = vld [vmem:[%s2] sm:$0x1]
    %v425 = vlaneseq
    %v426 = vshrl.u32 %v425, 7
    %v427 = vsub.s32 0, %v426
    %v428 = vrot.slane %v423, %v427
    %v430 = vadd.f32 %v407, %v428
    %v431 = vadd.f32 %v408, %v428
    %v432 = vadd.f32 %v409, %v428
    %v433 = vadd.f32 %v410, %v428
    %v434 = vadd.f32 %v411, %v428
    %v435 = vadd.f32 %v412, %v428
    %v436 = vadd.f32 %v413, %v428
    %v437 = vadd.f32 %v414, %v428
    %v438 = vadd.f32 %v415, %v428
    %v439 = vadd.f32 %v416, %v428
    %v440 = vadd.f32 %v417, %v428
    %v441 = vadd.f32 %v418, %v428
    %v442 = vadd.f32 %v419, %v428
    %v443 = vadd.f32 %v420, %v428
    %v444 = vadd.f32 %v421, %v428
    %v445 = vadd.f32 %v422, %v428
    %446 = vst [vmem:[%s3] sm:$0xff] %v430
    %447 = vst [vmem:[%s3 + $0x8] sm:$0xff] %v431
    %448 = vst [vmem:[%s3 + $0x10] sm:$0xff] %v432
    %449 = vst [vmem:[%s3 + $0x18] sm:$0xff] %v433
    %450 = vst [vmem:[%s3 + $0x20] sm:$0xff] %v434
    %451 = vst [vmem:[%s3 + $0x28] sm:$0xff] %v435
    %452 = vst [vmem:[%s3 + $0x30] sm:$0xff] %v436
    %453 = vst [vmem:[%s3 + $0x38] sm:$0xff] %v437
    %454 = vst [vmem:[%s3 + $0x40] sm:$0xff] %v438
    %455 = vst [vmem:[%s3 + $0x48] sm:$0xff] %v439
    %456 = vst [vmem:[%s3 + $0x50] sm:$0xff] %v440
    %457 = vst [vmem:[%s3 + $0x58] sm:$0xff] %v441
    %458 = vst [vmem:[%s3 + $0x60] sm:$0xff] %v442
    %459 = vst [vmem:[%s3 + $0x68] sm:$0xff] %v443
    %460 = vst [vmem:[%s3 + $0x70] sm:$0xff] %v444
    %461 = vst [vmem:[%s3 + $0x78] sm:$0xff] %v445
  $region21: #{dlgan_forward.31} parent=0 // pred_fallthru
    _
  // Predicated region
  $region22: #{dlgan_forward.31} parent=0 // pred_check
    _
  $region23: #{dlgan_forward.31} parent=0 // pred_check_branch
    %463 = sbr.rel (0) target = $region25
  $region24: #{dlgan_forward.31} parent=0 // pred_region
    _
  $region25: #{dlgan_forward.31} parent=0 // pred_fallthru
    _
  // Predicated region
  $region26: #{dlgan_forward.31} parent=0 // pred_check
    _
  $region27: #{dlgan_forward.31} parent=0 // pred_check_branch
    %465 = sbr.rel (0) target = $region29
  $region28: #{dlgan_forward.31} parent=0 // pred_region
    _
  $region29: #{dlgan_forward.31} parent=0 // pred_fallthru
    _

</llo_original>
